<compile_context>
chip_gen: v5e
topology: v5e:2x2
jax: 0.10.0
libtpu: 0.0.40
codegen_flags: <defaults>
</compile_context>

<pallas_src>
import jax
import jax.numpy as jnp
from jax.experimental import pallas as pl
from jax.experimental.pallas import tpu as pltpu

IN_FEATURES = 3 * 64 * 64   # 12288
H1 = 84
H2 = 50
OUT = 2
TILE_B = 128                # batch rows per grid step (multiple of 8; ~6 MiB f32 x-tile)


def _round_up(x, m):
    return (x + m - 1) // m * m


def simplenet_kernel(x_ref, w1_ref, b1_ref, w2_ref, b2_ref, w3_ref, b3_ref, o_ref):
    # Layer 1: bf16 x @ bf16 W1 on the MXU, f32 accumulate, +bias, ReLU.
    x = x_ref[...].astype(jnp.bfloat16)          # per-tile cast, hidden under the x DMA
    h1 = jnp.dot(x, w1_ref[...], preferred_element_type=jnp.float32) + b1_ref[...]
    h1 = jnp.maximum(h1, 0.0)

    # Layers 2/3: weights are a few KB -> no bandwidth win from narrowing; keep f32.
    h2 = jnp.dot(h1, w2_ref[...], preferred_element_type=jnp.float32) + b2_ref[...]
    h2 = jnp.maximum(h2, 0.0)
    out = jnp.dot(h2, w3_ref[...], preferred_element_type=jnp.float32) + b3_ref[...]
    o_ref[...] = out.astype(o_ref.dtype)


def simplenet_forward(x_nchw, params):
    B = x_nchw.shape[0]
    # torch.nn.Flatten: flatten all non-batch dims row-major (C, H, W order).
    x_flat = x_nchw.reshape(B, -1)               # free view; no dtype cast in the wrapper
    w1, b1, w2, b2, w3, b3 = params

    # Batch tile: whole (sublane-rounded) batch if small, else TILE_B rows per step.
    tile_b = min(TILE_B, _round_up(B, 8))
    b_pad = _round_up(B, tile_b)
    if b_pad != B:
        x_flat = jnp.pad(x_flat, ((0, b_pad - B), (0, 0)))
    grid = (b_pad // tile_b,)

    resident = lambda shape: pl.BlockSpec(shape, lambda i: (0, 0))  # weights stay in VMEM

    out = pl.pallas_call(
        simplenet_kernel,
        out_shape=jax.ShapeDtypeStruct((b_pad, OUT), jnp.float32),
        grid=grid,
        in_specs=[
            pl.BlockSpec((tile_b, IN_FEATURES), lambda i: (i, 0)),   # streamed x tiles
            resident((IN_FEATURES, H1)), resident((1, H1)),
            resident((H1, H2)),          resident((1, H2)),
            resident((H2, OUT)),         resident((1, OUT)),
        ],
        out_specs=pl.BlockSpec((tile_b, OUT), lambda i: (i, 0)),
        compiler_params=pltpu.CompilerParams(
            dimension_semantics=("parallel",),   # v7x: 2 TCs shard the batch axis
            vmem_limit_bytes=32 << 20,           # leaves headroom on v7x's 64 MiB VMEM
        ),
    )(x_flat, w1, b1, w2, b2, w3, b3)

    return out[:B] if b_pad != B else out


def init_params(key):
    # Deterministic synthetic init (uniform, roughly PyTorch's fan-in scaling).
    # W1 is cast to bf16 ONCE here (not per call): the kernel is memory-bound on
    # this ~4 MiB tensor, so halving its bytes ~halves wall time.
    k1, k2, k3, k4, k5, k6 = jax.random.split(key, 6)

    def uinit(k, shape, fan_in):
        bound = 1.0 / jnp.sqrt(fan_in)
        return jax.random.uniform(k, shape, jnp.float32, -bound, bound)

    w1 = uinit(k1, (IN_FEATURES, H1), IN_FEATURES).astype(jnp.bfloat16)
    b1 = uinit(k2, (1, H1), IN_FEATURES)
    w2 = uinit(k3, (H1, H2), H1)
    b2 = uinit(k4, (1, H2), H1)
    w3 = uinit(k5, (H2, OUT), H2)
    b3 = uinit(k6, (1, OUT), H2)
    # TODO(synk): for repeated small-batch inference, keep W1 resident across calls
    # via the cross-call prefetch pattern (semaphore + VMEM outputs).
    return (w1, b1, w2, b2, w3, b3)


if __name__ == "__main__":
    key = jax.random.PRNGKey(0)
    pkey, xkey = jax.random.split(key)
    params = init_params(pkey)

    # Small batch; channel/spatial dims are fixed by the Linear(3*64*64, ...) layer.
    x = jax.random.normal(xkey, (2, 3, 64, 64), dtype=jnp.float32)

    out = simplenet_forward(x, params)
    out = jax.block_until_ready(out)

    # Reference in plain JAX using the same bf16 layer-1 path (tolerances loosened for bf16).
    w1, b1, w2, b2, w3, b3 = params
    xf = x.reshape(2, -1)
    h1 = jnp.dot(xf.astype(jnp.bfloat16), w1, preferred_element_type=jnp.float32) + b1
    h1 = jnp.maximum(h1, 0.0)
    h2 = jnp.maximum(h1 @ w2 + b2, 0.0)
    ref = h2 @ w3 + b3

    assert out.shape == (2, 2)
    assert jnp.allclose(out, ref, atol=1e-2, rtol=1e-2), (out, ref)

    print("KERNEL_OK")
</pallas_src>

<mosaic_0001>
module attributes {stable_mosaic.version = 11 : i64} {
  func.func @simplenet_kernel(%arg0: i32, %arg1: memref<8x12288xf32, #tpu.memory_space<vmem>>, %arg2: memref<12288x84xbf16, #tpu.memory_space<vmem>>, %arg3: memref<1x84xf32, #tpu.memory_space<vmem>>, %arg4: memref<84x50xf32, #tpu.memory_space<vmem>>, %arg5: memref<1x50xf32, #tpu.memory_space<vmem>>, %arg6: memref<50x2xf32, #tpu.memory_space<vmem>>, %arg7: memref<1x2xf32, #tpu.memory_space<vmem>>, %arg8: memref<8x2xf32, #tpu.memory_space<vmem>>) attributes {dimension_semantics = [#tpu.dimension_semantics<parallel>], iteration_bounds = array<i64: 1>, scalar_prefetch = 0 : i64, scratch_operands = 0 : i64, tpu.core_type = #tpu.core_type<tc>, window_params = [{transform_indices = @transform_0, window_bounds = array<i64: 8, 12288>}, {pipeline_mode = #tpu.pipeline_mode<synchronous>, transform_indices = @transform_1, window_bounds = array<i64: 12288, 84>}, {pipeline_mode = #tpu.pipeline_mode<synchronous>, transform_indices = @transform_2, window_bounds = array<i64: 1, 84>}, {pipeline_mode = #tpu.pipeline_mode<synchronous>, transform_indices = @transform_3, window_bounds = array<i64: 84, 50>}, {pipeline_mode = #tpu.pipeline_mode<synchronous>, transform_indices = @transform_4, window_bounds = array<i64: 1, 50>}, {pipeline_mode = #tpu.pipeline_mode<synchronous>, transform_indices = @transform_5, window_bounds = array<i64: 50, 2>}, {pipeline_mode = #tpu.pipeline_mode<synchronous>, transform_indices = @transform_6, window_bounds = array<i64: 1, 2>}, {transform_indices = @transform_7, window_bounds = array<i64: 8, 2>}]} {
    %c0 = arith.constant 0 : index
    %c0_0 = arith.constant 0 : index
    %0 = vector.load %arg1[%c0, %c0_0] : memref<8x12288xf32, #tpu.memory_space<vmem>>, vector<8x12288xf32>
    %1 = arith.truncf %0 : vector<8x12288xf32> to vector<8x12288xbf16>
    %c0_1 = arith.constant 0 : index
    %c0_2 = arith.constant 0 : index
    %2 = vector.load %arg2[%c0_1, %c0_2] : memref<12288x84xbf16, #tpu.memory_space<vmem>>, vector<12288x84xbf16>
    %cst = arith.constant dense<0.000000e+00> : vector<8x84xf32>
    %3 = tpu.matmul %1, %2, %cst {dimension_numbers = #tpu.dot_dimension_numbers<[1], [0], [0], [1], [0, 0, 1, 1], [], []>} : vector<8x12288xbf16>, vector<12288x84xbf16>, vector<8x84xf32> -> vector<8x84xf32>
    %c0_3 = arith.constant 0 : index
    %c0_4 = arith.constant 0 : index
    %4 = vector.load %arg3[%c0_3, %c0_4] : memref<1x84xf32, #tpu.memory_space<vmem>>, vector<1x84xf32>
    %5 = vector.broadcast %4 : vector<1x84xf32> to vector<8x84xf32>
    %6 = arith.addf %3, %5 : vector<8x84xf32>
    %cst_5 = arith.constant 0.000000e+00 : f32
    %7 = vector.broadcast %cst_5 : f32 to vector<8x84xf32>
    %8 = arith.maximumf %6, %7 : vector<8x84xf32>
    %c0_6 = arith.constant 0 : index
    %c0_7 = arith.constant 0 : index
    %9 = vector.load %arg4[%c0_6, %c0_7] : memref<84x50xf32, #tpu.memory_space<vmem>>, vector<84x50xf32>
    %cst_8 = arith.constant dense<0.000000e+00> : vector<8x50xf32>
    %10 = tpu.matmul %8, %9, %cst_8 {dimension_numbers = #tpu.dot_dimension_numbers<[1], [0], [0], [1], [0, 0, 1, 1], [], []>} : vector<8x84xf32>, vector<84x50xf32>, vector<8x50xf32> -> vector<8x50xf32>
    %c0_9 = arith.constant 0 : index
    %c0_10 = arith.constant 0 : index
    %11 = vector.load %arg5[%c0_9, %c0_10] : memref<1x50xf32, #tpu.memory_space<vmem>>, vector<1x50xf32>
    %12 = vector.broadcast %11 : vector<1x50xf32> to vector<8x50xf32>
    %13 = arith.addf %10, %12 : vector<8x50xf32>
    %cst_11 = arith.constant 0.000000e+00 : f32
    %14 = vector.broadcast %cst_11 : f32 to vector<8x50xf32>
    %15 = arith.maximumf %13, %14 : vector<8x50xf32>
    %c0_12 = arith.constant 0 : index
    %c0_13 = arith.constant 0 : index
    %16 = vector.load %arg6[%c0_12, %c0_13] : memref<50x2xf32, #tpu.memory_space<vmem>>, vector<50x2xf32>
    %cst_14 = arith.constant dense<0.000000e+00> : vector<8x2xf32>
    %17 = tpu.matmul %15, %16, %cst_14 {dimension_numbers = #tpu.dot_dimension_numbers<[1], [0], [0], [1], [0, 0, 1, 1], [], []>} : vector<8x50xf32>, vector<50x2xf32>, vector<8x2xf32> -> vector<8x2xf32>
    %c0_15 = arith.constant 0 : index
    %c0_16 = arith.constant 0 : index
    %18 = vector.load %arg7[%c0_15, %c0_16] : memref<1x2xf32, #tpu.memory_space<vmem>>, vector<1x2xf32>
    %19 = vector.broadcast %18 : vector<1x2xf32> to vector<8x2xf32>
    %20 = arith.addf %17, %19 : vector<8x2xf32>
    %c0_17 = arith.constant 0 : index
    %c0_18 = arith.constant 0 : index
    %21 = vector.load %arg8[%c0_17, %c0_18] : memref<8x2xf32, #tpu.memory_space<vmem>>, vector<8x2xf32>
    tpu.vector_store %arg8[%c0_17, %c0_18], %20 {strides = array<i32>} : memref<8x2xf32, #tpu.memory_space<vmem>>, vector<8x2xf32>,
    return
  }
  func.func @transform_0(%arg0: i32) -> (i32, i32) {
    %c0_i32 = arith.constant 0 : i32
    %c0_i32_0 = arith.constant 0 : i32
    return %arg0, %c0_i32 : i32, i32
  }
  func.func @transform_1(%arg0: i32) -> (i32, i32) {
    %c0_i32 = arith.constant 0 : i32
    %c0_i32_0 = arith.constant 0 : i32
    %c0_i32_1 = arith.constant 0 : i32
    return %c0_i32, %c0_i32_0 : i32, i32
  }
  func.func @transform_2(%arg0: i32) -> (i32, i32) {
    %c0_i32 = arith.constant 0 : i32
    %c0_i32_0 = arith.constant 0 : i32
    %c0_i32_1 = arith.constant 0 : i32
    return %c0_i32, %c0_i32_0 : i32, i32
  }
  func.func @transform_3(%arg0: i32) -> (i32, i32) {
    %c0_i32 = arith.constant 0 : i32
    %c0_i32_0 = arith.constant 0 : i32
    %c0_i32_1 = arith.constant 0 : i32
    return %c0_i32, %c0_i32_0 : i32, i32
  }
  func.func @transform_4(%arg0: i32) -> (i32, i32) {
    %c0_i32 = arith.constant 0 : i32
    %c0_i32_0 = arith.constant 0 : i32
    %c0_i32_1 = arith.constant 0 : i32
    return %c0_i32, %c0_i32_0 : i32, i32
  }
  func.func @transform_5(%arg0: i32) -> (i32, i32) {
    %c0_i32 = arith.constant 0 : i32
    %c0_i32_0 = arith.constant 0 : i32
    %c0_i32_1 = arith.constant 0 : i32
    return %c0_i32, %c0_i32_0 : i32, i32
  }
  func.func @transform_6(%arg0: i32) -> (i32, i32) {
    %c0_i32 = arith.constant 0 : i32
    %c0_i32_0 = arith.constant 0 : i32
    %c0_i32_1 = arith.constant 0 : i32
    return %c0_i32, %c0_i32_0 : i32, i32
  }
  func.func @transform_7(%arg0: i32) -> (i32, i32) {
    %c0_i32 = arith.constant 0 : i32
    %c0_i32_0 = arith.constant 0 : i32
    return %arg0, %c0_i32 : i32, i32
  }
}

</mosaic_0001>

<llo_original>
// kernel: tpu_custom_call.1
$region0: #{tpu_custom_call.1}
  #allocation0 [shape = 'u32[]', space=smem, size = 0x4, offset = 0x4, fixed_abs, tag = 'smem constant byte address 0x4 - core index']
  #allocation1 [shape = 'u32[72,128]{1,0:T(1,128)}', space=vmem, size = 0x9000, scoped, tag = 'internal scratch']
  %s0 = inlined_call_operand.vmem [shape: f32[8,12288], index: 0, kind: input, shape index: {}]
  %s1 = inlined_call_operand.vmem [shape: bf16[12288,84], index: 1, kind: input, shape index: {}]
  %s2 = inlined_call_operand.vmem [shape: f32[1,84], index: 2, kind: input, shape index: {}]
  %s3 = inlined_call_operand.vmem [shape: f32[84,50], index: 3, kind: input, shape index: {}]
  %s4 = inlined_call_operand.vmem [shape: f32[1,50], index: 4, kind: input, shape index: {}]
  %s5 = inlined_call_operand.vmem [shape: f32[50,2], index: 5, kind: input, shape index: {}]
  %s6 = inlined_call_operand.vmem [shape: f32[1,2], index: 6, kind: input, shape index: {}]
  %s7 = inlined_call_operand.vmem [shape: f32[8,2], index: 7, kind: output, shape index: {}]
  %s8 = sld [smem:[#allocation0]]
  $region38: #{tpu_custom_call.1} parent=0
    _
  %s10 = ssub.s32 1, %s8
  %s11 = scalar_select 0, %s10, %s8
  // Predicated region
  $region2: #{tpu_custom_call.1} parent=0 // pred_check
    _
  $region3: #{tpu_custom_call.1} parent=0 // pred_check_branch
    %13 = sbr.rel (0) target = $region5
  $region4: #{tpu_custom_call.1} parent=0 // pred_region
    _
  $region5: #{tpu_custom_call.1} parent=0 // pred_fallthru
    _
  // Predicated region
  $region6: #{tpu_custom_call.1} parent=0 // pred_check
    _
  $region7: #{tpu_custom_call.1} parent=0 // pred_check_branch
    %15 = sbr.rel (0) target = $region9
  $region8: #{tpu_custom_call.1} parent=0 // pred_region
    _
  $region9: #{tpu_custom_call.1} parent=0 // pred_fallthru
    _
  // Predicated region
  $region10: #{tpu_custom_call.1} parent=0 // pred_check
    _
  $region11: #{tpu_custom_call.1} parent=0 // pred_check_branch
    %17 = sbr.rel (0) target = $region13
  $region12: #{tpu_custom_call.1} parent=0 // pred_region
    _
  $region13: #{tpu_custom_call.1} parent=0 // pred_fallthru
    _
  // Predicated region
  $region14: #{tpu_custom_call.1} parent=0 // pred_check
    _
  $region15: #{tpu_custom_call.1} parent=0 // pred_check_branch
    %19 = sbr.rel (0) target = $region17
  $region16: #{tpu_custom_call.1} parent=0 // pred_region
    _
  $region17: #{tpu_custom_call.1} parent=0 // pred_fallthru
    _
  // Predicated region
  $region18: #{tpu_custom_call.1} parent=0 // pred_check
    _
  $region19: #{tpu_custom_call.1} parent=0 // pred_check_branch
    %21 = sbr.rel (0) target = $region21
  $region20: #{tpu_custom_call.1} parent=0 // pred_region
    _
  $region21: #{tpu_custom_call.1} parent=0 // pred_fallthru
    _
  // Predicated region
  $region22: #{tpu_custom_call.1} parent=0 // pred_check
    _
  $region23: #{tpu_custom_call.1} parent=0 // pred_check_branch
    %23 = sbr.rel (0) target = $region25
  $region24: #{tpu_custom_call.1} parent=0 // pred_region
    _
  $region25: #{tpu_custom_call.1} parent=0 // pred_fallthru
    _
  // Predicated region
  $region26: #{tpu_custom_call.1} parent=0 // pred_check
    _
  $region27: #{tpu_custom_call.1} parent=0 // pred_check_branch
    %25 = sbr.rel (0) target = $region29
  $region28: #{tpu_custom_call.1} parent=0 // pred_region
    _
  $region29: #{tpu_custom_call.1} parent=0 // pred_fallthru
    _
  %v26 = vld [vmem:[%s0] sm:$0xff]
  %v27 = vld [vmem:[%s0 + $0x8] sm:$0xff]
  %v28 = vld [vmem:[%s0 + $0x10] sm:$0xff]
  %v29 = vld [vmem:[%s0 + $0x18] sm:$0xff]
  %v30 = vld [vmem:[%s0 + $0x20] sm:$0xff]
  %v31 = vld [vmem:[%s0 + $0x28] sm:$0xff]
  %v32 = vld [vmem:[%s0 + $0x30] sm:$0xff]
  %v33 = vld [vmem:[%s0 + $0x38] sm:$0xff]
  %v34 = vld [vmem:[%s0 + $0x40] sm:$0xff]
  %v35 = vld [vmem:[%s0 + $0x48] sm:$0xff]
  %v36 = vld [vmem:[%s0 + $0x50] sm:$0xff]
  %v37 = vld [vmem:[%s0 + $0x58] sm:$0xff]
  %v38 = vld [vmem:[%s0 + $0x60] sm:$0xff]
  %v39 = vld [vmem:[%s0 + $0x68] sm:$0xff]
  %v40 = vld [vmem:[%s0 + $0x70] sm:$0xff]
  %v41 = vld [vmem:[%s0 + $0x78] sm:$0xff]
  %v42 = vld [vmem:[%s0 + $0x80] sm:$0xff]
  %v43 = vld [vmem:[%s0 + $0x88] sm:$0xff]
  %v44 = vld [vmem:[%s0 + $0x90] sm:$0xff]
  %v45 = vld [vmem:[%s0 + $0x98] sm:$0xff]
  %v46 = vld [vmem:[%s0 + $0xa0] sm:$0xff]
  %v47 = vld [vmem:[%s0 + $0xa8] sm:$0xff]
  %v48 = vld [vmem:[%s0 + $0xb0] sm:$0xff]
  %v49 = vld [vmem:[%s0 + $0xb8] sm:$0xff]
  %v50 = vld [vmem:[%s0 + $0xc0] sm:$0xff]
  %v51 = vld [vmem:[%s0 + $0xc8] sm:$0xff]
  %v52 = vld [vmem:[%s0 + $0xd0] sm:$0xff]
  %v53 = vld [vmem:[%s0 + $0xd8] sm:$0xff]
  %v54 = vld [vmem:[%s0 + $0xe0] sm:$0xff]
  %v55 = vld [vmem:[%s0 + $0xe8] sm:$0xff]
  %v56 = vld [vmem:[%s0 + $0xf0] sm:$0xff]
  %v57 = vld [vmem:[%s0 + $0xf8] sm:$0xff]
  %v58 = vld [vmem:[%s0 + $0x100] sm:$0xff]
  %v59 = vld [vmem:[%s0 + $0x108] sm:$0xff]
  %v60 = vld [vmem:[%s0 + $0x110] sm:$0xff]
  %v61 = vld [vmem:[%s0 + $0x118] sm:$0xff]
  %v62 = vld [vmem:[%s0 + $0x120] sm:$0xff]
  %v63 = vld [vmem:[%s0 + $0x128] sm:$0xff]
  %v64 = vld [vmem:[%s0 + $0x130] sm:$0xff]
  %v65 = vld [vmem:[%s0 + $0x138] sm:$0xff]
  %v66 = vld [vmem:[%s0 + $0x140] sm:$0xff]
  %v67 = vld [vmem:[%s0 + $0x148] sm:$0xff]
  %v68 = vld [vmem:[%s0 + $0x150] sm:$0xff]
  %v69 = vld [vmem:[%s0 + $0x158] sm:$0xff]
  %v70 = vld [vmem:[%s0 + $0x160] sm:$0xff]
  %v71 = vld [vmem:[%s0 + $0x168] sm:$0xff]
  %v72 = vld [vmem:[%s0 + $0x170] sm:$0xff]
  %v73 = vld [vmem:[%s0 + $0x178] sm:$0xff]
  %v74 = vld [vmem:[%s0 + $0x180] sm:$0xff]
  %v75 = vld [vmem:[%s0 + $0x188] sm:$0xff]
  %v76 = vld [vmem:[%s0 + $0x190] sm:$0xff]
  %v77 = vld [vmem:[%s0 + $0x198] sm:$0xff]
  %v78 = vld [vmem:[%s0 + $0x1a0] sm:$0xff]
  %v79 = vld [vmem:[%s0 + $0x1a8] sm:$0xff]
  %v80 = vld [vmem:[%s0 + $0x1b0] sm:$0xff]
  %v81 = vld [vmem:[%s0 + $0x1b8] sm:$0xff]
  %v82 = vld [vmem:[%s0 + $0x1c0] sm:$0xff]
  %v83 = vld [vmem:[%s0 + $0x1c8] sm:$0xff]
  %v84 = vld [vmem:[%s0 + $0x1d0] sm:$0xff]
  %v85 = vld [vmem:[%s0 + $0x1d8] sm:$0xff]
  %v86 = vld [vmem:[%s0 + $0x1e0] sm:$0xff]
  %v87 = vld [vmem:[%s0 + $0x1e8] sm:$0xff]
  %v88 = vld [vmem:[%s0 + $0x1f0] sm:$0xff]
  %v89 = vld [vmem:[%s0 + $0x1f8] sm:$0xff]
  %v90 = vld [vmem:[%s0 + $0x200] sm:$0xff]
  %v91 = vld [vmem:[%s0 + $0x208] sm:$0xff]
  %v92 = vld [vmem:[%s0 + $0x210] sm:$0xff]
  %v93 = vld [vmem:[%s0 + $0x218] sm:$0xff]
  %v94 = vld [vmem:[%s0 + $0x220] sm:$0xff]
  %v95 = vld [vmem:[%s0 + $0x228] sm:$0xff]
  %v96 = vld [vmem:[%s0 + $0x230] sm:$0xff]
  %v97 = vld [vmem:[%s0 + $0x238] sm:$0xff]
  %v98 = vld [vmem:[%s0 + $0x240] sm:$0xff]
  %v99 = vld [vmem:[%s0 + $0x248] sm:$0xff]
  %v100 = vld [vmem:[%s0 + $0x250] sm:$0xff]
  %v101 = vld [vmem:[%s0 + $0x258] sm:$0xff]
  %v102 = vld [vmem:[%s0 + $0x260] sm:$0xff]
  %v103 = vld [vmem:[%s0 + $0x268] sm:$0xff]
  %v104 = vld [vmem:[%s0 + $0x270] sm:$0xff]
  %v105 = vld [vmem:[%s0 + $0x278] sm:$0xff]
  %v106 = vld [vmem:[%s0 + $0x280] sm:$0xff]
  %v107 = vld [vmem:[%s0 + $0x288] sm:$0xff]
  %v108 = vld [vmem:[%s0 + $0x290] sm:$0xff]
  %v109 = vld [vmem:[%s0 + $0x298] sm:$0xff]
  %v110 = vld [vmem:[%s0 + $0x2a0] sm:$0xff]
  %v111 = vld [vmem:[%s0 + $0x2a8] sm:$0xff]
  %v112 = vld [vmem:[%s0 + $0x2b0] sm:$0xff]
  %v113 = vld [vmem:[%s0 + $0x2b8] sm:$0xff]
  %v114 = vld [vmem:[%s0 + $0x2c0] sm:$0xff]
  %v115 = vld [vmem:[%s0 + $0x2c8] sm:$0xff]
  %v116 = vld [vmem:[%s0 + $0x2d0] sm:$0xff]
  %v117 = vld [vmem:[%s0 + $0x2d8] sm:$0xff]
  %v118 = vld [vmem:[%s0 + $0x2e0] sm:$0xff]
  %v119 = vld [vmem:[%s0 + $0x2e8] sm:$0xff]
  %v120 = vld [vmem:[%s0 + $0x2f0] sm:$0xff]
  %v121 = vld [vmem:[%s0 + $0x2f8] sm:$0xff]
  %v122 = vpack.c.bf16 %v26, %v26
  %v123 = vpack.c.bf16 %v27, %v27
  %v124 = vpack.c.bf16 %v28, %v28
  %v125 = vpack.c.bf16 %v29, %v29
  %v126 = vpack.c.bf16 %v30, %v30
  %v127 = vpack.c.bf16 %v31, %v31
  %v128 = vpack.c.bf16 %v32, %v32
  %v129 = vpack.c.bf16 %v33, %v33
  %v130 = vpack.c.bf16 %v34, %v34
  %v131 = vpack.c.bf16 %v35, %v35
  %v132 = vpack.c.bf16 %v36, %v36
  %v133 = vpack.c.bf16 %v37, %v37
  %v134 = vpack.c.bf16 %v38, %v38
  %v135 = vpack.c.bf16 %v39, %v39
  %v136 = vpack.c.bf16 %v40, %v40
  %v137 = vpack.c.bf16 %v41, %v41
  %v138 = vpack.c.bf16 %v42, %v42
  %v139 = vpack.c.bf16 %v43, %v43
  %v140 = vpack.c.bf16 %v44, %v44
  %v141 = vpack.c.bf16 %v45, %v45
  %v142 = vpack.c.bf16 %v46, %v46
  %v143 = vpack.c.bf16 %v47, %v47
  %v144 = vpack.c.bf16 %v48, %v48
  %v145 = vpack.c.bf16 %v49, %v49
  %v146 = vpack.c.bf16 %v50, %v50
  %v147 = vpack.c.bf16 %v51, %v51
  %v148 = vpack.c.bf16 %v52, %v52
  %v149 = vpack.c.bf16 %v53, %v53
  %v150 = vpack.c.bf16 %v54, %v54
  %v151 = vpack.c.bf16 %v55, %v55
  %v152 = vpack.c.bf16 %v56, %v56
  %v153 = vpack.c.bf16 %v57, %v57
  %v154 = vpack.c.bf16 %v58, %v58
  %v155 = vpack.c.bf16 %v59, %v59
  %v156 = vpack.c.bf16 %v60, %v60
  %v157 = vpack.c.bf16 %v61, %v61
  %v158 = vpack.c.bf16 %v62, %v62
  %v159 = vpack.c.bf16 %v63, %v63
  %v160 = vpack.c.bf16 %v64, %v64
  %v161 = vpack.c.bf16 %v65, %v65
  %v162 = vpack.c.bf16 %v66, %v66
  %v163 = vpack.c.bf16 %v67, %v67
  %v164 = vpack.c.bf16 %v68, %v68
  %v165 = vpack.c.bf16 %v69, %v69
  %v166 = vpack.c.bf16 %v70, %v70
  %v167 = vpack.c.bf16 %v71, %v71
  %v168 = vpack.c.bf16 %v72, %v72
  %v169 = vpack.c.bf16 %v73, %v73
  %v170 = vpack.c.bf16 %v74, %v74
  %v171 = vpack.c.bf16 %v75, %v75
  %v172 = vpack.c.bf16 %v76, %v76
  %v173 = vpack.c.bf16 %v77, %v77
  %v174 = vpack.c.bf16 %v78, %v78
  %v175 = vpack.c.bf16 %v79, %v79
  %v176 = vpack.c.bf16 %v80, %v80
  %v177 = vpack.c.bf16 %v81, %v81
  %v178 = vpack.c.bf16 %v82, %v82
  %v179 = vpack.c.bf16 %v83, %v83
  %v180 = vpack.c.bf16 %v84, %v84
  %v181 = vpack.c.bf16 %v85, %v85
  %v182 = vpack.c.bf16 %v86, %v86
  %v183 = vpack.c.bf16 %v87, %v87
  %v184 = vpack.c.bf16 %v88, %v88
  %v185 = vpack.c.bf16 %v89, %v89
  %v186 = vpack.c.bf16 %v90, %v90
  %v187 = vpack.c.bf16 %v91, %v91
  %v188 = vpack.c.bf16 %v92, %v92
  %v189 = vpack.c.bf16 %v93, %v93
  %v190 = vpack.c.bf16 %v94, %v94
  %v191 = vpack.c.bf16 %v95, %v95
  %v192 = vpack.c.bf16 %v96, %v96
  %v193 = vpack.c.bf16 %v97, %v97
  %v194 = vpack.c.bf16 %v98, %v98
  %v195 = vpack.c.bf16 %v99, %v99
  %v196 = vpack.c.bf16 %v100, %v100
  %v197 = vpack.c.bf16 %v101, %v101
  %v198 = vpack.c.bf16 %v102, %v102
  %v199 = vpack.c.bf16 %v103, %v103
  %v200 = vpack.c.bf16 %v104, %v104
  %v201 = vpack.c.bf16 %v105, %v105
  %v202 = vpack.c.bf16 %v106, %v106
  %v203 = vpack.c.bf16 %v107, %v107
  %v204 = vpack.c.bf16 %v108, %v108
  %v205 = vpack.c.bf16 %v109, %v109
  %v206 = vpack.c.bf16 %v110, %v110
  %v207 = vpack.c.bf16 %v111, %v111
  %v208 = vpack.c.bf16 %v112, %v112
  %v209 = vpack.c.bf16 %v113, %v113
  %v210 = vpack.c.bf16 %v114, %v114
  %v211 = vpack.c.bf16 %v115, %v115
  %v212 = vpack.c.bf16 %v116, %v116
  %v213 = vpack.c.bf16 %v117, %v117
  %v214 = vpack.c.bf16 %v118, %v118
  %v215 = vpack.c.bf16 %v119, %v119
  %v216 = vpack.c.bf16 %v120, %v120
  %v217 = vpack.c.bf16 %v121, %v121
  %v218 = vld [vmem:[%s1] sm:$0xf]
  %v219 = vld [vmem:[%s1 + $0x4] sm:$0xf]
  %v220 = vld [vmem:[%s1 + $0x8] sm:$0xf]
  %v221 = vld [vmem:[%s1 + $0xc] sm:$0xf]
  %v222 = vld [vmem:[%s1 + $0x10] sm:$0xf]
  %v223 = vld [vmem:[%s1 + $0x14] sm:$0xf]
  %v224 = vld [vmem:[%s1 + $0x18] sm:$0xf]
  %v225 = vld [vmem:[%s1 + $0x1c] sm:$0xf]
  %v226 = vld [vmem:[%s1 + $0x20] sm:$0xf]
  %v227 = vld [vmem:[%s1 + $0x24] sm:$0xf]
  %v228 = vld [vmem:[%s1 + $0x28] sm:$0xf]
  %v229 = vld [vmem:[%s1 + $0x2c] sm:$0xf]
  %v230 = vld [vmem:[%s1 + $0x30] sm:$0xf]
  %v231 = vld [vmem:[%s1 + $0x34] sm:$0xf]
  %v232 = vld [vmem:[%s1 + $0x38] sm:$0xf]
  %v233 = vld [vmem:[%s1 + $0x3c] sm:$0xf]
  %v234 = vld [vmem:[%s1 + $0x40] sm:$0xf]
  %v235 = vld [vmem:[%s1 + $0x44] sm:$0xf]
  %v236 = vld [vmem:[%s1 + $0x48] sm:$0xf]
  %v237 = vld [vmem:[%s1 + $0x4c] sm:$0xf]
  %v238 = vld [vmem:[%s1 + $0x50] sm:$0xf]
  %v239 = vld [vmem:[%s1 + $0x54] sm:$0xf]
  %v240 = vld [vmem:[%s1 + $0x58] sm:$0xf]
  %v241 = vld [vmem:[%s1 + $0x5c] sm:$0xf]
  %v242 = vld [vmem:[%s1 + $0x60] sm:$0xf]
  %v243 = vld [vmem:[%s1 + $0x64] sm:$0xf]
  %v244 = vld [vmem:[%s1 + $0x68] sm:$0xf]
  %v245 = vld [vmem:[%s1 + $0x6c] sm:$0xf]
  %v246 = vld [vmem:[%s1 + $0x70] sm:$0xf]
  %v247 = vld [vmem:[%s1 + $0x74] sm:$0xf]
  %v248 = vld [vmem:[%s1 + $0x78] sm:$0xf]
  %v249 = vld [vmem:[%s1 + $0x7c] sm:$0xf]
  %v250 = vld [vmem:[%s1 + $0x80] sm:$0xf]
  %v251 = vld [vmem:[%s1 + $0x84] sm:$0xf]
  %v252 = vld [vmem:[%s1 + $0x88] sm:$0xf]
  %v253 = vld [vmem:[%s1 + $0x8c] sm:$0xf]
  %v254 = vld [vmem:[%s1 + $0x90] sm:$0xf]
  %v255 = vld [vmem:[%s1 + $0x94] sm:$0xf]
  %v256 = vld [vmem:[%s1 + $0x98] sm:$0xf]
  %v257 = vld [vmem:[%s1 + $0x9c] sm:$0xf]
  %v258 = vld [vmem:[%s1 + $0xa0] sm:$0xf]
  %v259 = vld [vmem:[%s1 + $0xa4] sm:$0xf]
  %v260 = vld [vmem:[%s1 + $0xa8] sm:$0xf]
  %v261 = vld [vmem:[%s1 + $0xac] sm:$0xf]
  %v262 = vld [vmem:[%s1 + $0xb0] sm:$0xf]
  %v263 = vld [vmem:[%s1 + $0xb4] sm:$0xf]
  %v264 = vld [vmem:[%s1 + $0xb8] sm:$0xf]
  %v265 = vld [vmem:[%s1 + $0xbc] sm:$0xf]
  %v266 = vld [vmem:[%s1 + $0xc0] sm:$0xf]
  %v267 = vld [vmem:[%s1 + $0xc4] sm:$0xf]
  %v268 = vld [vmem:[%s1 + $0xc8] sm:$0xf]
  %v269 = vld [vmem:[%s1 + $0xcc] sm:$0xf]
  %v270 = vld [vmem:[%s1 + $0xd0] sm:$0xf]
  %v271 = vld [vmem:[%s1 + $0xd4] sm:$0xf]
  %v272 = vld [vmem:[%s1 + $0xd8] sm:$0xf]
  %v273 = vld [vmem:[%s1 + $0xdc] sm:$0xf]
  %v274 = vld [vmem:[%s1 + $0xe0] sm:$0xf]
  %v275 = vld [vmem:[%s1 + $0xe4] sm:$0xf]
  %v276 = vld [vmem:[%s1 + $0xe8] sm:$0xf]
  %v277 = vld [vmem:[%s1 + $0xec] sm:$0xf]
  %v278 = vld [vmem:[%s1 + $0xf0] sm:$0xf]
  %v279 = vld [vmem:[%s1 + $0xf4] sm:$0xf]
  %v280 = vld [vmem:[%s1 + $0xf8] sm:$0xf]
  %v281 = vld [vmem:[%s1 + $0xfc] sm:$0xf]
  %v282 = vld [vmem:[%s1 + $0x100] sm:$0xf]
  %v283 = vld [vmem:[%s1 + $0x104] sm:$0xf]
  %v284 = vld [vmem:[%s1 + $0x108] sm:$0xf]
  %v285 = vld [vmem:[%s1 + $0x10c] sm:$0xf]
  %v286 = vld [vmem:[%s1 + $0x110] sm:$0xf]
  %v287 = vld [vmem:[%s1 + $0x114] sm:$0xf]
  %v288 = vld [vmem:[%s1 + $0x118] sm:$0xf]
  %v289 = vld [vmem:[%s1 + $0x11c] sm:$0xf]
  %v290 = vld [vmem:[%s1 + $0x120] sm:$0xf]
  %v291 = vld [vmem:[%s1 + $0x124] sm:$0xf]
  %v292 = vld [vmem:[%s1 + $0x128] sm:$0xf]
  %v293 = vld [vmem:[%s1 + $0x12c] sm:$0xf]
  %v294 = vld [vmem:[%s1 + $0x130] sm:$0xf]
  %v295 = vld [vmem:[%s1 + $0x134] sm:$0xf]
  %v296 = vld [vmem:[%s1 + $0x138] sm:$0xf]
  %v297 = vld [vmem:[%s1 + $0x13c] sm:$0xf]
  %v298 = vld [vmem:[%s1 + $0x140] sm:$0xf]
  %v299 = vld [vmem:[%s1 + $0x144] sm:$0xf]
  %v300 = vld [vmem:[%s1 + $0x148] sm:$0xf]
  %v301 = vld [vmem:[%s1 + $0x14c] sm:$0xf]
  %v302 = vld [vmem:[%s1 + $0x150] sm:$0xf]
  %v303 = vld [vmem:[%s1 + $0x154] sm:$0xf]
  %v304 = vld [vmem:[%s1 + $0x158] sm:$0xf]
  %v305 = vld [vmem:[%s1 + $0x15c] sm:$0xf]
  %v306 = vld [vmem:[%s1 + $0x160] sm:$0xf]
  %v307 = vld [vmem:[%s1 + $0x164] sm:$0xf]
  %v308 = vld [vmem:[%s1 + $0x168] sm:$0xf]
  %v309 = vld [vmem:[%s1 + $0x16c] sm:$0xf]
  %v310 = vld [vmem:[%s1 + $0x170] sm:$0xf]
  %v311 = vld [vmem:[%s1 + $0x174] sm:$0xf]
  %v312 = vld [vmem:[%s1 + $0x178] sm:$0xf]
  %v313 = vld [vmem:[%s1 + $0x17c] sm:$0xf]
  %v314 = vld [vmem:[%s1 + $0x180] sm:$0xf]
  %v315 = vld [vmem:[%s1 + $0x184] sm:$0xf]
  %v316 = vld [vmem:[%s1 + $0x188] sm:$0xf]
  %v317 = vld [vmem:[%s1 + $0x18c] sm:$0xf]
  %v318 = vld [vmem:[%s1 + $0x190] sm:$0xf]
  %v319 = vld [vmem:[%s1 + $0x194] sm:$0xf]
  %v320 = vld [vmem:[%s1 + $0x198] sm:$0xf]
  %v321 = vld [vmem:[%s1 + $0x19c] sm:$0xf]
  %v322 = vld [vmem:[%s1 + $0x1a0] sm:$0xf]
  %v323 = vld [vmem:[%s1 + $0x1a4] sm:$0xf]
  %v324 = vld [vmem:[%s1 + $0x1a8] sm:$0xf]
  %v325 = vld [vmem:[%s1 + $0x1ac] sm:$0xf]
  %v326 = vld [vmem:[%s1 + $0x1b0] sm:$0xf]
  %v327 = vld [vmem:[%s1 + $0x1b4] sm:$0xf]
  %v328 = vld [vmem:[%s1 + $0x1b8] sm:$0xf]
  %v329 = vld [vmem:[%s1 + $0x1bc] sm:$0xf]
  %v330 = vld [vmem:[%s1 + $0x1c0] sm:$0xf]
  %v331 = vld [vmem:[%s1 + $0x1c4] sm:$0xf]
  %v332 = vld [vmem:[%s1 + $0x1c8] sm:$0xf]
  %v333 = vld [vmem:[%s1 + $0x1cc] sm:$0xf]
  %v334 = vld [vmem:[%s1 + $0x1d0] sm:$0xf]
  %v335 = vld [vmem:[%s1 + $0x1d4] sm:$0xf]
  %v336 = vld [vmem:[%s1 + $0x1d8] sm:$0xf]
  %v337 = vld [vmem:[%s1 + $0x1dc] sm:$0xf]
  %v338 = vld [vmem:[%s1 + $0x1e0] sm:$0xf]
  %v339 = vld [vmem:[%s1 + $0x1e4] sm:$0xf]
  %v340 = vld [vmem:[%s1 + $0x1e8] sm:$0xf]
  %v341 = vld [vmem:[%s1 + $0x1ec] sm:$0xf]
  %v342 = vld [vmem:[%s1 + $0x1f0] sm:$0xf]
  %v343 = vld [vmem:[%s1 + $0x1f4] sm:$0xf]
  %v344 = vld [vmem:[%s1 + $0x1f8] sm:$0xf]
  %v345 = vld [vmem:[%s1 + $0x1fc] sm:$0xf]
  %v346 = vld [vmem:[%s1 + $0x200] sm:$0xf]
  %v347 = vld [vmem:[%s1 + $0x204] sm:$0xf]
  %v348 = vld [vmem:[%s1 + $0x208] sm:$0xf]
  %v349 = vld [vmem:[%s1 + $0x20c] sm:$0xf]
  %v350 = vld [vmem:[%s1 + $0x210] sm:$0xf]
  %v351 = vld [vmem:[%s1 + $0x214] sm:$0xf]
  %v352 = vld [vmem:[%s1 + $0x218] sm:$0xf]
  %v353 = vld [vmem:[%s1 + $0x21c] sm:$0xf]
  %v354 = vld [vmem:[%s1 + $0x220] sm:$0xf]
  %v355 = vld [vmem:[%s1 + $0x224] sm:$0xf]
  %v356 = vld [vmem:[%s1 + $0x228] sm:$0xf]
  %v357 = vld [vmem:[%s1 + $0x22c] sm:$0xf]
  %v358 = vld [vmem:[%s1 + $0x230] sm:$0xf]
  %v359 = vld [vmem:[%s1 + $0x234] sm:$0xf]
  %v360 = vld [vmem:[%s1 + $0x238] sm:$0xf]
  %v361 = vld [vmem:[%s1 + $0x23c] sm:$0xf]
  %v362 = vld [vmem:[%s1 + $0x240] sm:$0xf]
  %v363 = vld [vmem:[%s1 + $0x244] sm:$0xf]
  %v364 = vld [vmem:[%s1 + $0x248] sm:$0xf]
  %v365 = vld [vmem:[%s1 + $0x24c] sm:$0xf]
  %v366 = vld [vmem:[%s1 + $0x250] sm:$0xf]
  %v367 = vld [vmem:[%s1 + $0x254] sm:$0xf]
  %v368 = vld [vmem:[%s1 + $0x258] sm:$0xf]
  %v369 = vld [vmem:[%s1 + $0x25c] sm:$0xf]
  %v370 = vld [vmem:[%s1 + $0x260] sm:$0xf]
  %v371 = vld [vmem:[%s1 + $0x264] sm:$0xf]
  %v372 = vld [vmem:[%s1 + $0x268] sm:$0xf]
  %v373 = vld [vmem:[%s1 + $0x26c] sm:$0xf]
  %v374 = vld [vmem:[%s1 + $0x270] sm:$0xf]
  %v375 = vld [vmem:[%s1 + $0x274] sm:$0xf]
  %v376 = vld [vmem:[%s1 + $0x278] sm:$0xf]
  %v377 = vld [vmem:[%s1 + $0x27c] sm:$0xf]
  %v378 = vld [vmem:[%s1 + $0x280] sm:$0xf]
  %v379 = vld [vmem:[%s1 + $0x284] sm:$0xf]
  %v380 = vld [vmem:[%s1 + $0x288] sm:$0xf]
  %v381 = vld [vmem:[%s1 + $0x28c] sm:$0xf]
  %v382 = vld [vmem:[%s1 + $0x290] sm:$0xf]
  %v383 = vld [vmem:[%s1 + $0x294] sm:$0xf]
  %v384 = vld [vmem:[%s1 + $0x298] sm:$0xf]
  %v385 = vld [vmem:[%s1 + $0x29c] sm:$0xf]
  %v386 = vld [vmem:[%s1 + $0x2a0] sm:$0xf]
  %v387 = vld [vmem:[%s1 + $0x2a4] sm:$0xf]
  %v388 = vld [vmem:[%s1 + $0x2a8] sm:$0xf]
  %v389 = vld [vmem:[%s1 + $0x2ac] sm:$0xf]
  %v390 = vld [vmem:[%s1 + $0x2b0] sm:$0xf]
  %v391 = vld [vmem:[%s1 + $0x2b4] sm:$0xf]
  %v392 = vld [vmem:[%s1 + $0x2b8] sm:$0xf]
  %v393 = vld [vmem:[%s1 + $0x2bc] sm:$0xf]
  %v394 = vld [vmem:[%s1 + $0x2c0] sm:$0xf]
  %v395 = vld [vmem:[%s1 + $0x2c4] sm:$0xf]
  %v396 = vld [vmem:[%s1 + $0x2c8] sm:$0xf]
  %v397 = vld [vmem:[%s1 + $0x2cc] sm:$0xf]
  %v398 = vld [vmem:[%s1 + $0x2d0] sm:$0xf]
  %v399 = vld [vmem:[%s1 + $0x2d4] sm:$0xf]
  %v400 = vld [vmem:[%s1 + $0x2d8] sm:$0xf]
  %v401 = vld [vmem:[%s1 + $0x2dc] sm:$0xf]
  %v402 = vld [vmem:[%s1 + $0x2e0] sm:$0xf]
  %v403 = vld [vmem:[%s1 + $0x2e4] sm:$0xf]
  %v404 = vld [vmem:[%s1 + $0x2e8] sm:$0xf]
  %v405 = vld [vmem:[%s1 + $0x2ec] sm:$0xf]
  %v406 = vld [vmem:[%s1 + $0x2f0] sm:$0xf]
  %v407 = vld [vmem:[%s1 + $0x2f4] sm:$0xf]
  %v408 = vld [vmem:[%s1 + $0x2f8] sm:$0xf]
  %v409 = vld [vmem:[%s1 + $0x2fc] sm:$0xf]
  %v410 = vld [vmem:[%s1 + $0x300] sm:$0xf]
  %v411 = vld [vmem:[%s1 + $0x304] sm:$0xf]
  %v412 = vld [vmem:[%s1 + $0x308] sm:$0xf]
  %v413 = vld [vmem:[%s1 + $0x30c] sm:$0xf]
  %v414 = vld [vmem:[%s1 + $0x310] sm:$0xf]
  %v415 = vld [vmem:[%s1 + $0x314] sm:$0xf]
  %v416 = vld [vmem:[%s1 + $0x318] sm:$0xf]
  %v417 = vld [vmem:[%s1 + $0x31c] sm:$0xf]
  %v418 = vld [vmem:[%s1 + $0x320] sm:$0xf]
  %v419 = vld [vmem:[%s1 + $0x324] sm:$0xf]
  %v420 = vld [vmem:[%s1 + $0x328] sm:$0xf]
  %v421 = vld [vmem:[%s1 + $0x32c] sm:$0xf]
  %v422 = vld [vmem:[%s1 + $0x330] sm:$0xf]
  %v423 = vld [vmem:[%s1 + $0x334] sm:$0xf]
  %v424 = vld [vmem:[%s1 + $0x338] sm:$0xf]
  %v425 = vld [vmem:[%s1 + $0x33c] sm:$0xf]
  %v426 = vld [vmem:[%s1 + $0x340] sm:$0xf]
  %v427 = vld [vmem:[%s1 + $0x344] sm:$0xf]
  %v428 = vld [vmem:[%s1 + $0x348] sm:$0xf]
  %v429 = vld [vmem:[%s1 + $0x34c] sm:$0xf]
  %v430 = vld [vmem:[%s1 + $0x350] sm:$0xf]
  %v431 = vld [vmem:[%s1 + $0x354] sm:$0xf]
  %v432 = vld [vmem:[%s1 + $0x358] sm:$0xf]
  %v433 = vld [vmem:[%s1 + $0x35c] sm:$0xf]
  %v434 = vld [vmem:[%s1 + $0x360] sm:$0xf]
  %v435 = vld [vmem:[%s1 + $0x364] sm:$0xf]
  %v436 = vld [vmem:[%s1 + $0x368] sm:$0xf]
  %v437 = vld [vmem:[%s1 + $0x36c] sm:$0xf]
  %v438 = vld [vmem:[%s1 + $0x370] sm:$0xf]
  %v439 = vld [vmem:[%s1 + $0x374] sm:$0xf]
  %v440 = vld [vmem:[%s1 + $0x378] sm:$0xf]
  %v441 = vld [vmem:[%s1 + $0x37c] sm:$0xf]
  %v442 = vld [vmem:[%s1 + $0x380] sm:$0xf]
  %v443 = vld [vmem:[%s1 + $0x384] sm:$0xf]
  %v444 = vld [vmem:[%s1 + $0x388] sm:$0xf]
  %v445 = vld [vmem:[%s1 + $0x38c] sm:$0xf]
  %v446 = vld [vmem:[%s1 + $0x390] sm:$0xf]
  %v447 = vld [vmem:[%s1 + $0x394] sm:$0xf]
  %v448 = vld [vmem:[%s1 + $0x398] sm:$0xf]
  %v449 = vld [vmem:[%s1 + $0x39c] sm:$0xf]
  %v450 = vld [vmem:[%s1 + $0x3a0] sm:$0xf]
  %v451 = vld [vmem:[%s1 + $0x3a4] sm:$0xf]
  %v452 = vld [vmem:[%s1 + $0x3a8] sm:$0xf]
  %v453 = vld [vmem:[%s1 + $0x3ac] sm:$0xf]
  %v454 = vld [vmem:[%s1 + $0x3b0] sm:$0xf]
  %v455 = vld [vmem:[%s1 + $0x3b4] sm:$0xf]
  %v456 = vld [vmem:[%s1 + $0x3b8] sm:$0xf]
  %v457 = vld [vmem:[%s1 + $0x3bc] sm:$0xf]
  %v458 = vld [vmem:[%s1 + $0x3c0] sm:$0xf]
  %v459 = vld [vmem:[%s1 + $0x3c4] sm:$0xf]
  %v460 = vld [vmem:[%s1 + $0x3c8] sm:$0xf]
  %v461 = vld [vmem:[%s1 + $0x3cc] sm:$0xf]
  %v462 = vld [vmem:[%s1 + $0x3d0] sm:$0xf]
  %v463 = vld [vmem:[%s1 + $0x3d4] sm:$0xf]
  %v464 = vld [vmem:[%s1 + $0x3d8] sm:$0xf]
  %v465 = vld [vmem:[%s1 + $0x3dc] sm:$0xf]
  %v466 = vld [vmem:[%s1 + $0x3e0] sm:$0xf]
  %v467 = vld [vmem:[%s1 + $0x3e4] sm:$0xf]
  %v468 = vld [vmem:[%s1 + $0x3e8] sm:$0xf]
  %v469 = vld [vmem:[%s1 + $0x3ec] sm:$0xf]
  %v470 = vld [vmem:[%s1 + $0x3f0] sm:$0xf]
  %v471 = vld [vmem:[%s1 + $0x3f4] sm:$0xf]
  %v472 = vld [vmem:[%s1 + $0x3f8] sm:$0xf]
  %v473 = vld [vmem:[%s1 + $0x3fc] sm:$0xf]
  %v474 = vld [vmem:[%s1 + $0x400] sm:$0xf]
  %v475 = vld [vmem:[%s1 + $0x404] sm:$0xf]
  %v476 = vld [vmem:[%s1 + $0x408] sm:$0xf]
  %v477 = vld [vmem:[%s1 + $0x40c] sm:$0xf]
  %v478 = vld [vmem:[%s1 + $0x410] sm:$0xf]
  %v479 = vld [vmem:[%s1 + $0x414] sm:$0xf]
  %v480 = vld [vmem:[%s1 + $0x418] sm:$0xf]
  %v481 = vld [vmem:[%s1 + $0x41c] sm:$0xf]
  %v482 = vld [vmem:[%s1 + $0x420] sm:$0xf]
  %v483 = vld [vmem:[%s1 + $0x424] sm:$0xf]
  %v484 = vld [vmem:[%s1 + $0x428] sm:$0xf]
  %v485 = vld [vmem:[%s1 + $0x42c] sm:$0xf]
  %v486 = vld [vmem:[%s1 + $0x430] sm:$0xf]
  %v487 = vld [vmem:[%s1 + $0x434] sm:$0xf]
  %v488 = vld [vmem:[%s1 + $0x438] sm:$0xf]
  %v489 = vld [vmem:[%s1 + $0x43c] sm:$0xf]
  %v490 = vld [vmem:[%s1 + $0x440] sm:$0xf]
  %v491 = vld [vmem:[%s1 + $0x444] sm:$0xf]
  %v492 = vld [vmem:[%s1 + $0x448] sm:$0xf]
  %v493 = vld [vmem:[%s1 + $0x44c] sm:$0xf]
  %v494 = vld [vmem:[%s1 + $0x450] sm:$0xf]
  %v495 = vld [vmem:[%s1 + $0x454] sm:$0xf]
  %v496 = vld [vmem:[%s1 + $0x458] sm:$0xf]
  %v497 = vld [vmem:[%s1 + $0x45c] sm:$0xf]
  %v498 = vld [vmem:[%s1 + $0x460] sm:$0xf]
  %v499 = vld [vmem:[%s1 + $0x464] sm:$0xf]
  %v500 = vld [vmem:[%s1 + $0x468] sm:$0xf]
  %v501 = vld [vmem:[%s1 + $0x46c] sm:$0xf]
  %v502 = vld [vmem:[%s1 + $0x470] sm:$0xf]
  %v503 = vld [vmem:[%s1 + $0x474] sm:$0xf]
  %v504 = vld [vmem:[%s1 + $0x478] sm:$0xf]
  %v505 = vld [vmem:[%s1 + $0x47c] sm:$0xf]
  %v506 = vld [vmem:[%s1 + $0x480] sm:$0xf]
  %v507 = vld [vmem:[%s1 + $0x484] sm:$0xf]
  %v508 = vld [vmem:[%s1 + $0x488] sm:$0xf]
  %v509 = vld [vmem:[%s1 + $0x48c] sm:$0xf]
  %v510 = vld [vmem:[%s1 + $0x490] sm:$0xf]
  %v511 = vld [vmem:[%s1 + $0x494] sm:$0xf]
  %v512 = vld [vmem:[%s1 + $0x498] sm:$0xf]
  %v513 = vld [vmem:[%s1 + $0x49c] sm:$0xf]
  %v514 = vld [vmem:[%s1 + $0x4a0] sm:$0xf]
  %v515 = vld [vmem:[%s1 + $0x4a4] sm:$0xf]
  %v516 = vld [vmem:[%s1 + $0x4a8] sm:$0xf]
  %v517 = vld [vmem:[%s1 + $0x4ac] sm:$0xf]
  %v518 = vld [vmem:[%s1 + $0x4b0] sm:$0xf]
  %v519 = vld [vmem:[%s1 + $0x4b4] sm:$0xf]
  %v520 = vld [vmem:[%s1 + $0x4b8] sm:$0xf]
  %v521 = vld [vmem:[%s1 + $0x4bc] sm:$0xf]
  %v522 = vld [vmem:[%s1 + $0x4c0] sm:$0xf]
  %v523 = vld [vmem:[%s1 + $0x4c4] sm:$0xf]
  %v524 = vld [vmem:[%s1 + $0x4c8] sm:$0xf]
  %v525 = vld [vmem:[%s1 + $0x4cc] sm:$0xf]
  %v526 = vld [vmem:[%s1 + $0x4d0] sm:$0xf]
  %v527 = vld [vmem:[%s1 + $0x4d4] sm:$0xf]
  %v528 = vld [vmem:[%s1 + $0x4d8] sm:$0xf]
  %v529 = vld [vmem:[%s1 + $0x4dc] sm:$0xf]
  %v530 = vld [vmem:[%s1 + $0x4e0] sm:$0xf]
  %v531 = vld [vmem:[%s1 + $0x4e4] sm:$0xf]
  %v532 = vld [vmem:[%s1 + $0x4e8] sm:$0xf]
  %v533 = vld [vmem:[%s1 + $0x4ec] sm:$0xf]
  %v534 = vld [vmem:[%s1 + $0x4f0] sm:$0xf]
  %v535 = vld [vmem:[%s1 + $0x4f4] sm:$0xf]
  %v536 = vld [vmem:[%s1 + $0x4f8] sm:$0xf]
  %v537 = vld [vmem:[%s1 + $0x4fc] sm:$0xf]
  %v538 = vld [vmem:[%s1 + $0x500] sm:$0xf]
  %v539 = vld [vmem:[%s1 + $0x504] sm:$0xf]
  %v540 = vld [vmem:[%s1 + $0x508] sm:$0xf]
  %v541 = vld [vmem:[%s1 + $0x50c] sm:$0xf]
  %v542 = vld [vmem:[%s1 + $0x510] sm:$0xf]
  %v543 = vld [vmem:[%s1 + $0x514] sm:$0xf]
  %v544 = vld [vmem:[%s1 + $0x518] sm:$0xf]
  %v545 = vld [vmem:[%s1 + $0x51c] sm:$0xf]
  %v546 = vld [vmem:[%s1 + $0x520] sm:$0xf]
  %v547 = vld [vmem:[%s1 + $0x524] sm:$0xf]
  %v548 = vld [vmem:[%s1 + $0x528] sm:$0xf]
  %v549 = vld [vmem:[%s1 + $0x52c] sm:$0xf]
  %v550 = vld [vmem:[%s1 + $0x530] sm:$0xf]
  %v551 = vld [vmem:[%s1 + $0x534] sm:$0xf]
  %v552 = vld [vmem:[%s1 + $0x538] sm:$0xf]
  %v553 = vld [vmem:[%s1 + $0x53c] sm:$0xf]
  %v554 = vld [vmem:[%s1 + $0x540] sm:$0xf]
  %v555 = vld [vmem:[%s1 + $0x544] sm:$0xf]
  %v556 = vld [vmem:[%s1 + $0x548] sm:$0xf]
  %v557 = vld [vmem:[%s1 + $0x54c] sm:$0xf]
  %v558 = vld [vmem:[%s1 + $0x550] sm:$0xf]
  %v559 = vld [vmem:[%s1 + $0x554] sm:$0xf]
  %v560 = vld [vmem:[%s1 + $0x558] sm:$0xf]
  %v561 = vld [vmem:[%s1 + $0x55c] sm:$0xf]
  %v562 = vld [vmem:[%s1 + $0x560] sm:$0xf]
  %v563 = vld [vmem:[%s1 + $0x564] sm:$0xf]
  %v564 = vld [vmem:[%s1 + $0x568] sm:$0xf]
  %v565 = vld [vmem:[%s1 + $0x56c] sm:$0xf]
  %v566 = vld [vmem:[%s1 + $0x570] sm:$0xf]
  %v567 = vld [vmem:[%s1 + $0x574] sm:$0xf]
  %v568 = vld [vmem:[%s1 + $0x578] sm:$0xf]
  %v569 = vld [vmem:[%s1 + $0x57c] sm:$0xf]
  %v570 = vld [vmem:[%s1 + $0x580] sm:$0xf]
  %v571 = vld [vmem:[%s1 + $0x584] sm:$0xf]
  %v572 = vld [vmem:[%s1 + $0x588] sm:$0xf]
  %v573 = vld [vmem:[%s1 + $0x58c] sm:$0xf]
  %v574 = vld [vmem:[%s1 + $0x590] sm:$0xf]
  %v575 = vld [vmem:[%s1 + $0x594] sm:$0xf]
  %v576 = vld [vmem:[%s1 + $0x598] sm:$0xf]
  %v577 = vld [vmem:[%s1 + $0x59c] sm:$0xf]
  %v578 = vld [vmem:[%s1 + $0x5a0] sm:$0xf]
  %v579 = vld [vmem:[%s1 + $0x5a4] sm:$0xf]
  %v580 = vld [vmem:[%s1 + $0x5a8] sm:$0xf]
  %v581 = vld [vmem:[%s1 + $0x5ac] sm:$0xf]
  %v582 = vld [vmem:[%s1 + $0x5b0] sm:$0xf]
  %v583 = vld [vmem:[%s1 + $0x5b4] sm:$0xf]
  %v584 = vld [vmem:[%s1 + $0x5b8] sm:$0xf]
  %v585 = vld [vmem:[%s1 + $0x5bc] sm:$0xf]
  %v586 = vld [vmem:[%s1 + $0x5c0] sm:$0xf]
  %v587 = vld [vmem:[%s1 + $0x5c4] sm:$0xf]
  %v588 = vld [vmem:[%s1 + $0x5c8] sm:$0xf]
  %v589 = vld [vmem:[%s1 + $0x5cc] sm:$0xf]
  %v590 = vld [vmem:[%s1 + $0x5d0] sm:$0xf]
  %v591 = vld [vmem:[%s1 + $0x5d4] sm:$0xf]
  %v592 = vld [vmem:[%s1 + $0x5d8] sm:$0xf]
  %v593 = vld [vmem:[%s1 + $0x5dc] sm:$0xf]
  %v594 = vld [vmem:[%s1 + $0x5e0] sm:$0xf]
  %v595 = vld [vmem:[%s1 + $0x5e4] sm:$0xf]
  %v596 = vld [vmem:[%s1 + $0x5e8] sm:$0xf]
  %v597 = vld [vmem:[%s1 + $0x5ec] sm:$0xf]
  %v598 = vld [vmem:[%s1 + $0x5f0] sm:$0xf]
  %v599 = vld [vmem:[%s1 + $0x5f4] sm:$0xf]
  %v600 = vld [vmem:[%s1 + $0x5f8] sm:$0xf]
  %v601 = vld [vmem:[%s1 + $0x5fc] sm:$0xf]
  %v602 = vld [vmem:[%s1 + $0x600] sm:$0xf]
  %v603 = vld [vmem:[%s1 + $0x604] sm:$0xf]
  %v604 = vld [vmem:[%s1 + $0x608] sm:$0xf]
  %v605 = vld [vmem:[%s1 + $0x60c] sm:$0xf]
  %v606 = vld [vmem:[%s1 + $0x610] sm:$0xf]
  %v607 = vld [vmem:[%s1 + $0x614] sm:$0xf]
  %v608 = vld [vmem:[%s1 + $0x618] sm:$0xf]
  %v609 = vld [vmem:[%s1 + $0x61c] sm:$0xf]
  %v610 = vld [vmem:[%s1 + $0x620] sm:$0xf]
  %v611 = vld [vmem:[%s1 + $0x624] sm:$0xf]
  %v612 = vld [vmem:[%s1 + $0x628] sm:$0xf]
  %v613 = vld [vmem:[%s1 + $0x62c] sm:$0xf]
  %v614 = vld [vmem:[%s1 + $0x630] sm:$0xf]
  %v615 = vld [vmem:[%s1 + $0x634] sm:$0xf]
  %v616 = vld [vmem:[%s1 + $0x638] sm:$0xf]
  %v617 = vld [vmem:[%s1 + $0x63c] sm:$0xf]
  %v618 = vld [vmem:[%s1 + $0x640] sm:$0xf]
  %v619 = vld [vmem:[%s1 + $0x644] sm:$0xf]
  %v620 = vld [vmem:[%s1 + $0x648] sm:$0xf]
  %v621 = vld [vmem:[%s1 + $0x64c] sm:$0xf]
  %v622 = vld [vmem:[%s1 + $0x650] sm:$0xf]
  %v623 = vld [vmem:[%s1 + $0x654] sm:$0xf]
  %v624 = vld [vmem:[%s1 + $0x658] sm:$0xf]
  %v625 = vld [vmem:[%s1 + $0x65c] sm:$0xf]
  %v626 = vld [vmem:[%s1 + $0x660] sm:$0xf]
  %v627 = vld [vmem:[%s1 + $0x664] sm:$0xf]
  %v628 = vld [vmem:[%s1 + $0x668] sm:$0xf]
  %v629 = vld [vmem:[%s1 + $0x66c] sm:$0xf]
  %v630 = vld [vmem:[%s1 + $0x670] sm:$0xf]
  %v631 = vld [vmem:[%s1 + $0x674] sm:$0xf]
  %v632 = vld [vmem:[%s1 + $0x678] sm:$0xf]
  %v633 = vld [vmem:[%s1 + $0x67c] sm:$0xf]
  %v634 = vld [vmem:[%s1 + $0x680] sm:$0xf]
  %v635 = vld [vmem:[%s1 + $0x684] sm:$0xf]
  %v636 = vld [vmem:[%s1 + $0x688] sm:$0xf]
  %v637 = vld [vmem:[%s1 + $0x68c] sm:$0xf]
  %v638 = vld [vmem:[%s1 + $0x690] sm:$0xf]
  %v639 = vld [vmem:[%s1 + $0x694] sm:$0xf]
  %v640 = vld [vmem:[%s1 + $0x698] sm:$0xf]
  %v641 = vld [vmem:[%s1 + $0x69c] sm:$0xf]
  %v642 = vld [vmem:[%s1 + $0x6a0] sm:$0xf]
  %v643 = vld [vmem:[%s1 + $0x6a4] sm:$0xf]
  %v644 = vld [vmem:[%s1 + $0x6a8] sm:$0xf]
  %v645 = vld [vmem:[%s1 + $0x6ac] sm:$0xf]
  %v646 = vld [vmem:[%s1 + $0x6b0] sm:$0xf]
  %v647 = vld [vmem:[%s1 + $0x6b4] sm:$0xf]
  %v648 = vld [vmem:[%s1 + $0x6b8] sm:$0xf]
  %v649 = vld [vmem:[%s1 + $0x6bc] sm:$0xf]
  %v650 = vld [vmem:[%s1 + $0x6c0] sm:$0xf]
  %v651 = vld [vmem:[%s1 + $0x6c4] sm:$0xf]
  %v652 = vld [vmem:[%s1 + $0x6c8] sm:$0xf]
  %v653 = vld [vmem:[%s1 + $0x6cc] sm:$0xf]
  %v654 = vld [vmem:[%s1 + $0x6d0] sm:$0xf]
  %v655 = vld [vmem:[%s1 + $0x6d4] sm:$0xf]
  %v656 = vld [vmem:[%s1 + $0x6d8] sm:$0xf]
  %v657 = vld [vmem:[%s1 + $0x6dc] sm:$0xf]
  %v658 = vld [vmem:[%s1 + $0x6e0] sm:$0xf]
  %v659 = vld [vmem:[%s1 + $0x6e4] sm:$0xf]
  %v660 = vld [vmem:[%s1 + $0x6e8] sm:$0xf]
  %v661 = vld [vmem:[%s1 + $0x6ec] sm:$0xf]
  %v662 = vld [vmem:[%s1 + $0x6f0] sm:$0xf]
  %v663 = vld [vmem:[%s1 + $0x6f4] sm:$0xf]
  %v664 = vld [vmem:[%s1 + $0x6f8] sm:$0xf]
  %v665 = vld [vmem:[%s1 + $0x6fc] sm:$0xf]
  %v666 = vld [vmem:[%s1 + $0x700] sm:$0xf]
  %v667 = vld [vmem:[%s1 + $0x704] sm:$0xf]
  %v668 = vld [vmem:[%s1 + $0x708] sm:$0xf]
  %v669 = vld [vmem:[%s1 + $0x70c] sm:$0xf]
  %v670 = vld [vmem:[%s1 + $0x710] sm:$0xf]
  %v671 = vld [vmem:[%s1 + $0x714] sm:$0xf]
  %v672 = vld [vmem:[%s1 + $0x718] sm:$0xf]
  %v673 = vld [vmem:[%s1 + $0x71c] sm:$0xf]
  %v674 = vld [vmem:[%s1 + $0x720] sm:$0xf]
  %v675 = vld [vmem:[%s1 + $0x724] sm:$0xf]
  %v676 = vld [vmem:[%s1 + $0x728] sm:$0xf]
  %v677 = vld [vmem:[%s1 + $0x72c] sm:$0xf]
  %v678 = vld [vmem:[%s1 + $0x730] sm:$0xf]
  %v679 = vld [vmem:[%s1 + $0x734] sm:$0xf]
  %v680 = vld [vmem:[%s1 + $0x738] sm:$0xf]
  %v681 = vld [vmem:[%s1 + $0x73c] sm:$0xf]
  %v682 = vld [vmem:[%s1 + $0x740] sm:$0xf]
  %v683 = vld [vmem:[%s1 + $0x744] sm:$0xf]
  %v684 = vld [vmem:[%s1 + $0x748] sm:$0xf]
  %v685 = vld [vmem:[%s1 + $0x74c] sm:$0xf]
  %v686 = vld [vmem:[%s1 + $0x750] sm:$0xf]
  %v687 = vld [vmem:[%s1 + $0x754] sm:$0xf]
  %v688 = vld [vmem:[%s1 + $0x758] sm:$0xf]
  %v689 = vld [vmem:[%s1 + $0x75c] sm:$0xf]
  %v690 = vld [vmem:[%s1 + $0x760] sm:$0xf]
  %v691 = vld [vmem:[%s1 + $0x764] sm:$0xf]
  %v692 = vld [vmem:[%s1 + $0x768] sm:$0xf]
  %v693 = vld [vmem:[%s1 + $0x76c] sm:$0xf]
  %v694 = vld [vmem:[%s1 + $0x770] sm:$0xf]
  %v695 = vld [vmem:[%s1 + $0x774] sm:$0xf]
  %v696 = vld [vmem:[%s1 + $0x778] sm:$0xf]
  %v697 = vld [vmem:[%s1 + $0x77c] sm:$0xf]
  %v698 = vld [vmem:[%s1 + $0x780] sm:$0xf]
  %v699 = vld [vmem:[%s1 + $0x784] sm:$0xf]
  %v700 = vld [vmem:[%s1 + $0x788] sm:$0xf]
  %v701 = vld [vmem:[%s1 + $0x78c] sm:$0xf]
  %v702 = vld [vmem:[%s1 + $0x790] sm:$0xf]
  %v703 = vld [vmem:[%s1 + $0x794] sm:$0xf]
  %v704 = vld [vmem:[%s1 + $0x798] sm:$0xf]
  %v705 = vld [vmem:[%s1 + $0x79c] sm:$0xf]
  %v706 = vld [vmem:[%s1 + $0x7a0] sm:$0xf]
  %v707 = vld [vmem:[%s1 + $0x7a4] sm:$0xf]
  %v708 = vld [vmem:[%s1 + $0x7a8] sm:$0xf]
  %v709 = vld [vmem:[%s1 + $0x7ac] sm:$0xf]
  %v710 = vld [vmem:[%s1 + $0x7b0] sm:$0xf]
  %v711 = vld [vmem:[%s1 + $0x7b4] sm:$0xf]
  %v712 = vld [vmem:[%s1 + $0x7b8] sm:$0xf]
  %v713 = vld [vmem:[%s1 + $0x7bc] sm:$0xf]
  %v714 = vld [vmem:[%s1 + $0x7c0] sm:$0xf]
  %v715 = vld [vmem:[%s1 + $0x7c4] sm:$0xf]
  %v716 = vld [vmem:[%s1 + $0x7c8] sm:$0xf]
  %v717 = vld [vmem:[%s1 + $0x7cc] sm:$0xf]
  %v718 = vld [vmem:[%s1 + $0x7d0] sm:$0xf]
  %v719 = vld [vmem:[%s1 + $0x7d4] sm:$0xf]
  %v720 = vld [vmem:[%s1 + $0x7d8] sm:$0xf]
  %v721 = vld [vmem:[%s1 + $0x7dc] sm:$0xf]
  %v722 = vld [vmem:[%s1 + $0x7e0] sm:$0xf]
  %v723 = vld [vmem:[%s1 + $0x7e4] sm:$0xf]
  %v724 = vld [vmem:[%s1 + $0x7e8] sm:$0xf]
  %v725 = vld [vmem:[%s1 + $0x7ec] sm:$0xf]
  %v726 = vld [vmem:[%s1 + $0x7f0] sm:$0xf]
  %v727 = vld [vmem:[%s1 + $0x7f4] sm:$0xf]
  %v728 = vld [vmem:[%s1 + $0x7f8] sm:$0xf]
  %v729 = vld [vmem:[%s1 + $0x7fc] sm:$0xf]
  %v730 = vld [vmem:[%s1 + $0x800] sm:$0xf]
  %v731 = vld [vmem:[%s1 + $0x804] sm:$0xf]
  %v732 = vld [vmem:[%s1 + $0x808] sm:$0xf]
  %v733 = vld [vmem:[%s1 + $0x80c] sm:$0xf]
  %v734 = vld [vmem:[%s1 + $0x810] sm:$0xf]
  %v735 = vld [vmem:[%s1 + $0x814] sm:$0xf]
  %v736 = vld [vmem:[%s1 + $0x818] sm:$0xf]
  %v737 = vld [vmem:[%s1 + $0x81c] sm:$0xf]
  %v738 = vld [vmem:[%s1 + $0x820] sm:$0xf]
  %v739 = vld [vmem:[%s1 + $0x824] sm:$0xf]
  %v740 = vld [vmem:[%s1 + $0x828] sm:$0xf]
  %v741 = vld [vmem:[%s1 + $0x82c] sm:$0xf]
  %v742 = vld [vmem:[%s1 + $0x830] sm:$0xf]
  %v743 = vld [vmem:[%s1 + $0x834] sm:$0xf]
  %v744 = vld [vmem:[%s1 + $0x838] sm:$0xf]
  %v745 = vld [vmem:[%s1 + $0x83c] sm:$0xf]
  %v746 = vld [vmem:[%s1 + $0x840] sm:$0xf]
  %v747 = vld [vmem:[%s1 + $0x844] sm:$0xf]
  %v748 = vld [vmem:[%s1 + $0x848] sm:$0xf]
  %v749 = vld [vmem:[%s1 + $0x84c] sm:$0xf]
  %v750 = vld [vmem:[%s1 + $0x850] sm:$0xf]
  %v751 = vld [vmem:[%s1 + $0x854] sm:$0xf]
  %v752 = vld [vmem:[%s1 + $0x858] sm:$0xf]
  %v753 = vld [vmem:[%s1 + $0x85c] sm:$0xf]
  %v754 = vld [vmem:[%s1 + $0x860] sm:$0xf]
  %v755 = vld [vmem:[%s1 + $0x864] sm:$0xf]
  %v756 = vld [vmem:[%s1 + $0x868] sm:$0xf]
  %v757 = vld [vmem:[%s1 + $0x86c] sm:$0xf]
  %v758 = vld [vmem:[%s1 + $0x870] sm:$0xf]
  %v759 = vld [vmem:[%s1 + $0x874] sm:$0xf]
  %v760 = vld [vmem:[%s1 + $0x878] sm:$0xf]
  %v761 = vld [vmem:[%s1 + $0x87c] sm:$0xf]
  %v762 = vld [vmem:[%s1 + $0x880] sm:$0xf]
  %v763 = vld [vmem:[%s1 + $0x884] sm:$0xf]
  %v764 = vld [vmem:[%s1 + $0x888] sm:$0xf]
  %v765 = vld [vmem:[%s1 + $0x88c] sm:$0xf]
  %v766 = vld [vmem:[%s1 + $0x890] sm:$0xf]
  %v767 = vld [vmem:[%s1 + $0x894] sm:$0xf]
  %v768 = vld [vmem:[%s1 + $0x898] sm:$0xf]
  %v769 = vld [vmem:[%s1 + $0x89c] sm:$0xf]
  %v770 = vld [vmem:[%s1 + $0x8a0] sm:$0xf]
  %v771 = vld [vmem:[%s1 + $0x8a4] sm:$0xf]
  %v772 = vld [vmem:[%s1 + $0x8a8] sm:$0xf]
  %v773 = vld [vmem:[%s1 + $0x8ac] sm:$0xf]
  %v774 = vld [vmem:[%s1 + $0x8b0] sm:$0xf]
  %v775 = vld [vmem:[%s1 + $0x8b4] sm:$0xf]
  %v776 = vld [vmem:[%s1 + $0x8b8] sm:$0xf]
  %v777 = vld [vmem:[%s1 + $0x8bc] sm:$0xf]
  %v778 = vld [vmem:[%s1 + $0x8c0] sm:$0xf]
  %v779 = vld [vmem:[%s1 + $0x8c4] sm:$0xf]
  %v780 = vld [vmem:[%s1 + $0x8c8] sm:$0xf]
  %v781 = vld [vmem:[%s1 + $0x8cc] sm:$0xf]
  %v782 = vld [vmem:[%s1 + $0x8d0] sm:$0xf]
  %v783 = vld [vmem:[%s1 + $0x8d4] sm:$0xf]
  %v784 = vld [vmem:[%s1 + $0x8d8] sm:$0xf]
  %v785 = vld [vmem:[%s1 + $0x8dc] sm:$0xf]
  %v786 = vld [vmem:[%s1 + $0x8e0] sm:$0xf]
  %v787 = vld [vmem:[%s1 + $0x8e4] sm:$0xf]
  %v788 = vld [vmem:[%s1 + $0x8e8] sm:$0xf]
  %v789 = vld [vmem:[%s1 + $0x8ec] sm:$0xf]
  %v790 = vld [vmem:[%s1 + $0x8f0] sm:$0xf]
  %v791 = vld [vmem:[%s1 + $0x8f4] sm:$0xf]
  %v792 = vld [vmem:[%s1 + $0x8f8] sm:$0xf]
  %v793 = vld [vmem:[%s1 + $0x8fc] sm:$0xf]
  %v794 = vld [vmem:[%s1 + $0x900] sm:$0xf]
  %v795 = vld [vmem:[%s1 + $0x904] sm:$0xf]
  %v796 = vld [vmem:[%s1 + $0x908] sm:$0xf]
  %v797 = vld [vmem:[%s1 + $0x90c] sm:$0xf]
  %v798 = vld [vmem:[%s1 + $0x910] sm:$0xf]
  %v799 = vld [vmem:[%s1 + $0x914] sm:$0xf]
  %v800 = vld [vmem:[%s1 + $0x918] sm:$0xf]
  %v801 = vld [vmem:[%s1 + $0x91c] sm:$0xf]
  %v802 = vld [vmem:[%s1 + $0x920] sm:$0xf]
  %v803 = vld [vmem:[%s1 + $0x924] sm:$0xf]
  %v804 = vld [vmem:[%s1 + $0x928] sm:$0xf]
  %v805 = vld [vmem:[%s1 + $0x92c] sm:$0xf]
  %v806 = vld [vmem:[%s1 + $0x930] sm:$0xf]
  %v807 = vld [vmem:[%s1 + $0x934] sm:$0xf]
  %v808 = vld [vmem:[%s1 + $0x938] sm:$0xf]
  %v809 = vld [vmem:[%s1 + $0x93c] sm:$0xf]
  %v810 = vld [vmem:[%s1 + $0x940] sm:$0xf]
  %v811 = vld [vmem:[%s1 + $0x944] sm:$0xf]
  %v812 = vld [vmem:[%s1 + $0x948] sm:$0xf]
  %v813 = vld [vmem:[%s1 + $0x94c] sm:$0xf]
  %v814 = vld [vmem:[%s1 + $0x950] sm:$0xf]
  %v815 = vld [vmem:[%s1 + $0x954] sm:$0xf]
  %v816 = vld [vmem:[%s1 + $0x958] sm:$0xf]
  %v817 = vld [vmem:[%s1 + $0x95c] sm:$0xf]
  %v818 = vld [vmem:[%s1 + $0x960] sm:$0xf]
  %v819 = vld [vmem:[%s1 + $0x964] sm:$0xf]
  %v820 = vld [vmem:[%s1 + $0x968] sm:$0xf]
  %v821 = vld [vmem:[%s1 + $0x96c] sm:$0xf]
  %v822 = vld [vmem:[%s1 + $0x970] sm:$0xf]
  %v823 = vld [vmem:[%s1 + $0x974] sm:$0xf]
  %v824 = vld [vmem:[%s1 + $0x978] sm:$0xf]
  %v825 = vld [vmem:[%s1 + $0x97c] sm:$0xf]
  %v826 = vld [vmem:[%s1 + $0x980] sm:$0xf]
  %v827 = vld [vmem:[%s1 + $0x984] sm:$0xf]
  %v828 = vld [vmem:[%s1 + $0x988] sm:$0xf]
  %v829 = vld [vmem:[%s1 + $0x98c] sm:$0xf]
  %v830 = vld [vmem:[%s1 + $0x990] sm:$0xf]
  %v831 = vld [vmem:[%s1 + $0x994] sm:$0xf]
  %v832 = vld [vmem:[%s1 + $0x998] sm:$0xf]
  %v833 = vld [vmem:[%s1 + $0x99c] sm:$0xf]
  %v834 = vld [vmem:[%s1 + $0x9a0] sm:$0xf]
  %v835 = vld [vmem:[%s1 + $0x9a4] sm:$0xf]
  %v836 = vld [vmem:[%s1 + $0x9a8] sm:$0xf]
  %v837 = vld [vmem:[%s1 + $0x9ac] sm:$0xf]
  %v838 = vld [vmem:[%s1 + $0x9b0] sm:$0xf]
  %v839 = vld [vmem:[%s1 + $0x9b4] sm:$0xf]
  %v840 = vld [vmem:[%s1 + $0x9b8] sm:$0xf]
  %v841 = vld [vmem:[%s1 + $0x9bc] sm:$0xf]
  %v842 = vld [vmem:[%s1 + $0x9c0] sm:$0xf]
  %v843 = vld [vmem:[%s1 + $0x9c4] sm:$0xf]
  %v844 = vld [vmem:[%s1 + $0x9c8] sm:$0xf]
  %v845 = vld [vmem:[%s1 + $0x9cc] sm:$0xf]
  %v846 = vld [vmem:[%s1 + $0x9d0] sm:$0xf]
  %v847 = vld [vmem:[%s1 + $0x9d4] sm:$0xf]
  %v848 = vld [vmem:[%s1 + $0x9d8] sm:$0xf]
  %v849 = vld [vmem:[%s1 + $0x9dc] sm:$0xf]
  %v850 = vld [vmem:[%s1 + $0x9e0] sm:$0xf]
  %v851 = vld [vmem:[%s1 + $0x9e4] sm:$0xf]
  %v852 = vld [vmem:[%s1 + $0x9e8] sm:$0xf]
  %v853 = vld [vmem:[%s1 + $0x9ec] sm:$0xf]
  %v854 = vld [vmem:[%s1 + $0x9f0] sm:$0xf]
  %v855 = vld [vmem:[%s1 + $0x9f4] sm:$0xf]
  %v856 = vld [vmem:[%s1 + $0x9f8] sm:$0xf]
  %v857 = vld [vmem:[%s1 + $0x9fc] sm:$0xf]
  %v858 = vld [vmem:[%s1 + $0xa00] sm:$0xf]
  %v859 = vld [vmem:[%s1 + $0xa04] sm:$0xf]
  %v860 = vld [vmem:[%s1 + $0xa08] sm:$0xf]
  %v861 = vld [vmem:[%s1 + $0xa0c] sm:$0xf]
  %v862 = vld [vmem:[%s1 + $0xa10] sm:$0xf]
  %v863 = vld [vmem:[%s1 + $0xa14] sm:$0xf]
  %v864 = vld [vmem:[%s1 + $0xa18] sm:$0xf]
  %v865 = vld [vmem:[%s1 + $0xa1c] sm:$0xf]
  %v866 = vld [vmem:[%s1 + $0xa20] sm:$0xf]
  %v867 = vld [vmem:[%s1 + $0xa24] sm:$0xf]
  %v868 = vld [vmem:[%s1 + $0xa28] sm:$0xf]
  %v869 = vld [vmem:[%s1 + $0xa2c] sm:$0xf]
  %v870 = vld [vmem:[%s1 + $0xa30] sm:$0xf]
  %v871 = vld [vmem:[%s1 + $0xa34] sm:$0xf]
  %v872 = vld [vmem:[%s1 + $0xa38] sm:$0xf]
  %v873 = vld [vmem:[%s1 + $0xa3c] sm:$0xf]
  %v874 = vld [vmem:[%s1 + $0xa40] sm:$0xf]
  %v875 = vld [vmem:[%s1 + $0xa44] sm:$0xf]
  %v876 = vld [vmem:[%s1 + $0xa48] sm:$0xf]
  %v877 = vld [vmem:[%s1 + $0xa4c] sm:$0xf]
  %v878 = vld [vmem:[%s1 + $0xa50] sm:$0xf]
  %v879 = vld [vmem:[%s1 + $0xa54] sm:$0xf]
  %v880 = vld [vmem:[%s1 + $0xa58] sm:$0xf]
  %v881 = vld [vmem:[%s1 + $0xa5c] sm:$0xf]
  %v882 = vld [vmem:[%s1 + $0xa60] sm:$0xf]
  %v883 = vld [vmem:[%s1 + $0xa64] sm:$0xf]
  %v884 = vld [vmem:[%s1 + $0xa68] sm:$0xf]
  %v885 = vld [vmem:[%s1 + $0xa6c] sm:$0xf]
  %v886 = vld [vmem:[%s1 + $0xa70] sm:$0xf]
  %v887 = vld [vmem:[%s1 + $0xa74] sm:$0xf]
  %v888 = vld [vmem:[%s1 + $0xa78] sm:$0xf]
  %v889 = vld [vmem:[%s1 + $0xa7c] sm:$0xf]
  %v890 = vld [vmem:[%s1 + $0xa80] sm:$0xf]
  %v891 = vld [vmem:[%s1 + $0xa84] sm:$0xf]
  %v892 = vld [vmem:[%s1 + $0xa88] sm:$0xf]
  %v893 = vld [vmem:[%s1 + $0xa8c] sm:$0xf]
  %v894 = vld [vmem:[%s1 + $0xa90] sm:$0xf]
  %v895 = vld [vmem:[%s1 + $0xa94] sm:$0xf]
  %v896 = vld [vmem:[%s1 + $0xa98] sm:$0xf]
  %v897 = vld [vmem:[%s1 + $0xa9c] sm:$0xf]
  %v898 = vld [vmem:[%s1 + $0xaa0] sm:$0xf]
  %v899 = vld [vmem:[%s1 + $0xaa4] sm:$0xf]
  %v900 = vld [vmem:[%s1 + $0xaa8] sm:$0xf]
  %v901 = vld [vmem:[%s1 + $0xaac] sm:$0xf]
  %v902 = vld [vmem:[%s1 + $0xab0] sm:$0xf]
  %v903 = vld [vmem:[%s1 + $0xab4] sm:$0xf]
  %v904 = vld [vmem:[%s1 + $0xab8] sm:$0xf]
  %v905 = vld [vmem:[%s1 + $0xabc] sm:$0xf]
  %v906 = vld [vmem:[%s1 + $0xac0] sm:$0xf]
  %v907 = vld [vmem:[%s1 + $0xac4] sm:$0xf]
  %v908 = vld [vmem:[%s1 + $0xac8] sm:$0xf]
  %v909 = vld [vmem:[%s1 + $0xacc] sm:$0xf]
  %v910 = vld [vmem:[%s1 + $0xad0] sm:$0xf]
  %v911 = vld [vmem:[%s1 + $0xad4] sm:$0xf]
  %v912 = vld [vmem:[%s1 + $0xad8] sm:$0xf]
  %v913 = vld [vmem:[%s1 + $0xadc] sm:$0xf]
  %v914 = vld [vmem:[%s1 + $0xae0] sm:$0xf]
  %v915 = vld [vmem:[%s1 + $0xae4] sm:$0xf]
  %v916 = vld [vmem:[%s1 + $0xae8] sm:$0xf]
  %v917 = vld [vmem:[%s1 + $0xaec] sm:$0xf]
  %v918 = vld [vmem:[%s1 + $0xaf0] sm:$0xf]
  %v919 = vld [vmem:[%s1 + $0xaf4] sm:$0xf]
  %v920 = vld [vmem:[%s1 + $0xaf8] sm:$0xf]
  %v921 = vld [vmem:[%s1 + $0xafc] sm:$0xf]
  %v922 = vld [vmem:[%s1 + $0xb00] sm:$0xf]
  %v923 = vld [vmem:[%s1 + $0xb04] sm:$0xf]
  %v924 = vld [vmem:[%s1 + $0xb08] sm:$0xf]
  %v925 = vld [vmem:[%s1 + $0xb0c] sm:$0xf]
  %v926 = vld [vmem:[%s1 + $0xb10] sm:$0xf]
  %v927 = vld [vmem:[%s1 + $0xb14] sm:$0xf]
  %v928 = vld [vmem:[%s1 + $0xb18] sm:$0xf]
  %v929 = vld [vmem:[%s1 + $0xb1c] sm:$0xf]
  %v930 = vld [vmem:[%s1 + $0xb20] sm:$0xf]
  %v931 = vld [vmem:[%s1 + $0xb24] sm:$0xf]
  %v932 = vld [vmem:[%s1 + $0xb28] sm:$0xf]
  %v933 = vld [vmem:[%s1 + $0xb2c] sm:$0xf]
  %v934 = vld [vmem:[%s1 + $0xb30] sm:$0xf]
  %v935 = vld [vmem:[%s1 + $0xb34] sm:$0xf]
  %v936 = vld [vmem:[%s1 + $0xb38] sm:$0xf]
  %v937 = vld [vmem:[%s1 + $0xb3c] sm:$0xf]
  %v938 = vld [vmem:[%s1 + $0xb40] sm:$0xf]
  %v939 = vld [vmem:[%s1 + $0xb44] sm:$0xf]
  %v940 = vld [vmem:[%s1 + $0xb48] sm:$0xf]
  %v941 = vld [vmem:[%s1 + $0xb4c] sm:$0xf]
  %v942 = vld [vmem:[%s1 + $0xb50] sm:$0xf]
  %v943 = vld [vmem:[%s1 + $0xb54] sm:$0xf]
  %v944 = vld [vmem:[%s1 + $0xb58] sm:$0xf]
  %v945 = vld [vmem:[%s1 + $0xb5c] sm:$0xf]
  %v946 = vld [vmem:[%s1 + $0xb60] sm:$0xf]
  %v947 = vld [vmem:[%s1 + $0xb64] sm:$0xf]
  %v948 = vld [vmem:[%s1 + $0xb68] sm:$0xf]
  %v949 = vld [vmem:[%s1 + $0xb6c] sm:$0xf]
  %v950 = vld [vmem:[%s1 + $0xb70] sm:$0xf]
  %v951 = vld [vmem:[%s1 + $0xb74] sm:$0xf]
  %v952 = vld [vmem:[%s1 + $0xb78] sm:$0xf]
  %v953 = vld [vmem:[%s1 + $0xb7c] sm:$0xf]
  %v954 = vld [vmem:[%s1 + $0xb80] sm:$0xf]
  %v955 = vld [vmem:[%s1 + $0xb84] sm:$0xf]
  %v956 = vld [vmem:[%s1 + $0xb88] sm:$0xf]
  %v957 = vld [vmem:[%s1 + $0xb8c] sm:$0xf]
  %v958 = vld [vmem:[%s1 + $0xb90] sm:$0xf]
  %v959 = vld [vmem:[%s1 + $0xb94] sm:$0xf]
  %v960 = vld [vmem:[%s1 + $0xb98] sm:$0xf]
  %v961 = vld [vmem:[%s1 + $0xb9c] sm:$0xf]
  %v962 = vld [vmem:[%s1 + $0xba0] sm:$0xf]
  %v963 = vld [vmem:[%s1 + $0xba4] sm:$0xf]
  %v964 = vld [vmem:[%s1 + $0xba8] sm:$0xf]
  %v965 = vld [vmem:[%s1 + $0xbac] sm:$0xf]
  %v966 = vld [vmem:[%s1 + $0xbb0] sm:$0xf]
  %v967 = vld [vmem:[%s1 + $0xbb4] sm:$0xf]
  %v968 = vld [vmem:[%s1 + $0xbb8] sm:$0xf]
  %v969 = vld [vmem:[%s1 + $0xbbc] sm:$0xf]
  %v970 = vld [vmem:[%s1 + $0xbc0] sm:$0xf]
  %v971 = vld [vmem:[%s1 + $0xbc4] sm:$0xf]
  %v972 = vld [vmem:[%s1 + $0xbc8] sm:$0xf]
  %v973 = vld [vmem:[%s1 + $0xbcc] sm:$0xf]
  %v974 = vld [vmem:[%s1 + $0xbd0] sm:$0xf]
  %v975 = vld [vmem:[%s1 + $0xbd4] sm:$0xf]
  %v976 = vld [vmem:[%s1 + $0xbd8] sm:$0xf]
  %v977 = vld [vmem:[%s1 + $0xbdc] sm:$0xf]
  %v978 = vld [vmem:[%s1 + $0xbe0] sm:$0xf]
  %v979 = vld [vmem:[%s1 + $0xbe4] sm:$0xf]
  %v980 = vld [vmem:[%s1 + $0xbe8] sm:$0xf]
  %v981 = vld [vmem:[%s1 + $0xbec] sm:$0xf]
  %v982 = vld [vmem:[%s1 + $0xbf0] sm:$0xf]
  %v983 = vld [vmem:[%s1 + $0xbf4] sm:$0xf]
  %v984 = vld [vmem:[%s1 + $0xbf8] sm:$0xf]
  %v985 = vld [vmem:[%s1 + $0xbfc] sm:$0xf]
  %v986 = vld [vmem:[%s1 + $0xc00] sm:$0xf]
  %v987 = vld [vmem:[%s1 + $0xc04] sm:$0xf]
  %v988 = vld [vmem:[%s1 + $0xc08] sm:$0xf]
  %v989 = vld [vmem:[%s1 + $0xc0c] sm:$0xf]
  %v990 = vld [vmem:[%s1 + $0xc10] sm:$0xf]
  %v991 = vld [vmem:[%s1 + $0xc14] sm:$0xf]
  %v992 = vld [vmem:[%s1 + $0xc18] sm:$0xf]
  %v993 = vld [vmem:[%s1 + $0xc1c] sm:$0xf]
  %v994 = vld [vmem:[%s1 + $0xc20] sm:$0xf]
  %v995 = vld [vmem:[%s1 + $0xc24] sm:$0xf]
  %v996 = vld [vmem:[%s1 + $0xc28] sm:$0xf]
  %v997 = vld [vmem:[%s1 + $0xc2c] sm:$0xf]
  %v998 = vld [vmem:[%s1 + $0xc30] sm:$0xf]
  %v999 = vld [vmem:[%s1 + $0xc34] sm:$0xf]
  %v1000 = vld [vmem:[%s1 + $0xc38] sm:$0xf]
  %v1001 = vld [vmem:[%s1 + $0xc3c] sm:$0xf]
  %v1002 = vld [vmem:[%s1 + $0xc40] sm:$0xf]
  %v1003 = vld [vmem:[%s1 + $0xc44] sm:$0xf]
  %v1004 = vld [vmem:[%s1 + $0xc48] sm:$0xf]
  %v1005 = vld [vmem:[%s1 + $0xc4c] sm:$0xf]
  %v1006 = vld [vmem:[%s1 + $0xc50] sm:$0xf]
  %v1007 = vld [vmem:[%s1 + $0xc54] sm:$0xf]
  %v1008 = vld [vmem:[%s1 + $0xc58] sm:$0xf]
  %v1009 = vld [vmem:[%s1 + $0xc5c] sm:$0xf]
  %v1010 = vld [vmem:[%s1 + $0xc60] sm:$0xf]
  %v1011 = vld [vmem:[%s1 + $0xc64] sm:$0xf]
  %v1012 = vld [vmem:[%s1 + $0xc68] sm:$0xf]
  %v1013 = vld [vmem:[%s1 + $0xc6c] sm:$0xf]
  %v1014 = vld [vmem:[%s1 + $0xc70] sm:$0xf]
  %v1015 = vld [vmem:[%s1 + $0xc74] sm:$0xf]
  %v1016 = vld [vmem:[%s1 + $0xc78] sm:$0xf]
  %v1017 = vld [vmem:[%s1 + $0xc7c] sm:$0xf]
  %v1018 = vld [vmem:[%s1 + $0xc80] sm:$0xf]
  %v1019 = vld [vmem:[%s1 + $0xc84] sm:$0xf]
  %v1020 = vld [vmem:[%s1 + $0xc88] sm:$0xf]
  %v1021 = vld [vmem:[%s1 + $0xc8c] sm:$0xf]
  %v1022 = vld [vmem:[%s1 + $0xc90] sm:$0xf]
  %v1023 = vld [vmem:[%s1 + $0xc94] sm:$0xf]
  %v1024 = vld [vmem:[%s1 + $0xc98] sm:$0xf]
  %v1025 = vld [vmem:[%s1 + $0xc9c] sm:$0xf]
  %v1026 = vld [vmem:[%s1 + $0xca0] sm:$0xf]
  %v1027 = vld [vmem:[%s1 + $0xca4] sm:$0xf]
  %v1028 = vld [vmem:[%s1 + $0xca8] sm:$0xf]
  %v1029 = vld [vmem:[%s1 + $0xcac] sm:$0xf]
  %v1030 = vld [vmem:[%s1 + $0xcb0] sm:$0xf]
  %v1031 = vld [vmem:[%s1 + $0xcb4] sm:$0xf]
  %v1032 = vld [vmem:[%s1 + $0xcb8] sm:$0xf]
  %v1033 = vld [vmem:[%s1 + $0xcbc] sm:$0xf]
  %v1034 = vld [vmem:[%s1 + $0xcc0] sm:$0xf]
  %v1035 = vld [vmem:[%s1 + $0xcc4] sm:$0xf]
  %v1036 = vld [vmem:[%s1 + $0xcc8] sm:$0xf]
  %v1037 = vld [vmem:[%s1 + $0xccc] sm:$0xf]
  %v1038 = vld [vmem:[%s1 + $0xcd0] sm:$0xf]
  %v1039 = vld [vmem:[%s1 + $0xcd4] sm:$0xf]
  %v1040 = vld [vmem:[%s1 + $0xcd8] sm:$0xf]
  %v1041 = vld [vmem:[%s1 + $0xcdc] sm:$0xf]
  %v1042 = vld [vmem:[%s1 + $0xce0] sm:$0xf]
  %v1043 = vld [vmem:[%s1 + $0xce4] sm:$0xf]
  %v1044 = vld [vmem:[%s1 + $0xce8] sm:$0xf]
  %v1045 = vld [vmem:[%s1 + $0xcec] sm:$0xf]
  %v1046 = vld [vmem:[%s1 + $0xcf0] sm:$0xf]
  %v1047 = vld [vmem:[%s1 + $0xcf4] sm:$0xf]
  %v1048 = vld [vmem:[%s1 + $0xcf8] sm:$0xf]
  %v1049 = vld [vmem:[%s1 + $0xcfc] sm:$0xf]
  %v1050 = vld [vmem:[%s1 + $0xd00] sm:$0xf]
  %v1051 = vld [vmem:[%s1 + $0xd04] sm:$0xf]
  %v1052 = vld [vmem:[%s1 + $0xd08] sm:$0xf]
  %v1053 = vld [vmem:[%s1 + $0xd0c] sm:$0xf]
  %v1054 = vld [vmem:[%s1 + $0xd10] sm:$0xf]
  %v1055 = vld [vmem:[%s1 + $0xd14] sm:$0xf]
  %v1056 = vld [vmem:[%s1 + $0xd18] sm:$0xf]
  %v1057 = vld [vmem:[%s1 + $0xd1c] sm:$0xf]
  %v1058 = vld [vmem:[%s1 + $0xd20] sm:$0xf]
  %v1059 = vld [vmem:[%s1 + $0xd24] sm:$0xf]
  %v1060 = vld [vmem:[%s1 + $0xd28] sm:$0xf]
  %v1061 = vld [vmem:[%s1 + $0xd2c] sm:$0xf]
  %v1062 = vld [vmem:[%s1 + $0xd30] sm:$0xf]
  %v1063 = vld [vmem:[%s1 + $0xd34] sm:$0xf]
  %v1064 = vld [vmem:[%s1 + $0xd38] sm:$0xf]
  %v1065 = vld [vmem:[%s1 + $0xd3c] sm:$0xf]
  %v1066 = vld [vmem:[%s1 + $0xd40] sm:$0xf]
  %v1067 = vld [vmem:[%s1 + $0xd44] sm:$0xf]
  %v1068 = vld [vmem:[%s1 + $0xd48] sm:$0xf]
  %v1069 = vld [vmem:[%s1 + $0xd4c] sm:$0xf]
  %v1070 = vld [vmem:[%s1 + $0xd50] sm:$0xf]
  %v1071 = vld [vmem:[%s1 + $0xd54] sm:$0xf]
  %v1072 = vld [vmem:[%s1 + $0xd58] sm:$0xf]
  %v1073 = vld [vmem:[%s1 + $0xd5c] sm:$0xf]
  %v1074 = vld [vmem:[%s1 + $0xd60] sm:$0xf]
  %v1075 = vld [vmem:[%s1 + $0xd64] sm:$0xf]
  %v1076 = vld [vmem:[%s1 + $0xd68] sm:$0xf]
  %v1077 = vld [vmem:[%s1 + $0xd6c] sm:$0xf]
  %v1078 = vld [vmem:[%s1 + $0xd70] sm:$0xf]
  %v1079 = vld [vmem:[%s1 + $0xd74] sm:$0xf]
  %v1080 = vld [vmem:[%s1 + $0xd78] sm:$0xf]
  %v1081 = vld [vmem:[%s1 + $0xd7c] sm:$0xf]
  %v1082 = vld [vmem:[%s1 + $0xd80] sm:$0xf]
  %v1083 = vld [vmem:[%s1 + $0xd84] sm:$0xf]
  %v1084 = vld [vmem:[%s1 + $0xd88] sm:$0xf]
  %v1085 = vld [vmem:[%s1 + $0xd8c] sm:$0xf]
  %v1086 = vld [vmem:[%s1 + $0xd90] sm:$0xf]
  %v1087 = vld [vmem:[%s1 + $0xd94] sm:$0xf]
  %v1088 = vld [vmem:[%s1 + $0xd98] sm:$0xf]
  %v1089 = vld [vmem:[%s1 + $0xd9c] sm:$0xf]
  %v1090 = vld [vmem:[%s1 + $0xda0] sm:$0xf]
  %v1091 = vld [vmem:[%s1 + $0xda4] sm:$0xf]
  %v1092 = vld [vmem:[%s1 + $0xda8] sm:$0xf]
  %v1093 = vld [vmem:[%s1 + $0xdac] sm:$0xf]
  %v1094 = vld [vmem:[%s1 + $0xdb0] sm:$0xf]
  %v1095 = vld [vmem:[%s1 + $0xdb4] sm:$0xf]
  %v1096 = vld [vmem:[%s1 + $0xdb8] sm:$0xf]
  %v1097 = vld [vmem:[%s1 + $0xdbc] sm:$0xf]
  %v1098 = vld [vmem:[%s1 + $0xdc0] sm:$0xf]
  %v1099 = vld [vmem:[%s1 + $0xdc4] sm:$0xf]
  %v1100 = vld [vmem:[%s1 + $0xdc8] sm:$0xf]
  %v1101 = vld [vmem:[%s1 + $0xdcc] sm:$0xf]
  %v1102 = vld [vmem:[%s1 + $0xdd0] sm:$0xf]
  %v1103 = vld [vmem:[%s1 + $0xdd4] sm:$0xf]
  %v1104 = vld [vmem:[%s1 + $0xdd8] sm:$0xf]
  %v1105 = vld [vmem:[%s1 + $0xddc] sm:$0xf]
  %v1106 = vld [vmem:[%s1 + $0xde0] sm:$0xf]
  %v1107 = vld [vmem:[%s1 + $0xde4] sm:$0xf]
  %v1108 = vld [vmem:[%s1 + $0xde8] sm:$0xf]
  %v1109 = vld [vmem:[%s1 + $0xdec] sm:$0xf]
  %v1110 = vld [vmem:[%s1 + $0xdf0] sm:$0xf]
  %v1111 = vld [vmem:[%s1 + $0xdf4] sm:$0xf]
  %v1112 = vld [vmem:[%s1 + $0xdf8] sm:$0xf]
  %v1113 = vld [vmem:[%s1 + $0xdfc] sm:$0xf]
  %v1114 = vld [vmem:[%s1 + $0xe00] sm:$0xf]
  %v1115 = vld [vmem:[%s1 + $0xe04] sm:$0xf]
  %v1116 = vld [vmem:[%s1 + $0xe08] sm:$0xf]
  %v1117 = vld [vmem:[%s1 + $0xe0c] sm:$0xf]
  %v1118 = vld [vmem:[%s1 + $0xe10] sm:$0xf]
  %v1119 = vld [vmem:[%s1 + $0xe14] sm:$0xf]
  %v1120 = vld [vmem:[%s1 + $0xe18] sm:$0xf]
  %v1121 = vld [vmem:[%s1 + $0xe1c] sm:$0xf]
  %v1122 = vld [vmem:[%s1 + $0xe20] sm:$0xf]
  %v1123 = vld [vmem:[%s1 + $0xe24] sm:$0xf]
  %v1124 = vld [vmem:[%s1 + $0xe28] sm:$0xf]
  %v1125 = vld [vmem:[%s1 + $0xe2c] sm:$0xf]
  %v1126 = vld [vmem:[%s1 + $0xe30] sm:$0xf]
  %v1127 = vld [vmem:[%s1 + $0xe34] sm:$0xf]
  %v1128 = vld [vmem:[%s1 + $0xe38] sm:$0xf]
  %v1129 = vld [vmem:[%s1 + $0xe3c] sm:$0xf]
  %v1130 = vld [vmem:[%s1 + $0xe40] sm:$0xf]
  %v1131 = vld [vmem:[%s1 + $0xe44] sm:$0xf]
  %v1132 = vld [vmem:[%s1 + $0xe48] sm:$0xf]
  %v1133 = vld [vmem:[%s1 + $0xe4c] sm:$0xf]
  %v1134 = vld [vmem:[%s1 + $0xe50] sm:$0xf]
  %v1135 = vld [vmem:[%s1 + $0xe54] sm:$0xf]
  %v1136 = vld [vmem:[%s1 + $0xe58] sm:$0xf]
  %v1137 = vld [vmem:[%s1 + $0xe5c] sm:$0xf]
  %v1138 = vld [vmem:[%s1 + $0xe60] sm:$0xf]
  %v1139 = vld [vmem:[%s1 + $0xe64] sm:$0xf]
  %v1140 = vld [vmem:[%s1 + $0xe68] sm:$0xf]
  %v1141 = vld [vmem:[%s1 + $0xe6c] sm:$0xf]
  %v1142 = vld [vmem:[%s1 + $0xe70] sm:$0xf]
  %v1143 = vld [vmem:[%s1 + $0xe74] sm:$0xf]
  %v1144 = vld [vmem:[%s1 + $0xe78] sm:$0xf]
  %v1145 = vld [vmem:[%s1 + $0xe7c] sm:$0xf]
  %v1146 = vld [vmem:[%s1 + $0xe80] sm:$0xf]
  %v1147 = vld [vmem:[%s1 + $0xe84] sm:$0xf]
  %v1148 = vld [vmem:[%s1 + $0xe88] sm:$0xf]
  %v1149 = vld [vmem:[%s1 + $0xe8c] sm:$0xf]
  %v1150 = vld [vmem:[%s1 + $0xe90] sm:$0xf]
  %v1151 = vld [vmem:[%s1 + $0xe94] sm:$0xf]
  %v1152 = vld [vmem:[%s1 + $0xe98] sm:$0xf]
  %v1153 = vld [vmem:[%s1 + $0xe9c] sm:$0xf]
  %v1154 = vld [vmem:[%s1 + $0xea0] sm:$0xf]
  %v1155 = vld [vmem:[%s1 + $0xea4] sm:$0xf]
  %v1156 = vld [vmem:[%s1 + $0xea8] sm:$0xf]
  %v1157 = vld [vmem:[%s1 + $0xeac] sm:$0xf]
  %v1158 = vld [vmem:[%s1 + $0xeb0] sm:$0xf]
  %v1159 = vld [vmem:[%s1 + $0xeb4] sm:$0xf]
  %v1160 = vld [vmem:[%s1 + $0xeb8] sm:$0xf]
  %v1161 = vld [vmem:[%s1 + $0xebc] sm:$0xf]
  %v1162 = vld [vmem:[%s1 + $0xec0] sm:$0xf]
  %v1163 = vld [vmem:[%s1 + $0xec4] sm:$0xf]
  %v1164 = vld [vmem:[%s1 + $0xec8] sm:$0xf]
  %v1165 = vld [vmem:[%s1 + $0xecc] sm:$0xf]
  %v1166 = vld [vmem:[%s1 + $0xed0] sm:$0xf]
  %v1167 = vld [vmem:[%s1 + $0xed4] sm:$0xf]
  %v1168 = vld [vmem:[%s1 + $0xed8] sm:$0xf]
  %v1169 = vld [vmem:[%s1 + $0xedc] sm:$0xf]
  %v1170 = vld [vmem:[%s1 + $0xee0] sm:$0xf]
  %v1171 = vld [vmem:[%s1 + $0xee4] sm:$0xf]
  %v1172 = vld [vmem:[%s1 + $0xee8] sm:$0xf]
  %v1173 = vld [vmem:[%s1 + $0xeec] sm:$0xf]
  %v1174 = vld [vmem:[%s1 + $0xef0] sm:$0xf]
  %v1175 = vld [vmem:[%s1 + $0xef4] sm:$0xf]
  %v1176 = vld [vmem:[%s1 + $0xef8] sm:$0xf]
  %v1177 = vld [vmem:[%s1 + $0xefc] sm:$0xf]
  %v1178 = vld [vmem:[%s1 + $0xf00] sm:$0xf]
  %v1179 = vld [vmem:[%s1 + $0xf04] sm:$0xf]
  %v1180 = vld [vmem:[%s1 + $0xf08] sm:$0xf]
  %v1181 = vld [vmem:[%s1 + $0xf0c] sm:$0xf]
  %v1182 = vld [vmem:[%s1 + $0xf10] sm:$0xf]
  %v1183 = vld [vmem:[%s1 + $0xf14] sm:$0xf]
  %v1184 = vld [vmem:[%s1 + $0xf18] sm:$0xf]
  %v1185 = vld [vmem:[%s1 + $0xf1c] sm:$0xf]
  %v1186 = vld [vmem:[%s1 + $0xf20] sm:$0xf]
  %v1187 = vld [vmem:[%s1 + $0xf24] sm:$0xf]
  %v1188 = vld [vmem:[%s1 + $0xf28] sm:$0xf]
  %v1189 = vld [vmem:[%s1 + $0xf2c] sm:$0xf]
  %v1190 = vld [vmem:[%s1 + $0xf30] sm:$0xf]
  %v1191 = vld [vmem:[%s1 + $0xf34] sm:$0xf]
  %v1192 = vld [vmem:[%s1 + $0xf38] sm:$0xf]
  %v1193 = vld [vmem:[%s1 + $0xf3c] sm:$0xf]
  %v1194 = vld [vmem:[%s1 + $0xf40] sm:$0xf]
  %v1195 = vld [vmem:[%s1 + $0xf44] sm:$0xf]
  %v1196 = vld [vmem:[%s1 + $0xf48] sm:$0xf]
  %v1197 = vld [vmem:[%s1 + $0xf4c] sm:$0xf]
  %v1198 = vld [vmem:[%s1 + $0xf50] sm:$0xf]
  %v1199 = vld [vmem:[%s1 + $0xf54] sm:$0xf]
  %v1200 = vld [vmem:[%s1 + $0xf58] sm:$0xf]
  %v1201 = vld [vmem:[%s1 + $0xf5c] sm:$0xf]
  %v1202 = vld [vmem:[%s1 + $0xf60] sm:$0xf]
  %v1203 = vld [vmem:[%s1 + $0xf64] sm:$0xf]
  %v1204 = vld [vmem:[%s1 + $0xf68] sm:$0xf]
  %v1205 = vld [vmem:[%s1 + $0xf6c] sm:$0xf]
  %v1206 = vld [vmem:[%s1 + $0xf70] sm:$0xf]
  %v1207 = vld [vmem:[%s1 + $0xf74] sm:$0xf]
  %v1208 = vld [vmem:[%s1 + $0xf78] sm:$0xf]
  %v1209 = vld [vmem:[%s1 + $0xf7c] sm:$0xf]
  %v1210 = vld [vmem:[%s1 + $0xf80] sm:$0xf]
  %v1211 = vld [vmem:[%s1 + $0xf84] sm:$0xf]
  %v1212 = vld [vmem:[%s1 + $0xf88] sm:$0xf]
  %v1213 = vld [vmem:[%s1 + $0xf8c] sm:$0xf]
  %v1214 = vld [vmem:[%s1 + $0xf90] sm:$0xf]
  %v1215 = vld [vmem:[%s1 + $0xf94] sm:$0xf]
  %v1216 = vld [vmem:[%s1 + $0xf98] sm:$0xf]
  %v1217 = vld [vmem:[%s1 + $0xf9c] sm:$0xf]
  %v1218 = vld [vmem:[%s1 + $0xfa0] sm:$0xf]
  %v1219 = vld [vmem:[%s1 + $0xfa4] sm:$0xf]
  %v1220 = vld [vmem:[%s1 + $0xfa8] sm:$0xf]
  %v1221 = vld [vmem:[%s1 + $0xfac] sm:$0xf]
  %v1222 = vld [vmem:[%s1 + $0xfb0] sm:$0xf]
  %v1223 = vld [vmem:[%s1 + $0xfb4] sm:$0xf]
  %v1224 = vld [vmem:[%s1 + $0xfb8] sm:$0xf]
  %v1225 = vld [vmem:[%s1 + $0xfbc] sm:$0xf]
  %v1226 = vld [vmem:[%s1 + $0xfc0] sm:$0xf]
  %v1227 = vld [vmem:[%s1 + $0xfc4] sm:$0xf]
  %v1228 = vld [vmem:[%s1 + $0xfc8] sm:$0xf]
  %v1229 = vld [vmem:[%s1 + $0xfcc] sm:$0xf]
  %v1230 = vld [vmem:[%s1 + $0xfd0] sm:$0xf]
  %v1231 = vld [vmem:[%s1 + $0xfd4] sm:$0xf]
  %v1232 = vld [vmem:[%s1 + $0xfd8] sm:$0xf]
  %v1233 = vld [vmem:[%s1 + $0xfdc] sm:$0xf]
  %v1234 = vld [vmem:[%s1 + $0xfe0] sm:$0xf]
  %v1235 = vld [vmem:[%s1 + $0xfe4] sm:$0xf]
  %v1236 = vld [vmem:[%s1 + $0xfe8] sm:$0xf]
  %v1237 = vld [vmem:[%s1 + $0xfec] sm:$0xf]
  %v1238 = vld [vmem:[%s1 + $0xff0] sm:$0xf]
  %v1239 = vld [vmem:[%s1 + $0xff4] sm:$0xf]
  %v1240 = vld [vmem:[%s1 + $0xff8] sm:$0xf]
  %v1241 = vld [vmem:[%s1 + $0xffc] sm:$0xf]
  %v1242 = vld [vmem:[%s1 + $0x1000] sm:$0xf]
  %v1243 = vld [vmem:[%s1 + $0x1004] sm:$0xf]
  %v1244 = vld [vmem:[%s1 + $0x1008] sm:$0xf]
  %v1245 = vld [vmem:[%s1 + $0x100c] sm:$0xf]
  %v1246 = vld [vmem:[%s1 + $0x1010] sm:$0xf]
  %v1247 = vld [vmem:[%s1 + $0x1014] sm:$0xf]
  %v1248 = vld [vmem:[%s1 + $0x1018] sm:$0xf]
  %v1249 = vld [vmem:[%s1 + $0x101c] sm:$0xf]
  %v1250 = vld [vmem:[%s1 + $0x1020] sm:$0xf]
  %v1251 = vld [vmem:[%s1 + $0x1024] sm:$0xf]
  %v1252 = vld [vmem:[%s1 + $0x1028] sm:$0xf]
  %v1253 = vld [vmem:[%s1 + $0x102c] sm:$0xf]
  %v1254 = vld [vmem:[%s1 + $0x1030] sm:$0xf]
  %v1255 = vld [vmem:[%s1 + $0x1034] sm:$0xf]
  %v1256 = vld [vmem:[%s1 + $0x1038] sm:$0xf]
  %v1257 = vld [vmem:[%s1 + $0x103c] sm:$0xf]
  %v1258 = vld [vmem:[%s1 + $0x1040] sm:$0xf]
  %v1259 = vld [vmem:[%s1 + $0x1044] sm:$0xf]
  %v1260 = vld [vmem:[%s1 + $0x1048] sm:$0xf]
  %v1261 = vld [vmem:[%s1 + $0x104c] sm:$0xf]
  %v1262 = vld [vmem:[%s1 + $0x1050] sm:$0xf]
  %v1263 = vld [vmem:[%s1 + $0x1054] sm:$0xf]
  %v1264 = vld [vmem:[%s1 + $0x1058] sm:$0xf]
  %v1265 = vld [vmem:[%s1 + $0x105c] sm:$0xf]
  %v1266 = vld [vmem:[%s1 + $0x1060] sm:$0xf]
  %v1267 = vld [vmem:[%s1 + $0x1064] sm:$0xf]
  %v1268 = vld [vmem:[%s1 + $0x1068] sm:$0xf]
  %v1269 = vld [vmem:[%s1 + $0x106c] sm:$0xf]
  %v1270 = vld [vmem:[%s1 + $0x1070] sm:$0xf]
  %v1271 = vld [vmem:[%s1 + $0x1074] sm:$0xf]
  %v1272 = vld [vmem:[%s1 + $0x1078] sm:$0xf]
  %v1273 = vld [vmem:[%s1 + $0x107c] sm:$0xf]
  %v1274 = vld [vmem:[%s1 + $0x1080] sm:$0xf]
  %v1275 = vld [vmem:[%s1 + $0x1084] sm:$0xf]
  %v1276 = vld [vmem:[%s1 + $0x1088] sm:$0xf]
  %v1277 = vld [vmem:[%s1 + $0x108c] sm:$0xf]
  %v1278 = vld [vmem:[%s1 + $0x1090] sm:$0xf]
  %v1279 = vld [vmem:[%s1 + $0x1094] sm:$0xf]
  %v1280 = vld [vmem:[%s1 + $0x1098] sm:$0xf]
  %v1281 = vld [vmem:[%s1 + $0x109c] sm:$0xf]
  %v1282 = vld [vmem:[%s1 + $0x10a0] sm:$0xf]
  %v1283 = vld [vmem:[%s1 + $0x10a4] sm:$0xf]
  %v1284 = vld [vmem:[%s1 + $0x10a8] sm:$0xf]
  %v1285 = vld [vmem:[%s1 + $0x10ac] sm:$0xf]
  %v1286 = vld [vmem:[%s1 + $0x10b0] sm:$0xf]
  %v1287 = vld [vmem:[%s1 + $0x10b4] sm:$0xf]
  %v1288 = vld [vmem:[%s1 + $0x10b8] sm:$0xf]
  %v1289 = vld [vmem:[%s1 + $0x10bc] sm:$0xf]
  %v1290 = vld [vmem:[%s1 + $0x10c0] sm:$0xf]
  %v1291 = vld [vmem:[%s1 + $0x10c4] sm:$0xf]
  %v1292 = vld [vmem:[%s1 + $0x10c8] sm:$0xf]
  %v1293 = vld [vmem:[%s1 + $0x10cc] sm:$0xf]
  %v1294 = vld [vmem:[%s1 + $0x10d0] sm:$0xf]
  %v1295 = vld [vmem:[%s1 + $0x10d4] sm:$0xf]
  %v1296 = vld [vmem:[%s1 + $0x10d8] sm:$0xf]
  %v1297 = vld [vmem:[%s1 + $0x10dc] sm:$0xf]
  %v1298 = vld [vmem:[%s1 + $0x10e0] sm:$0xf]
  %v1299 = vld [vmem:[%s1 + $0x10e4] sm:$0xf]
  %v1300 = vld [vmem:[%s1 + $0x10e8] sm:$0xf]
  %v1301 = vld [vmem:[%s1 + $0x10ec] sm:$0xf]
  %v1302 = vld [vmem:[%s1 + $0x10f0] sm:$0xf]
  %v1303 = vld [vmem:[%s1 + $0x10f4] sm:$0xf]
  %v1304 = vld [vmem:[%s1 + $0x10f8] sm:$0xf]
  %v1305 = vld [vmem:[%s1 + $0x10fc] sm:$0xf]
  %v1306 = vld [vmem:[%s1 + $0x1100] sm:$0xf]
  %v1307 = vld [vmem:[%s1 + $0x1104] sm:$0xf]
  %v1308 = vld [vmem:[%s1 + $0x1108] sm:$0xf]
  %v1309 = vld [vmem:[%s1 + $0x110c] sm:$0xf]
  %v1310 = vld [vmem:[%s1 + $0x1110] sm:$0xf]
  %v1311 = vld [vmem:[%s1 + $0x1114] sm:$0xf]
  %v1312 = vld [vmem:[%s1 + $0x1118] sm:$0xf]
  %v1313 = vld [vmem:[%s1 + $0x111c] sm:$0xf]
  %v1314 = vld [vmem:[%s1 + $0x1120] sm:$0xf]
  %v1315 = vld [vmem:[%s1 + $0x1124] sm:$0xf]
  %v1316 = vld [vmem:[%s1 + $0x1128] sm:$0xf]
  %v1317 = vld [vmem:[%s1 + $0x112c] sm:$0xf]
  %v1318 = vld [vmem:[%s1 + $0x1130] sm:$0xf]
  %v1319 = vld [vmem:[%s1 + $0x1134] sm:$0xf]
  %v1320 = vld [vmem:[%s1 + $0x1138] sm:$0xf]
  %v1321 = vld [vmem:[%s1 + $0x113c] sm:$0xf]
  %v1322 = vld [vmem:[%s1 + $0x1140] sm:$0xf]
  %v1323 = vld [vmem:[%s1 + $0x1144] sm:$0xf]
  %v1324 = vld [vmem:[%s1 + $0x1148] sm:$0xf]
  %v1325 = vld [vmem:[%s1 + $0x114c] sm:$0xf]
  %v1326 = vld [vmem:[%s1 + $0x1150] sm:$0xf]
  %v1327 = vld [vmem:[%s1 + $0x1154] sm:$0xf]
  %v1328 = vld [vmem:[%s1 + $0x1158] sm:$0xf]
  %v1329 = vld [vmem:[%s1 + $0x115c] sm:$0xf]
  %v1330 = vld [vmem:[%s1 + $0x1160] sm:$0xf]
  %v1331 = vld [vmem:[%s1 + $0x1164] sm:$0xf]
  %v1332 = vld [vmem:[%s1 + $0x1168] sm:$0xf]
  %v1333 = vld [vmem:[%s1 + $0x116c] sm:$0xf]
  %v1334 = vld [vmem:[%s1 + $0x1170] sm:$0xf]
  %v1335 = vld [vmem:[%s1 + $0x1174] sm:$0xf]
  %v1336 = vld [vmem:[%s1 + $0x1178] sm:$0xf]
  %v1337 = vld [vmem:[%s1 + $0x117c] sm:$0xf]
  %v1338 = vld [vmem:[%s1 + $0x1180] sm:$0xf]
  %v1339 = vld [vmem:[%s1 + $0x1184] sm:$0xf]
  %v1340 = vld [vmem:[%s1 + $0x1188] sm:$0xf]
  %v1341 = vld [vmem:[%s1 + $0x118c] sm:$0xf]
  %v1342 = vld [vmem:[%s1 + $0x1190] sm:$0xf]
  %v1343 = vld [vmem:[%s1 + $0x1194] sm:$0xf]
  %v1344 = vld [vmem:[%s1 + $0x1198] sm:$0xf]
  %v1345 = vld [vmem:[%s1 + $0x119c] sm:$0xf]
  %v1346 = vld [vmem:[%s1 + $0x11a0] sm:$0xf]
  %v1347 = vld [vmem:[%s1 + $0x11a4] sm:$0xf]
  %v1348 = vld [vmem:[%s1 + $0x11a8] sm:$0xf]
  %v1349 = vld [vmem:[%s1 + $0x11ac] sm:$0xf]
  %v1350 = vld [vmem:[%s1 + $0x11b0] sm:$0xf]
  %v1351 = vld [vmem:[%s1 + $0x11b4] sm:$0xf]
  %v1352 = vld [vmem:[%s1 + $0x11b8] sm:$0xf]
  %v1353 = vld [vmem:[%s1 + $0x11bc] sm:$0xf]
  %v1354 = vld [vmem:[%s1 + $0x11c0] sm:$0xf]
  %v1355 = vld [vmem:[%s1 + $0x11c4] sm:$0xf]
  %v1356 = vld [vmem:[%s1 + $0x11c8] sm:$0xf]
  %v1357 = vld [vmem:[%s1 + $0x11cc] sm:$0xf]
  %v1358 = vld [vmem:[%s1 + $0x11d0] sm:$0xf]
  %v1359 = vld [vmem:[%s1 + $0x11d4] sm:$0xf]
  %v1360 = vld [vmem:[%s1 + $0x11d8] sm:$0xf]
  %v1361 = vld [vmem:[%s1 + $0x11dc] sm:$0xf]
  %v1362 = vld [vmem:[%s1 + $0x11e0] sm:$0xf]
  %v1363 = vld [vmem:[%s1 + $0x11e4] sm:$0xf]
  %v1364 = vld [vmem:[%s1 + $0x11e8] sm:$0xf]
  %v1365 = vld [vmem:[%s1 + $0x11ec] sm:$0xf]
  %v1366 = vld [vmem:[%s1 + $0x11f0] sm:$0xf]
  %v1367 = vld [vmem:[%s1 + $0x11f4] sm:$0xf]
  %v1368 = vld [vmem:[%s1 + $0x11f8] sm:$0xf]
  %v1369 = vld [vmem:[%s1 + $0x11fc] sm:$0xf]
  %v1370 = vld [vmem:[%s1 + $0x1200] sm:$0xf]
  %v1371 = vld [vmem:[%s1 + $0x1204] sm:$0xf]
  %v1372 = vld [vmem:[%s1 + $0x1208] sm:$0xf]
  %v1373 = vld [vmem:[%s1 + $0x120c] sm:$0xf]
  %v1374 = vld [vmem:[%s1 + $0x1210] sm:$0xf]
  %v1375 = vld [vmem:[%s1 + $0x1214] sm:$0xf]
  %v1376 = vld [vmem:[%s1 + $0x1218] sm:$0xf]
  %v1377 = vld [vmem:[%s1 + $0x121c] sm:$0xf]
  %v1378 = vld [vmem:[%s1 + $0x1220] sm:$0xf]
  %v1379 = vld [vmem:[%s1 + $0x1224] sm:$0xf]
  %v1380 = vld [vmem:[%s1 + $0x1228] sm:$0xf]
  %v1381 = vld [vmem:[%s1 + $0x122c] sm:$0xf]
  %v1382 = vld [vmem:[%s1 + $0x1230] sm:$0xf]
  %v1383 = vld [vmem:[%s1 + $0x1234] sm:$0xf]
  %v1384 = vld [vmem:[%s1 + $0x1238] sm:$0xf]
  %v1385 = vld [vmem:[%s1 + $0x123c] sm:$0xf]
  %v1386 = vld [vmem:[%s1 + $0x1240] sm:$0xf]
  %v1387 = vld [vmem:[%s1 + $0x1244] sm:$0xf]
  %v1388 = vld [vmem:[%s1 + $0x1248] sm:$0xf]
  %v1389 = vld [vmem:[%s1 + $0x124c] sm:$0xf]
  %v1390 = vld [vmem:[%s1 + $0x1250] sm:$0xf]
  %v1391 = vld [vmem:[%s1 + $0x1254] sm:$0xf]
  %v1392 = vld [vmem:[%s1 + $0x1258] sm:$0xf]
  %v1393 = vld [vmem:[%s1 + $0x125c] sm:$0xf]
  %v1394 = vld [vmem:[%s1 + $0x1260] sm:$0xf]
  %v1395 = vld [vmem:[%s1 + $0x1264] sm:$0xf]
  %v1396 = vld [vmem:[%s1 + $0x1268] sm:$0xf]
  %v1397 = vld [vmem:[%s1 + $0x126c] sm:$0xf]
  %v1398 = vld [vmem:[%s1 + $0x1270] sm:$0xf]
  %v1399 = vld [vmem:[%s1 + $0x1274] sm:$0xf]
  %v1400 = vld [vmem:[%s1 + $0x1278] sm:$0xf]
  %v1401 = vld [vmem:[%s1 + $0x127c] sm:$0xf]
  %v1402 = vld [vmem:[%s1 + $0x1280] sm:$0xf]
  %v1403 = vld [vmem:[%s1 + $0x1284] sm:$0xf]
  %v1404 = vld [vmem:[%s1 + $0x1288] sm:$0xf]
  %v1405 = vld [vmem:[%s1 + $0x128c] sm:$0xf]
  %v1406 = vld [vmem:[%s1 + $0x1290] sm:$0xf]
  %v1407 = vld [vmem:[%s1 + $0x1294] sm:$0xf]
  %v1408 = vld [vmem:[%s1 + $0x1298] sm:$0xf]
  %v1409 = vld [vmem:[%s1 + $0x129c] sm:$0xf]
  %v1410 = vld [vmem:[%s1 + $0x12a0] sm:$0xf]
  %v1411 = vld [vmem:[%s1 + $0x12a4] sm:$0xf]
  %v1412 = vld [vmem:[%s1 + $0x12a8] sm:$0xf]
  %v1413 = vld [vmem:[%s1 + $0x12ac] sm:$0xf]
  %v1414 = vld [vmem:[%s1 + $0x12b0] sm:$0xf]
  %v1415 = vld [vmem:[%s1 + $0x12b4] sm:$0xf]
  %v1416 = vld [vmem:[%s1 + $0x12b8] sm:$0xf]
  %v1417 = vld [vmem:[%s1 + $0x12bc] sm:$0xf]
  %v1418 = vld [vmem:[%s1 + $0x12c0] sm:$0xf]
  %v1419 = vld [vmem:[%s1 + $0x12c4] sm:$0xf]
  %v1420 = vld [vmem:[%s1 + $0x12c8] sm:$0xf]
  %v1421 = vld [vmem:[%s1 + $0x12cc] sm:$0xf]
  %v1422 = vld [vmem:[%s1 + $0x12d0] sm:$0xf]
  %v1423 = vld [vmem:[%s1 + $0x12d4] sm:$0xf]
  %v1424 = vld [vmem:[%s1 + $0x12d8] sm:$0xf]
  %v1425 = vld [vmem:[%s1 + $0x12dc] sm:$0xf]
  %v1426 = vld [vmem:[%s1 + $0x12e0] sm:$0xf]
  %v1427 = vld [vmem:[%s1 + $0x12e4] sm:$0xf]
  %v1428 = vld [vmem:[%s1 + $0x12e8] sm:$0xf]
  %v1429 = vld [vmem:[%s1 + $0x12ec] sm:$0xf]
  %v1430 = vld [vmem:[%s1 + $0x12f0] sm:$0xf]
  %v1431 = vld [vmem:[%s1 + $0x12f4] sm:$0xf]
  %v1432 = vld [vmem:[%s1 + $0x12f8] sm:$0xf]
  %v1433 = vld [vmem:[%s1 + $0x12fc] sm:$0xf]
  %v1434 = vld [vmem:[%s1 + $0x1300] sm:$0xf]
  %v1435 = vld [vmem:[%s1 + $0x1304] sm:$0xf]
  %v1436 = vld [vmem:[%s1 + $0x1308] sm:$0xf]
  %v1437 = vld [vmem:[%s1 + $0x130c] sm:$0xf]
  %v1438 = vld [vmem:[%s1 + $0x1310] sm:$0xf]
  %v1439 = vld [vmem:[%s1 + $0x1314] sm:$0xf]
  %v1440 = vld [vmem:[%s1 + $0x1318] sm:$0xf]
  %v1441 = vld [vmem:[%s1 + $0x131c] sm:$0xf]
  %v1442 = vld [vmem:[%s1 + $0x1320] sm:$0xf]
  %v1443 = vld [vmem:[%s1 + $0x1324] sm:$0xf]
  %v1444 = vld [vmem:[%s1 + $0x1328] sm:$0xf]
  %v1445 = vld [vmem:[%s1 + $0x132c] sm:$0xf]
  %v1446 = vld [vmem:[%s1 + $0x1330] sm:$0xf]
  %v1447 = vld [vmem:[%s1 + $0x1334] sm:$0xf]
  %v1448 = vld [vmem:[%s1 + $0x1338] sm:$0xf]
  %v1449 = vld [vmem:[%s1 + $0x133c] sm:$0xf]
  %v1450 = vld [vmem:[%s1 + $0x1340] sm:$0xf]
  %v1451 = vld [vmem:[%s1 + $0x1344] sm:$0xf]
  %v1452 = vld [vmem:[%s1 + $0x1348] sm:$0xf]
  %v1453 = vld [vmem:[%s1 + $0x134c] sm:$0xf]
  %v1454 = vld [vmem:[%s1 + $0x1350] sm:$0xf]
  %v1455 = vld [vmem:[%s1 + $0x1354] sm:$0xf]
  %v1456 = vld [vmem:[%s1 + $0x1358] sm:$0xf]
  %v1457 = vld [vmem:[%s1 + $0x135c] sm:$0xf]
  %v1458 = vld [vmem:[%s1 + $0x1360] sm:$0xf]
  %v1459 = vld [vmem:[%s1 + $0x1364] sm:$0xf]
  %v1460 = vld [vmem:[%s1 + $0x1368] sm:$0xf]
  %v1461 = vld [vmem:[%s1 + $0x136c] sm:$0xf]
  %v1462 = vld [vmem:[%s1 + $0x1370] sm:$0xf]
  %v1463 = vld [vmem:[%s1 + $0x1374] sm:$0xf]
  %v1464 = vld [vmem:[%s1 + $0x1378] sm:$0xf]
  %v1465 = vld [vmem:[%s1 + $0x137c] sm:$0xf]
  %v1466 = vld [vmem:[%s1 + $0x1380] sm:$0xf]
  %v1467 = vld [vmem:[%s1 + $0x1384] sm:$0xf]
  %v1468 = vld [vmem:[%s1 + $0x1388] sm:$0xf]
  %v1469 = vld [vmem:[%s1 + $0x138c] sm:$0xf]
  %v1470 = vld [vmem:[%s1 + $0x1390] sm:$0xf]
  %v1471 = vld [vmem:[%s1 + $0x1394] sm:$0xf]
  %v1472 = vld [vmem:[%s1 + $0x1398] sm:$0xf]
  %v1473 = vld [vmem:[%s1 + $0x139c] sm:$0xf]
  %v1474 = vld [vmem:[%s1 + $0x13a0] sm:$0xf]
  %v1475 = vld [vmem:[%s1 + $0x13a4] sm:$0xf]
  %v1476 = vld [vmem:[%s1 + $0x13a8] sm:$0xf]
  %v1477 = vld [vmem:[%s1 + $0x13ac] sm:$0xf]
  %v1478 = vld [vmem:[%s1 + $0x13b0] sm:$0xf]
  %v1479 = vld [vmem:[%s1 + $0x13b4] sm:$0xf]
  %v1480 = vld [vmem:[%s1 + $0x13b8] sm:$0xf]
  %v1481 = vld [vmem:[%s1 + $0x13bc] sm:$0xf]
  %v1482 = vld [vmem:[%s1 + $0x13c0] sm:$0xf]
  %v1483 = vld [vmem:[%s1 + $0x13c4] sm:$0xf]
  %v1484 = vld [vmem:[%s1 + $0x13c8] sm:$0xf]
  %v1485 = vld [vmem:[%s1 + $0x13cc] sm:$0xf]
  %v1486 = vld [vmem:[%s1 + $0x13d0] sm:$0xf]
  %v1487 = vld [vmem:[%s1 + $0x13d4] sm:$0xf]
  %v1488 = vld [vmem:[%s1 + $0x13d8] sm:$0xf]
  %v1489 = vld [vmem:[%s1 + $0x13dc] sm:$0xf]
  %v1490 = vld [vmem:[%s1 + $0x13e0] sm:$0xf]
  %v1491 = vld [vmem:[%s1 + $0x13e4] sm:$0xf]
  %v1492 = vld [vmem:[%s1 + $0x13e8] sm:$0xf]
  %v1493 = vld [vmem:[%s1 + $0x13ec] sm:$0xf]
  %v1494 = vld [vmem:[%s1 + $0x13f0] sm:$0xf]
  %v1495 = vld [vmem:[%s1 + $0x13f4] sm:$0xf]
  %v1496 = vld [vmem:[%s1 + $0x13f8] sm:$0xf]
  %v1497 = vld [vmem:[%s1 + $0x13fc] sm:$0xf]
  %v1498 = vld [vmem:[%s1 + $0x1400] sm:$0xf]
  %v1499 = vld [vmem:[%s1 + $0x1404] sm:$0xf]
  %v1500 = vld [vmem:[%s1 + $0x1408] sm:$0xf]
  %v1501 = vld [vmem:[%s1 + $0x140c] sm:$0xf]
  %v1502 = vld [vmem:[%s1 + $0x1410] sm:$0xf]
  %v1503 = vld [vmem:[%s1 + $0x1414] sm:$0xf]
  %v1504 = vld [vmem:[%s1 + $0x1418] sm:$0xf]
  %v1505 = vld [vmem:[%s1 + $0x141c] sm:$0xf]
  %v1506 = vld [vmem:[%s1 + $0x1420] sm:$0xf]
  %v1507 = vld [vmem:[%s1 + $0x1424] sm:$0xf]
  %v1508 = vld [vmem:[%s1 + $0x1428] sm:$0xf]
  %v1509 = vld [vmem:[%s1 + $0x142c] sm:$0xf]
  %v1510 = vld [vmem:[%s1 + $0x1430] sm:$0xf]
  %v1511 = vld [vmem:[%s1 + $0x1434] sm:$0xf]
  %v1512 = vld [vmem:[%s1 + $0x1438] sm:$0xf]
  %v1513 = vld [vmem:[%s1 + $0x143c] sm:$0xf]
  %v1514 = vld [vmem:[%s1 + $0x1440] sm:$0xf]
  %v1515 = vld [vmem:[%s1 + $0x1444] sm:$0xf]
  %v1516 = vld [vmem:[%s1 + $0x1448] sm:$0xf]
  %v1517 = vld [vmem:[%s1 + $0x144c] sm:$0xf]
  %v1518 = vld [vmem:[%s1 + $0x1450] sm:$0xf]
  %v1519 = vld [vmem:[%s1 + $0x1454] sm:$0xf]
  %v1520 = vld [vmem:[%s1 + $0x1458] sm:$0xf]
  %v1521 = vld [vmem:[%s1 + $0x145c] sm:$0xf]
  %v1522 = vld [vmem:[%s1 + $0x1460] sm:$0xf]
  %v1523 = vld [vmem:[%s1 + $0x1464] sm:$0xf]
  %v1524 = vld [vmem:[%s1 + $0x1468] sm:$0xf]
  %v1525 = vld [vmem:[%s1 + $0x146c] sm:$0xf]
  %v1526 = vld [vmem:[%s1 + $0x1470] sm:$0xf]
  %v1527 = vld [vmem:[%s1 + $0x1474] sm:$0xf]
  %v1528 = vld [vmem:[%s1 + $0x1478] sm:$0xf]
  %v1529 = vld [vmem:[%s1 + $0x147c] sm:$0xf]
  %v1530 = vld [vmem:[%s1 + $0x1480] sm:$0xf]
  %v1531 = vld [vmem:[%s1 + $0x1484] sm:$0xf]
  %v1532 = vld [vmem:[%s1 + $0x1488] sm:$0xf]
  %v1533 = vld [vmem:[%s1 + $0x148c] sm:$0xf]
  %v1534 = vld [vmem:[%s1 + $0x1490] sm:$0xf]
  %v1535 = vld [vmem:[%s1 + $0x1494] sm:$0xf]
  %v1536 = vld [vmem:[%s1 + $0x1498] sm:$0xf]
  %v1537 = vld [vmem:[%s1 + $0x149c] sm:$0xf]
  %v1538 = vld [vmem:[%s1 + $0x14a0] sm:$0xf]
  %v1539 = vld [vmem:[%s1 + $0x14a4] sm:$0xf]
  %v1540 = vld [vmem:[%s1 + $0x14a8] sm:$0xf]
  %v1541 = vld [vmem:[%s1 + $0x14ac] sm:$0xf]
  %v1542 = vld [vmem:[%s1 + $0x14b0] sm:$0xf]
  %v1543 = vld [vmem:[%s1 + $0x14b4] sm:$0xf]
  %v1544 = vld [vmem:[%s1 + $0x14b8] sm:$0xf]
  %v1545 = vld [vmem:[%s1 + $0x14bc] sm:$0xf]
  %v1546 = vld [vmem:[%s1 + $0x14c0] sm:$0xf]
  %v1547 = vld [vmem:[%s1 + $0x14c4] sm:$0xf]
  %v1548 = vld [vmem:[%s1 + $0x14c8] sm:$0xf]
  %v1549 = vld [vmem:[%s1 + $0x14cc] sm:$0xf]
  %v1550 = vld [vmem:[%s1 + $0x14d0] sm:$0xf]
  %v1551 = vld [vmem:[%s1 + $0x14d4] sm:$0xf]
  %v1552 = vld [vmem:[%s1 + $0x14d8] sm:$0xf]
  %v1553 = vld [vmem:[%s1 + $0x14dc] sm:$0xf]
  %v1554 = vld [vmem:[%s1 + $0x14e0] sm:$0xf]
  %v1555 = vld [vmem:[%s1 + $0x14e4] sm:$0xf]
  %v1556 = vld [vmem:[%s1 + $0x14e8] sm:$0xf]
  %v1557 = vld [vmem:[%s1 + $0x14ec] sm:$0xf]
  %v1558 = vld [vmem:[%s1 + $0x14f0] sm:$0xf]
  %v1559 = vld [vmem:[%s1 + $0x14f4] sm:$0xf]
  %v1560 = vld [vmem:[%s1 + $0x14f8] sm:$0xf]
  %v1561 = vld [vmem:[%s1 + $0x14fc] sm:$0xf]
  %v1562 = vld [vmem:[%s1 + $0x1500] sm:$0xf]
  %v1563 = vld [vmem:[%s1 + $0x1504] sm:$0xf]
  %v1564 = vld [vmem:[%s1 + $0x1508] sm:$0xf]
  %v1565 = vld [vmem:[%s1 + $0x150c] sm:$0xf]
  %v1566 = vld [vmem:[%s1 + $0x1510] sm:$0xf]
  %v1567 = vld [vmem:[%s1 + $0x1514] sm:$0xf]
  %v1568 = vld [vmem:[%s1 + $0x1518] sm:$0xf]
  %v1569 = vld [vmem:[%s1 + $0x151c] sm:$0xf]
  %v1570 = vld [vmem:[%s1 + $0x1520] sm:$0xf]
  %v1571 = vld [vmem:[%s1 + $0x1524] sm:$0xf]
  %v1572 = vld [vmem:[%s1 + $0x1528] sm:$0xf]
  %v1573 = vld [vmem:[%s1 + $0x152c] sm:$0xf]
  %v1574 = vld [vmem:[%s1 + $0x1530] sm:$0xf]
  %v1575 = vld [vmem:[%s1 + $0x1534] sm:$0xf]
  %v1576 = vld [vmem:[%s1 + $0x1538] sm:$0xf]
  %v1577 = vld [vmem:[%s1 + $0x153c] sm:$0xf]
  %v1578 = vld [vmem:[%s1 + $0x1540] sm:$0xf]
  %v1579 = vld [vmem:[%s1 + $0x1544] sm:$0xf]
  %v1580 = vld [vmem:[%s1 + $0x1548] sm:$0xf]
  %v1581 = vld [vmem:[%s1 + $0x154c] sm:$0xf]
  %v1582 = vld [vmem:[%s1 + $0x1550] sm:$0xf]
  %v1583 = vld [vmem:[%s1 + $0x1554] sm:$0xf]
  %v1584 = vld [vmem:[%s1 + $0x1558] sm:$0xf]
  %v1585 = vld [vmem:[%s1 + $0x155c] sm:$0xf]
  %v1586 = vld [vmem:[%s1 + $0x1560] sm:$0xf]
  %v1587 = vld [vmem:[%s1 + $0x1564] sm:$0xf]
  %v1588 = vld [vmem:[%s1 + $0x1568] sm:$0xf]
  %v1589 = vld [vmem:[%s1 + $0x156c] sm:$0xf]
  %v1590 = vld [vmem:[%s1 + $0x1570] sm:$0xf]
  %v1591 = vld [vmem:[%s1 + $0x1574] sm:$0xf]
  %v1592 = vld [vmem:[%s1 + $0x1578] sm:$0xf]
  %v1593 = vld [vmem:[%s1 + $0x157c] sm:$0xf]
  %v1594 = vld [vmem:[%s1 + $0x1580] sm:$0xf]
  %v1595 = vld [vmem:[%s1 + $0x1584] sm:$0xf]
  %v1596 = vld [vmem:[%s1 + $0x1588] sm:$0xf]
  %v1597 = vld [vmem:[%s1 + $0x158c] sm:$0xf]
  %v1598 = vld [vmem:[%s1 + $0x1590] sm:$0xf]
  %v1599 = vld [vmem:[%s1 + $0x1594] sm:$0xf]
  %v1600 = vld [vmem:[%s1 + $0x1598] sm:$0xf]
  %v1601 = vld [vmem:[%s1 + $0x159c] sm:$0xf]
  %v1602 = vld [vmem:[%s1 + $0x15a0] sm:$0xf]
  %v1603 = vld [vmem:[%s1 + $0x15a4] sm:$0xf]
  %v1604 = vld [vmem:[%s1 + $0x15a8] sm:$0xf]
  %v1605 = vld [vmem:[%s1 + $0x15ac] sm:$0xf]
  %v1606 = vld [vmem:[%s1 + $0x15b0] sm:$0xf]
  %v1607 = vld [vmem:[%s1 + $0x15b4] sm:$0xf]
  %v1608 = vld [vmem:[%s1 + $0x15b8] sm:$0xf]
  %v1609 = vld [vmem:[%s1 + $0x15bc] sm:$0xf]
  %v1610 = vld [vmem:[%s1 + $0x15c0] sm:$0xf]
  %v1611 = vld [vmem:[%s1 + $0x15c4] sm:$0xf]
  %v1612 = vld [vmem:[%s1 + $0x15c8] sm:$0xf]
  %v1613 = vld [vmem:[%s1 + $0x15cc] sm:$0xf]
  %v1614 = vld [vmem:[%s1 + $0x15d0] sm:$0xf]
  %v1615 = vld [vmem:[%s1 + $0x15d4] sm:$0xf]
  %v1616 = vld [vmem:[%s1 + $0x15d8] sm:$0xf]
  %v1617 = vld [vmem:[%s1 + $0x15dc] sm:$0xf]
  %v1618 = vld [vmem:[%s1 + $0x15e0] sm:$0xf]
  %v1619 = vld [vmem:[%s1 + $0x15e4] sm:$0xf]
  %v1620 = vld [vmem:[%s1 + $0x15e8] sm:$0xf]
  %v1621 = vld [vmem:[%s1 + $0x15ec] sm:$0xf]
  %v1622 = vld [vmem:[%s1 + $0x15f0] sm:$0xf]
  %v1623 = vld [vmem:[%s1 + $0x15f4] sm:$0xf]
  %v1624 = vld [vmem:[%s1 + $0x15f8] sm:$0xf]
  %v1625 = vld [vmem:[%s1 + $0x15fc] sm:$0xf]
  %v1626 = vld [vmem:[%s1 + $0x1600] sm:$0xf]
  %v1627 = vld [vmem:[%s1 + $0x1604] sm:$0xf]
  %v1628 = vld [vmem:[%s1 + $0x1608] sm:$0xf]
  %v1629 = vld [vmem:[%s1 + $0x160c] sm:$0xf]
  %v1630 = vld [vmem:[%s1 + $0x1610] sm:$0xf]
  %v1631 = vld [vmem:[%s1 + $0x1614] sm:$0xf]
  %v1632 = vld [vmem:[%s1 + $0x1618] sm:$0xf]
  %v1633 = vld [vmem:[%s1 + $0x161c] sm:$0xf]
  %v1634 = vld [vmem:[%s1 + $0x1620] sm:$0xf]
  %v1635 = vld [vmem:[%s1 + $0x1624] sm:$0xf]
  %v1636 = vld [vmem:[%s1 + $0x1628] sm:$0xf]
  %v1637 = vld [vmem:[%s1 + $0x162c] sm:$0xf]
  %v1638 = vld [vmem:[%s1 + $0x1630] sm:$0xf]
  %v1639 = vld [vmem:[%s1 + $0x1634] sm:$0xf]
  %v1640 = vld [vmem:[%s1 + $0x1638] sm:$0xf]
  %v1641 = vld [vmem:[%s1 + $0x163c] sm:$0xf]
  %v1642 = vld [vmem:[%s1 + $0x1640] sm:$0xf]
  %v1643 = vld [vmem:[%s1 + $0x1644] sm:$0xf]
  %v1644 = vld [vmem:[%s1 + $0x1648] sm:$0xf]
  %v1645 = vld [vmem:[%s1 + $0x164c] sm:$0xf]
  %v1646 = vld [vmem:[%s1 + $0x1650] sm:$0xf]
  %v1647 = vld [vmem:[%s1 + $0x1654] sm:$0xf]
  %v1648 = vld [vmem:[%s1 + $0x1658] sm:$0xf]
  %v1649 = vld [vmem:[%s1 + $0x165c] sm:$0xf]
  %v1650 = vld [vmem:[%s1 + $0x1660] sm:$0xf]
  %v1651 = vld [vmem:[%s1 + $0x1664] sm:$0xf]
  %v1652 = vld [vmem:[%s1 + $0x1668] sm:$0xf]
  %v1653 = vld [vmem:[%s1 + $0x166c] sm:$0xf]
  %v1654 = vld [vmem:[%s1 + $0x1670] sm:$0xf]
  %v1655 = vld [vmem:[%s1 + $0x1674] sm:$0xf]
  %v1656 = vld [vmem:[%s1 + $0x1678] sm:$0xf]
  %v1657 = vld [vmem:[%s1 + $0x167c] sm:$0xf]
  %v1658 = vld [vmem:[%s1 + $0x1680] sm:$0xf]
  %v1659 = vld [vmem:[%s1 + $0x1684] sm:$0xf]
  %v1660 = vld [vmem:[%s1 + $0x1688] sm:$0xf]
  %v1661 = vld [vmem:[%s1 + $0x168c] sm:$0xf]
  %v1662 = vld [vmem:[%s1 + $0x1690] sm:$0xf]
  %v1663 = vld [vmem:[%s1 + $0x1694] sm:$0xf]
  %v1664 = vld [vmem:[%s1 + $0x1698] sm:$0xf]
  %v1665 = vld [vmem:[%s1 + $0x169c] sm:$0xf]
  %v1666 = vld [vmem:[%s1 + $0x16a0] sm:$0xf]
  %v1667 = vld [vmem:[%s1 + $0x16a4] sm:$0xf]
  %v1668 = vld [vmem:[%s1 + $0x16a8] sm:$0xf]
  %v1669 = vld [vmem:[%s1 + $0x16ac] sm:$0xf]
  %v1670 = vld [vmem:[%s1 + $0x16b0] sm:$0xf]
  %v1671 = vld [vmem:[%s1 + $0x16b4] sm:$0xf]
  %v1672 = vld [vmem:[%s1 + $0x16b8] sm:$0xf]
  %v1673 = vld [vmem:[%s1 + $0x16bc] sm:$0xf]
  %v1674 = vld [vmem:[%s1 + $0x16c0] sm:$0xf]
  %v1675 = vld [vmem:[%s1 + $0x16c4] sm:$0xf]
  %v1676 = vld [vmem:[%s1 + $0x16c8] sm:$0xf]
  %v1677 = vld [vmem:[%s1 + $0x16cc] sm:$0xf]
  %v1678 = vld [vmem:[%s1 + $0x16d0] sm:$0xf]
  %v1679 = vld [vmem:[%s1 + $0x16d4] sm:$0xf]
  %v1680 = vld [vmem:[%s1 + $0x16d8] sm:$0xf]
  %v1681 = vld [vmem:[%s1 + $0x16dc] sm:$0xf]
  %v1682 = vld [vmem:[%s1 + $0x16e0] sm:$0xf]
  %v1683 = vld [vmem:[%s1 + $0x16e4] sm:$0xf]
  %v1684 = vld [vmem:[%s1 + $0x16e8] sm:$0xf]
  %v1685 = vld [vmem:[%s1 + $0x16ec] sm:$0xf]
  %v1686 = vld [vmem:[%s1 + $0x16f0] sm:$0xf]
  %v1687 = vld [vmem:[%s1 + $0x16f4] sm:$0xf]
  %v1688 = vld [vmem:[%s1 + $0x16f8] sm:$0xf]
  %v1689 = vld [vmem:[%s1 + $0x16fc] sm:$0xf]
  %v1690 = vld [vmem:[%s1 + $0x1700] sm:$0xf]
  %v1691 = vld [vmem:[%s1 + $0x1704] sm:$0xf]
  %v1692 = vld [vmem:[%s1 + $0x1708] sm:$0xf]
  %v1693 = vld [vmem:[%s1 + $0x170c] sm:$0xf]
  %v1694 = vld [vmem:[%s1 + $0x1710] sm:$0xf]
  %v1695 = vld [vmem:[%s1 + $0x1714] sm:$0xf]
  %v1696 = vld [vmem:[%s1 + $0x1718] sm:$0xf]
  %v1697 = vld [vmem:[%s1 + $0x171c] sm:$0xf]
  %v1698 = vld [vmem:[%s1 + $0x1720] sm:$0xf]
  %v1699 = vld [vmem:[%s1 + $0x1724] sm:$0xf]
  %v1700 = vld [vmem:[%s1 + $0x1728] sm:$0xf]
  %v1701 = vld [vmem:[%s1 + $0x172c] sm:$0xf]
  %v1702 = vld [vmem:[%s1 + $0x1730] sm:$0xf]
  %v1703 = vld [vmem:[%s1 + $0x1734] sm:$0xf]
  %v1704 = vld [vmem:[%s1 + $0x1738] sm:$0xf]
  %v1705 = vld [vmem:[%s1 + $0x173c] sm:$0xf]
  %v1706 = vld [vmem:[%s1 + $0x1740] sm:$0xf]
  %v1707 = vld [vmem:[%s1 + $0x1744] sm:$0xf]
  %v1708 = vld [vmem:[%s1 + $0x1748] sm:$0xf]
  %v1709 = vld [vmem:[%s1 + $0x174c] sm:$0xf]
  %v1710 = vld [vmem:[%s1 + $0x1750] sm:$0xf]
  %v1711 = vld [vmem:[%s1 + $0x1754] sm:$0xf]
  %v1712 = vld [vmem:[%s1 + $0x1758] sm:$0xf]
  %v1713 = vld [vmem:[%s1 + $0x175c] sm:$0xf]
  %v1714 = vld [vmem:[%s1 + $0x1760] sm:$0xf]
  %v1715 = vld [vmem:[%s1 + $0x1764] sm:$0xf]
  %v1716 = vld [vmem:[%s1 + $0x1768] sm:$0xf]
  %v1717 = vld [vmem:[%s1 + $0x176c] sm:$0xf]
  %v1718 = vld [vmem:[%s1 + $0x1770] sm:$0xf]
  %v1719 = vld [vmem:[%s1 + $0x1774] sm:$0xf]
  %v1720 = vld [vmem:[%s1 + $0x1778] sm:$0xf]
  %v1721 = vld [vmem:[%s1 + $0x177c] sm:$0xf]
  %v1722 = vld [vmem:[%s1 + $0x1780] sm:$0xf]
  %v1723 = vld [vmem:[%s1 + $0x1784] sm:$0xf]
  %v1724 = vld [vmem:[%s1 + $0x1788] sm:$0xf]
  %v1725 = vld [vmem:[%s1 + $0x178c] sm:$0xf]
  %v1726 = vld [vmem:[%s1 + $0x1790] sm:$0xf]
  %v1727 = vld [vmem:[%s1 + $0x1794] sm:$0xf]
  %v1728 = vld [vmem:[%s1 + $0x1798] sm:$0xf]
  %v1729 = vld [vmem:[%s1 + $0x179c] sm:$0xf]
  %v1730 = vld [vmem:[%s1 + $0x17a0] sm:$0xf]
  %v1731 = vld [vmem:[%s1 + $0x17a4] sm:$0xf]
  %v1732 = vld [vmem:[%s1 + $0x17a8] sm:$0xf]
  %v1733 = vld [vmem:[%s1 + $0x17ac] sm:$0xf]
  %v1734 = vld [vmem:[%s1 + $0x17b0] sm:$0xf]
  %v1735 = vld [vmem:[%s1 + $0x17b4] sm:$0xf]
  %v1736 = vld [vmem:[%s1 + $0x17b8] sm:$0xf]
  %v1737 = vld [vmem:[%s1 + $0x17bc] sm:$0xf]
  %v1738 = vld [vmem:[%s1 + $0x17c0] sm:$0xf]
  %v1739 = vld [vmem:[%s1 + $0x17c4] sm:$0xf]
  %v1740 = vld [vmem:[%s1 + $0x17c8] sm:$0xf]
  %v1741 = vld [vmem:[%s1 + $0x17cc] sm:$0xf]
  %v1742 = vld [vmem:[%s1 + $0x17d0] sm:$0xf]
  %v1743 = vld [vmem:[%s1 + $0x17d4] sm:$0xf]
  %v1744 = vld [vmem:[%s1 + $0x17d8] sm:$0xf]
  %v1745 = vld [vmem:[%s1 + $0x17dc] sm:$0xf]
  %v1746 = vld [vmem:[%s1 + $0x17e0] sm:$0xf]
  %v1747 = vld [vmem:[%s1 + $0x17e4] sm:$0xf]
  %v1748 = vld [vmem:[%s1 + $0x17e8] sm:$0xf]
  %v1749 = vld [vmem:[%s1 + $0x17ec] sm:$0xf]
  %v1750 = vld [vmem:[%s1 + $0x17f0] sm:$0xf]
  %v1751 = vld [vmem:[%s1 + $0x17f4] sm:$0xf]
  %v1752 = vld [vmem:[%s1 + $0x17f8] sm:$0xf]
  %v1753 = vld [vmem:[%s1 + $0x17fc] sm:$0xf]
  %v1754 = vld [vmem:[%s2] sm:$0x1]
  %v1756 = vperm.slane %v1754, 0
  %v3294 = vunpack.c.l.b16 %v218
  %v3295 = vunpack.c.l.b16 %v219
  %v3296 = vunpack.c.l.b16 %v220
  %v3297 = vunpack.c.l.b16 %v221
  %v3298 = vunpack.c.l.b16 %v222
  %v3299 = vunpack.c.l.b16 %v223
  %v3300 = vunpack.c.l.b16 %v224
  %v3301 = vunpack.c.l.b16 %v225
  %v3302 = vunpack.c.l.b16 %v226
  %v3303 = vunpack.c.l.b16 %v227
  %v3304 = vunpack.c.l.b16 %v228
  %v3305 = vunpack.c.l.b16 %v229
  %v3306 = vunpack.c.l.b16 %v230
  %v3307 = vunpack.c.l.b16 %v231
  %v3308 = vunpack.c.l.b16 %v232
  %v3309 = vunpack.c.l.b16 %v233
  %v3310 = vunpack.c.l.b16 %v234
  %v3311 = vunpack.c.l.b16 %v235
  %v3312 = vunpack.c.l.b16 %v236
  %v3313 = vunpack.c.l.b16 %v237
  %v3314 = vunpack.c.l.b16 %v238
  %v3315 = vunpack.c.l.b16 %v239
  %v3316 = vunpack.c.l.b16 %v240
  %v3317 = vunpack.c.l.b16 %v241
  %v3318 = vunpack.c.l.b16 %v242
  %v3319 = vunpack.c.l.b16 %v243
  %v3320 = vunpack.c.l.b16 %v244
  %v3321 = vunpack.c.l.b16 %v245
  %v3322 = vunpack.c.l.b16 %v246
  %v3323 = vunpack.c.l.b16 %v247
  %v3324 = vunpack.c.l.b16 %v248
  %v3325 = vunpack.c.l.b16 %v249
  %v3326 = vunpack.c.l.b16 %v250
  %v3327 = vunpack.c.l.b16 %v251
  %v3328 = vunpack.c.l.b16 %v252
  %v3329 = vunpack.c.l.b16 %v253
  %v3330 = vunpack.c.l.b16 %v254
  %v3331 = vunpack.c.l.b16 %v255
  %v3332 = vunpack.c.l.b16 %v256
  %v3333 = vunpack.c.l.b16 %v257
  %v3334 = vunpack.c.l.b16 %v258
  %v3335 = vunpack.c.l.b16 %v259
  %v3336 = vunpack.c.l.b16 %v260
  %v3337 = vunpack.c.l.b16 %v261
  %v3338 = vunpack.c.l.b16 %v262
  %v3339 = vunpack.c.l.b16 %v263
  %v3340 = vunpack.c.l.b16 %v264
  %v3341 = vunpack.c.l.b16 %v265
  %v3342 = vunpack.c.l.b16 %v266
  %v3343 = vunpack.c.l.b16 %v267
  %v3344 = vunpack.c.l.b16 %v268
  %v3345 = vunpack.c.l.b16 %v269
  %v3346 = vunpack.c.l.b16 %v270
  %v3347 = vunpack.c.l.b16 %v271
  %v3348 = vunpack.c.l.b16 %v272
  %v3349 = vunpack.c.l.b16 %v273
  %v3350 = vunpack.c.l.b16 %v274
  %v3351 = vunpack.c.l.b16 %v275
  %v3352 = vunpack.c.l.b16 %v276
  %v3353 = vunpack.c.l.b16 %v277
  %v3354 = vunpack.c.l.b16 %v278
  %v3355 = vunpack.c.l.b16 %v279
  %v3356 = vunpack.c.l.b16 %v280
  %v3357 = vunpack.c.l.b16 %v281
  %v3358 = vunpack.c.l.b16 %v282
  %v3359 = vunpack.c.l.b16 %v283
  %v3360 = vunpack.c.l.b16 %v284
  %v3361 = vunpack.c.l.b16 %v285
  %v3362 = vunpack.c.l.b16 %v286
  %v3363 = vunpack.c.l.b16 %v287
  %v3364 = vunpack.c.l.b16 %v288
  %v3365 = vunpack.c.l.b16 %v289
  %v3366 = vunpack.c.l.b16 %v290
  %v3367 = vunpack.c.l.b16 %v291
  %v3368 = vunpack.c.l.b16 %v292
  %v3369 = vunpack.c.l.b16 %v293
  %v3370 = vunpack.c.l.b16 %v294
  %v3371 = vunpack.c.l.b16 %v295
  %v3372 = vunpack.c.l.b16 %v296
  %v3373 = vunpack.c.l.b16 %v297
  %v3374 = vunpack.c.l.b16 %v298
  %v3375 = vunpack.c.l.b16 %v299
  %v3376 = vunpack.c.l.b16 %v300
  %v3377 = vunpack.c.l.b16 %v301
  %v3378 = vunpack.c.l.b16 %v302
  %v3379 = vunpack.c.l.b16 %v303
  %v3380 = vunpack.c.l.b16 %v304
  %v3381 = vunpack.c.l.b16 %v305
  %v3382 = vunpack.c.l.b16 %v306
  %v3383 = vunpack.c.l.b16 %v307
  %v3384 = vunpack.c.l.b16 %v308
  %v3385 = vunpack.c.l.b16 %v309
  %v3386 = vunpack.c.l.b16 %v310
  %v3387 = vunpack.c.l.b16 %v311
  %v3388 = vunpack.c.l.b16 %v312
  %v3389 = vunpack.c.l.b16 %v313
  %v3390 = vunpack.c.l.b16 %v314
  %v3391 = vunpack.c.l.b16 %v315
  %v3392 = vunpack.c.l.b16 %v316
  %v3393 = vunpack.c.l.b16 %v317
  %v3394 = vunpack.c.l.b16 %v318
  %v3395 = vunpack.c.l.b16 %v319
  %v3396 = vunpack.c.l.b16 %v320
  %v3397 = vunpack.c.l.b16 %v321
  %v3398 = vunpack.c.l.b16 %v322
  %v3399 = vunpack.c.l.b16 %v323
  %v3400 = vunpack.c.l.b16 %v324
  %v3401 = vunpack.c.l.b16 %v325
  %v3402 = vunpack.c.l.b16 %v326
  %v3403 = vunpack.c.l.b16 %v327
  %v3404 = vunpack.c.l.b16 %v328
  %v3405 = vunpack.c.l.b16 %v329
  %v3406 = vunpack.c.l.b16 %v330
  %v3407 = vunpack.c.l.b16 %v331
  %v3408 = vunpack.c.l.b16 %v332
  %v3409 = vunpack.c.l.b16 %v333
  %v3410 = vunpack.c.l.b16 %v334
  %v3411 = vunpack.c.l.b16 %v335
  %v3412 = vunpack.c.l.b16 %v336
  %v3413 = vunpack.c.l.b16 %v337
  %v3414 = vunpack.c.l.b16 %v338
  %v3415 = vunpack.c.l.b16 %v339
  %v3416 = vunpack.c.l.b16 %v340
  %v3417 = vunpack.c.l.b16 %v341
  %v3418 = vunpack.c.l.b16 %v342
  %v3419 = vunpack.c.l.b16 %v343
  %v3420 = vunpack.c.l.b16 %v344
  %v3421 = vunpack.c.l.b16 %v345
  %v3422 = vunpack.c.l.b16 %v346
  %v3423 = vunpack.c.l.b16 %v347
  %v3424 = vunpack.c.l.b16 %v348
  %v3425 = vunpack.c.l.b16 %v349
  %v3426 = vunpack.c.l.b16 %v350
  %v3427 = vunpack.c.l.b16 %v351
  %v3428 = vunpack.c.l.b16 %v352
  %v3429 = vunpack.c.l.b16 %v353
  %v3430 = vunpack.c.l.b16 %v354
  %v3431 = vunpack.c.l.b16 %v355
  %v3432 = vunpack.c.l.b16 %v356
  %v3433 = vunpack.c.l.b16 %v357
  %v3434 = vunpack.c.l.b16 %v358
  %v3435 = vunpack.c.l.b16 %v359
  %v3436 = vunpack.c.l.b16 %v360
  %v3437 = vunpack.c.l.b16 %v361
  %v3438 = vunpack.c.l.b16 %v362
  %v3439 = vunpack.c.l.b16 %v363
  %v3440 = vunpack.c.l.b16 %v364
  %v3441 = vunpack.c.l.b16 %v365
  %v3442 = vunpack.c.l.b16 %v366
  %v3443 = vunpack.c.l.b16 %v367
  %v3444 = vunpack.c.l.b16 %v368
  %v3445 = vunpack.c.l.b16 %v369
  %v3446 = vunpack.c.l.b16 %v370
  %v3447 = vunpack.c.l.b16 %v371
  %v3448 = vunpack.c.l.b16 %v372
  %v3449 = vunpack.c.l.b16 %v373
  %v3450 = vunpack.c.l.b16 %v374
  %v3451 = vunpack.c.l.b16 %v375
  %v3452 = vunpack.c.l.b16 %v376
  %v3453 = vunpack.c.l.b16 %v377
  %v3454 = vunpack.c.l.b16 %v378
  %v3455 = vunpack.c.l.b16 %v379
  %v3456 = vunpack.c.l.b16 %v380
  %v3457 = vunpack.c.l.b16 %v381
  %v3458 = vunpack.c.l.b16 %v382
  %v3459 = vunpack.c.l.b16 %v383
  %v3460 = vunpack.c.l.b16 %v384
  %v3461 = vunpack.c.l.b16 %v385
  %v3462 = vunpack.c.l.b16 %v386
  %v3463 = vunpack.c.l.b16 %v387
  %v3464 = vunpack.c.l.b16 %v388
  %v3465 = vunpack.c.l.b16 %v389
  %v3466 = vunpack.c.l.b16 %v390
  %v3467 = vunpack.c.l.b16 %v391
  %v3468 = vunpack.c.l.b16 %v392
  %v3469 = vunpack.c.l.b16 %v393
  %v3470 = vunpack.c.l.b16 %v394
  %v3471 = vunpack.c.l.b16 %v395
  %v3472 = vunpack.c.l.b16 %v396
  %v3473 = vunpack.c.l.b16 %v397
  %v3474 = vunpack.c.l.b16 %v398
  %v3475 = vunpack.c.l.b16 %v399
  %v3476 = vunpack.c.l.b16 %v400
  %v3477 = vunpack.c.l.b16 %v401
  %v3478 = vunpack.c.l.b16 %v402
  %v3479 = vunpack.c.l.b16 %v403
  %v3480 = vunpack.c.l.b16 %v404
  %v3481 = vunpack.c.l.b16 %v405
  %v3482 = vunpack.c.l.b16 %v406
  %v3483 = vunpack.c.l.b16 %v407
  %v3484 = vunpack.c.l.b16 %v408
  %v3485 = vunpack.c.l.b16 %v409
  %v3486 = vunpack.c.l.b16 %v410
  %v3487 = vunpack.c.l.b16 %v411
  %v3488 = vunpack.c.l.b16 %v412
  %v3489 = vunpack.c.l.b16 %v413
  %v3490 = vunpack.c.l.b16 %v414
  %v3491 = vunpack.c.l.b16 %v415
  %v3492 = vunpack.c.l.b16 %v416
  %v3493 = vunpack.c.l.b16 %v417
  %v3494 = vunpack.c.l.b16 %v418
  %v3495 = vunpack.c.l.b16 %v419
  %v3496 = vunpack.c.l.b16 %v420
  %v3497 = vunpack.c.l.b16 %v421
  %v3498 = vunpack.c.l.b16 %v422
  %v3499 = vunpack.c.l.b16 %v423
  %v3500 = vunpack.c.l.b16 %v424
  %v3501 = vunpack.c.l.b16 %v425
  %v3502 = vunpack.c.l.b16 %v426
  %v3503 = vunpack.c.l.b16 %v427
  %v3504 = vunpack.c.l.b16 %v428
  %v3505 = vunpack.c.l.b16 %v429
  %v3506 = vunpack.c.l.b16 %v430
  %v3507 = vunpack.c.l.b16 %v431
  %v3508 = vunpack.c.l.b16 %v432
  %v3509 = vunpack.c.l.b16 %v433
  %v3510 = vunpack.c.l.b16 %v434
  %v3511 = vunpack.c.l.b16 %v435
  %v3512 = vunpack.c.l.b16 %v436
  %v3513 = vunpack.c.l.b16 %v437
  %v3514 = vunpack.c.l.b16 %v438
  %v3515 = vunpack.c.l.b16 %v439
  %v3516 = vunpack.c.l.b16 %v440
  %v3517 = vunpack.c.l.b16 %v441
  %v3518 = vunpack.c.l.b16 %v442
  %v3519 = vunpack.c.l.b16 %v443
  %v3520 = vunpack.c.l.b16 %v444
  %v3521 = vunpack.c.l.b16 %v445
  %v3522 = vunpack.c.l.b16 %v446
  %v3523 = vunpack.c.l.b16 %v447
  %v3524 = vunpack.c.l.b16 %v448
  %v3525 = vunpack.c.l.b16 %v449
  %v3526 = vunpack.c.l.b16 %v450
  %v3527 = vunpack.c.l.b16 %v451
  %v3528 = vunpack.c.l.b16 %v452
  %v3529 = vunpack.c.l.b16 %v453
  %v3530 = vunpack.c.l.b16 %v454
  %v3531 = vunpack.c.l.b16 %v455
  %v3532 = vunpack.c.l.b16 %v456
  %v3533 = vunpack.c.l.b16 %v457
  %v3534 = vunpack.c.l.b16 %v458
  %v3535 = vunpack.c.l.b16 %v459
  %v3536 = vunpack.c.l.b16 %v460
  %v3537 = vunpack.c.l.b16 %v461
  %v3538 = vunpack.c.l.b16 %v462
  %v3539 = vunpack.c.l.b16 %v463
  %v3540 = vunpack.c.l.b16 %v464
  %v3541 = vunpack.c.l.b16 %v465
  %v3542 = vunpack.c.l.b16 %v466
  %v3543 = vunpack.c.l.b16 %v467
  %v3544 = vunpack.c.l.b16 %v468
  %v3545 = vunpack.c.l.b16 %v469
  %v3546 = vunpack.c.l.b16 %v470
  %v3547 = vunpack.c.l.b16 %v471
  %v3548 = vunpack.c.l.b16 %v472
  %v3549 = vunpack.c.l.b16 %v473
  %v3550 = vunpack.c.l.b16 %v474
  %v3551 = vunpack.c.l.b16 %v475
  %v3552 = vunpack.c.l.b16 %v476
  %v3553 = vunpack.c.l.b16 %v477
  %v3554 = vunpack.c.l.b16 %v478
  %v3555 = vunpack.c.l.b16 %v479
  %v3556 = vunpack.c.l.b16 %v480
  %v3557 = vunpack.c.l.b16 %v481
  %v3558 = vunpack.c.l.b16 %v482
  %v3559 = vunpack.c.l.b16 %v483
  %v3560 = vunpack.c.l.b16 %v484
  %v3561 = vunpack.c.l.b16 %v485
  %v3562 = vunpack.c.l.b16 %v486
  %v3563 = vunpack.c.l.b16 %v487
  %v3564 = vunpack.c.l.b16 %v488
  %v3565 = vunpack.c.l.b16 %v489
  %v3566 = vunpack.c.l.b16 %v490
  %v3567 = vunpack.c.l.b16 %v491
  %v3568 = vunpack.c.l.b16 %v492
  %v3569 = vunpack.c.l.b16 %v493
  %v3570 = vunpack.c.l.b16 %v494
  %v3571 = vunpack.c.l.b16 %v495
  %v3572 = vunpack.c.l.b16 %v496
  %v3573 = vunpack.c.l.b16 %v497
  %v3574 = vunpack.c.l.b16 %v498
  %v3575 = vunpack.c.l.b16 %v499
  %v3576 = vunpack.c.l.b16 %v500
  %v3577 = vunpack.c.l.b16 %v501
  %v3578 = vunpack.c.l.b16 %v502
  %v3579 = vunpack.c.l.b16 %v503
  %v3580 = vunpack.c.l.b16 %v504
  %v3581 = vunpack.c.l.b16 %v505
  %v3582 = vunpack.c.l.b16 %v506
  %v3583 = vunpack.c.l.b16 %v507
  %v3584 = vunpack.c.l.b16 %v508
  %v3585 = vunpack.c.l.b16 %v509
  %v3586 = vunpack.c.l.b16 %v510
  %v3587 = vunpack.c.l.b16 %v511
  %v3588 = vunpack.c.l.b16 %v512
  %v3589 = vunpack.c.l.b16 %v513
  %v3590 = vunpack.c.l.b16 %v514
  %v3591 = vunpack.c.l.b16 %v515
  %v3592 = vunpack.c.l.b16 %v516
  %v3593 = vunpack.c.l.b16 %v517
  %v3594 = vunpack.c.l.b16 %v518
  %v3595 = vunpack.c.l.b16 %v519
  %v3596 = vunpack.c.l.b16 %v520
  %v3597 = vunpack.c.l.b16 %v521
  %v3598 = vunpack.c.l.b16 %v522
  %v3599 = vunpack.c.l.b16 %v523
  %v3600 = vunpack.c.l.b16 %v524
  %v3601 = vunpack.c.l.b16 %v525
  %v3602 = vunpack.c.l.b16 %v526
  %v3603 = vunpack.c.l.b16 %v527
  %v3604 = vunpack.c.l.b16 %v528
  %v3605 = vunpack.c.l.b16 %v529
  %v3606 = vunpack.c.l.b16 %v530
  %v3607 = vunpack.c.l.b16 %v531
  %v3608 = vunpack.c.l.b16 %v532
  %v3609 = vunpack.c.l.b16 %v533
  %v3610 = vunpack.c.l.b16 %v534
  %v3611 = vunpack.c.l.b16 %v535
  %v3612 = vunpack.c.l.b16 %v536
  %v3613 = vunpack.c.l.b16 %v537
  %v3614 = vunpack.c.l.b16 %v538
  %v3615 = vunpack.c.l.b16 %v539
  %v3616 = vunpack.c.l.b16 %v540
  %v3617 = vunpack.c.l.b16 %v541
  %v3618 = vunpack.c.l.b16 %v542
  %v3619 = vunpack.c.l.b16 %v543
  %v3620 = vunpack.c.l.b16 %v544
  %v3621 = vunpack.c.l.b16 %v545
  %v3622 = vunpack.c.l.b16 %v546
  %v3623 = vunpack.c.l.b16 %v547
  %v3624 = vunpack.c.l.b16 %v548
  %v3625 = vunpack.c.l.b16 %v549
  %v3626 = vunpack.c.l.b16 %v550
  %v3627 = vunpack.c.l.b16 %v551
  %v3628 = vunpack.c.l.b16 %v552
  %v3629 = vunpack.c.l.b16 %v553
  %v3630 = vunpack.c.l.b16 %v554
  %v3631 = vunpack.c.l.b16 %v555
  %v3632 = vunpack.c.l.b16 %v556
  %v3633 = vunpack.c.l.b16 %v557
  %v3634 = vunpack.c.l.b16 %v558
  %v3635 = vunpack.c.l.b16 %v559
  %v3636 = vunpack.c.l.b16 %v560
  %v3637 = vunpack.c.l.b16 %v561
  %v3638 = vunpack.c.l.b16 %v562
  %v3639 = vunpack.c.l.b16 %v563
  %v3640 = vunpack.c.l.b16 %v564
  %v3641 = vunpack.c.l.b16 %v565
  %v3642 = vunpack.c.l.b16 %v566
  %v3643 = vunpack.c.l.b16 %v567
  %v3644 = vunpack.c.l.b16 %v568
  %v3645 = vunpack.c.l.b16 %v569
  %v3646 = vunpack.c.l.b16 %v570
  %v3647 = vunpack.c.l.b16 %v571
  %v3648 = vunpack.c.l.b16 %v572
  %v3649 = vunpack.c.l.b16 %v573
  %v3650 = vunpack.c.l.b16 %v574
  %v3651 = vunpack.c.l.b16 %v575
  %v3652 = vunpack.c.l.b16 %v576
  %v3653 = vunpack.c.l.b16 %v577
  %v3654 = vunpack.c.l.b16 %v578
  %v3655 = vunpack.c.l.b16 %v579
  %v3656 = vunpack.c.l.b16 %v580
  %v3657 = vunpack.c.l.b16 %v581
  %v3658 = vunpack.c.l.b16 %v582
  %v3659 = vunpack.c.l.b16 %v583
  %v3660 = vunpack.c.l.b16 %v584
  %v3661 = vunpack.c.l.b16 %v585
  %v3662 = vunpack.c.l.b16 %v586
  %v3663 = vunpack.c.l.b16 %v587
  %v3664 = vunpack.c.l.b16 %v588
  %v3665 = vunpack.c.l.b16 %v589
  %v3666 = vunpack.c.l.b16 %v590
  %v3667 = vunpack.c.l.b16 %v591
  %v3668 = vunpack.c.l.b16 %v592
  %v3669 = vunpack.c.l.b16 %v593
  %v3670 = vunpack.c.l.b16 %v594
  %v3671 = vunpack.c.l.b16 %v595
  %v3672 = vunpack.c.l.b16 %v596
  %v3673 = vunpack.c.l.b16 %v597
  %v3674 = vunpack.c.l.b16 %v598
  %v3675 = vunpack.c.l.b16 %v599
  %v3676 = vunpack.c.l.b16 %v600
  %v3677 = vunpack.c.l.b16 %v601
  %v3678 = vunpack.c.l.b16 %v602
  %v3679 = vunpack.c.l.b16 %v603
  %v3680 = vunpack.c.l.b16 %v604
  %v3681 = vunpack.c.l.b16 %v605
  %v3682 = vunpack.c.l.b16 %v606
  %v3683 = vunpack.c.l.b16 %v607
  %v3684 = vunpack.c.l.b16 %v608
  %v3685 = vunpack.c.l.b16 %v609
  %v3686 = vunpack.c.l.b16 %v610
  %v3687 = vunpack.c.l.b16 %v611
  %v3688 = vunpack.c.l.b16 %v612
  %v3689 = vunpack.c.l.b16 %v613
  %v3690 = vunpack.c.l.b16 %v614
  %v3691 = vunpack.c.l.b16 %v615
  %v3692 = vunpack.c.l.b16 %v616
  %v3693 = vunpack.c.l.b16 %v617
  %v3694 = vunpack.c.l.b16 %v618
  %v3695 = vunpack.c.l.b16 %v619
  %v3696 = vunpack.c.l.b16 %v620
  %v3697 = vunpack.c.l.b16 %v621
  %v3698 = vunpack.c.l.b16 %v622
  %v3699 = vunpack.c.l.b16 %v623
  %v3700 = vunpack.c.l.b16 %v624
  %v3701 = vunpack.c.l.b16 %v625
  %v3702 = vunpack.c.l.b16 %v626
  %v3703 = vunpack.c.l.b16 %v627
  %v3704 = vunpack.c.l.b16 %v628
  %v3705 = vunpack.c.l.b16 %v629
  %v3706 = vunpack.c.l.b16 %v630
  %v3707 = vunpack.c.l.b16 %v631
  %v3708 = vunpack.c.l.b16 %v632
  %v3709 = vunpack.c.l.b16 %v633
  %v3710 = vunpack.c.l.b16 %v634
  %v3711 = vunpack.c.l.b16 %v635
  %v3712 = vunpack.c.l.b16 %v636
  %v3713 = vunpack.c.l.b16 %v637
  %v3714 = vunpack.c.l.b16 %v638
  %v3715 = vunpack.c.l.b16 %v639
  %v3716 = vunpack.c.l.b16 %v640
  %v3717 = vunpack.c.l.b16 %v641
  %v3718 = vunpack.c.l.b16 %v642
  %v3719 = vunpack.c.l.b16 %v643
  %v3720 = vunpack.c.l.b16 %v644
  %v3721 = vunpack.c.l.b16 %v645
  %v3722 = vunpack.c.l.b16 %v646
  %v3723 = vunpack.c.l.b16 %v647
  %v3724 = vunpack.c.l.b16 %v648
  %v3725 = vunpack.c.l.b16 %v649
  %v3726 = vunpack.c.l.b16 %v650
  %v3727 = vunpack.c.l.b16 %v651
  %v3728 = vunpack.c.l.b16 %v652
  %v3729 = vunpack.c.l.b16 %v653
  %v3730 = vunpack.c.l.b16 %v654
  %v3731 = vunpack.c.l.b16 %v655
  %v3732 = vunpack.c.l.b16 %v656
  %v3733 = vunpack.c.l.b16 %v657
  %v3734 = vunpack.c.l.b16 %v658
  %v3735 = vunpack.c.l.b16 %v659
  %v3736 = vunpack.c.l.b16 %v660
  %v3737 = vunpack.c.l.b16 %v661
  %v3738 = vunpack.c.l.b16 %v662
  %v3739 = vunpack.c.l.b16 %v663
  %v3740 = vunpack.c.l.b16 %v664
  %v3741 = vunpack.c.l.b16 %v665
  %v3742 = vunpack.c.l.b16 %v666
  %v3743 = vunpack.c.l.b16 %v667
  %v3744 = vunpack.c.l.b16 %v668
  %v3745 = vunpack.c.l.b16 %v669
  %v3746 = vunpack.c.l.b16 %v670
  %v3747 = vunpack.c.l.b16 %v671
  %v3748 = vunpack.c.l.b16 %v672
  %v3749 = vunpack.c.l.b16 %v673
  %v3750 = vunpack.c.l.b16 %v674
  %v3751 = vunpack.c.l.b16 %v675
  %v3752 = vunpack.c.l.b16 %v676
  %v3753 = vunpack.c.l.b16 %v677
  %v3754 = vunpack.c.l.b16 %v678
  %v3755 = vunpack.c.l.b16 %v679
  %v3756 = vunpack.c.l.b16 %v680
  %v3757 = vunpack.c.l.b16 %v681
  %v3758 = vunpack.c.l.b16 %v682
  %v3759 = vunpack.c.l.b16 %v683
  %v3760 = vunpack.c.l.b16 %v684
  %v3761 = vunpack.c.l.b16 %v685
  %v3762 = vunpack.c.l.b16 %v686
  %v3763 = vunpack.c.l.b16 %v687
  %v3764 = vunpack.c.l.b16 %v688
  %v3765 = vunpack.c.l.b16 %v689
  %v3766 = vunpack.c.l.b16 %v690
  %v3767 = vunpack.c.l.b16 %v691
  %v3768 = vunpack.c.l.b16 %v692
  %v3769 = vunpack.c.l.b16 %v693
  %v3770 = vunpack.c.l.b16 %v694
  %v3771 = vunpack.c.l.b16 %v695
  %v3772 = vunpack.c.l.b16 %v696
  %v3773 = vunpack.c.l.b16 %v697
  %v3774 = vunpack.c.l.b16 %v698
  %v3775 = vunpack.c.l.b16 %v699
  %v3776 = vunpack.c.l.b16 %v700
  %v3777 = vunpack.c.l.b16 %v701
  %v3778 = vunpack.c.l.b16 %v702
  %v3779 = vunpack.c.l.b16 %v703
  %v3780 = vunpack.c.l.b16 %v704
  %v3781 = vunpack.c.l.b16 %v705
  %v3782 = vunpack.c.l.b16 %v706
  %v3783 = vunpack.c.l.b16 %v707
  %v3784 = vunpack.c.l.b16 %v708
  %v3785 = vunpack.c.l.b16 %v709
  %v3786 = vunpack.c.l.b16 %v710
  %v3787 = vunpack.c.l.b16 %v711
  %v3788 = vunpack.c.l.b16 %v712
  %v3789 = vunpack.c.l.b16 %v713
  %v3790 = vunpack.c.l.b16 %v714
  %v3791 = vunpack.c.l.b16 %v715
  %v3792 = vunpack.c.l.b16 %v716
  %v3793 = vunpack.c.l.b16 %v717
  %v3794 = vunpack.c.l.b16 %v718
  %v3795 = vunpack.c.l.b16 %v719
  %v3796 = vunpack.c.l.b16 %v720
  %v3797 = vunpack.c.l.b16 %v721
  %v3798 = vunpack.c.l.b16 %v722
  %v3799 = vunpack.c.l.b16 %v723
  %v3800 = vunpack.c.l.b16 %v724
  %v3801 = vunpack.c.l.b16 %v725
  %v3802 = vunpack.c.l.b16 %v726
  %v3803 = vunpack.c.l.b16 %v727
  %v3804 = vunpack.c.l.b16 %v728
  %v3805 = vunpack.c.l.b16 %v729
  %v3806 = vunpack.c.l.b16 %v730
  %v3807 = vunpack.c.l.b16 %v731
  %v3808 = vunpack.c.l.b16 %v732
  %v3809 = vunpack.c.l.b16 %v733
  %v3810 = vunpack.c.l.b16 %v734
  %v3811 = vunpack.c.l.b16 %v735
  %v3812 = vunpack.c.l.b16 %v736
  %v3813 = vunpack.c.l.b16 %v737
  %v3814 = vunpack.c.l.b16 %v738
  %v3815 = vunpack.c.l.b16 %v739
  %v3816 = vunpack.c.l.b16 %v740
  %v3817 = vunpack.c.l.b16 %v741
  %v3818 = vunpack.c.l.b16 %v742
  %v3819 = vunpack.c.l.b16 %v743
  %v3820 = vunpack.c.l.b16 %v744
  %v3821 = vunpack.c.l.b16 %v745
  %v3822 = vunpack.c.l.b16 %v746
  %v3823 = vunpack.c.l.b16 %v747
  %v3824 = vunpack.c.l.b16 %v748
  %v3825 = vunpack.c.l.b16 %v749
  %v3826 = vunpack.c.l.b16 %v750
  %v3827 = vunpack.c.l.b16 %v751
  %v3828 = vunpack.c.l.b16 %v752
  %v3829 = vunpack.c.l.b16 %v753
  %v3830 = vunpack.c.l.b16 %v754
  %v3831 = vunpack.c.l.b16 %v755
  %v3832 = vunpack.c.l.b16 %v756
  %v3833 = vunpack.c.l.b16 %v757
  %v3834 = vunpack.c.l.b16 %v758
  %v3835 = vunpack.c.l.b16 %v759
  %v3836 = vunpack.c.l.b16 %v760
  %v3837 = vunpack.c.l.b16 %v761
  %v3838 = vunpack.c.l.b16 %v762
  %v3839 = vunpack.c.l.b16 %v763
  %v3840 = vunpack.c.l.b16 %v764
  %v3841 = vunpack.c.l.b16 %v765
  %v3842 = vunpack.c.l.b16 %v766
  %v3843 = vunpack.c.l.b16 %v767
  %v3844 = vunpack.c.l.b16 %v768
  %v3845 = vunpack.c.l.b16 %v769
  %v3846 = vunpack.c.l.b16 %v770
  %v3847 = vunpack.c.l.b16 %v771
  %v3848 = vunpack.c.l.b16 %v772
  %v3849 = vunpack.c.l.b16 %v773
  %v3850 = vunpack.c.l.b16 %v774
  %v3851 = vunpack.c.l.b16 %v775
  %v3852 = vunpack.c.l.b16 %v776
  %v3853 = vunpack.c.l.b16 %v777
  %v3854 = vunpack.c.l.b16 %v778
  %v3855 = vunpack.c.l.b16 %v779
  %v3856 = vunpack.c.l.b16 %v780
  %v3857 = vunpack.c.l.b16 %v781
  %v3858 = vunpack.c.l.b16 %v782
  %v3859 = vunpack.c.l.b16 %v783
  %v3860 = vunpack.c.l.b16 %v784
  %v3861 = vunpack.c.l.b16 %v785
  %v3862 = vunpack.c.l.b16 %v786
  %v3863 = vunpack.c.l.b16 %v787
  %v3864 = vunpack.c.l.b16 %v788
  %v3865 = vunpack.c.l.b16 %v789
  %v3866 = vunpack.c.l.b16 %v790
  %v3867 = vunpack.c.l.b16 %v791
  %v3868 = vunpack.c.l.b16 %v792
  %v3869 = vunpack.c.l.b16 %v793
  %v3870 = vunpack.c.l.b16 %v794
  %v3871 = vunpack.c.l.b16 %v795
  %v3872 = vunpack.c.l.b16 %v796
  %v3873 = vunpack.c.l.b16 %v797
  %v3874 = vunpack.c.l.b16 %v798
  %v3875 = vunpack.c.l.b16 %v799
  %v3876 = vunpack.c.l.b16 %v800
  %v3877 = vunpack.c.l.b16 %v801
  %v3878 = vunpack.c.l.b16 %v802
  %v3879 = vunpack.c.l.b16 %v803
  %v3880 = vunpack.c.l.b16 %v804
  %v3881 = vunpack.c.l.b16 %v805
  %v3882 = vunpack.c.l.b16 %v806
  %v3883 = vunpack.c.l.b16 %v807
  %v3884 = vunpack.c.l.b16 %v808
  %v3885 = vunpack.c.l.b16 %v809
  %v3886 = vunpack.c.l.b16 %v810
  %v3887 = vunpack.c.l.b16 %v811
  %v3888 = vunpack.c.l.b16 %v812
  %v3889 = vunpack.c.l.b16 %v813
  %v3890 = vunpack.c.l.b16 %v814
  %v3891 = vunpack.c.l.b16 %v815
  %v3892 = vunpack.c.l.b16 %v816
  %v3893 = vunpack.c.l.b16 %v817
  %v3894 = vunpack.c.l.b16 %v818
  %v3895 = vunpack.c.l.b16 %v819
  %v3896 = vunpack.c.l.b16 %v820
  %v3897 = vunpack.c.l.b16 %v821
  %v3898 = vunpack.c.l.b16 %v822
  %v3899 = vunpack.c.l.b16 %v823
  %v3900 = vunpack.c.l.b16 %v824
  %v3901 = vunpack.c.l.b16 %v825
  %v3902 = vunpack.c.l.b16 %v826
  %v3903 = vunpack.c.l.b16 %v827
  %v3904 = vunpack.c.l.b16 %v828
  %v3905 = vunpack.c.l.b16 %v829
  %v3906 = vunpack.c.l.b16 %v830
  %v3907 = vunpack.c.l.b16 %v831
  %v3908 = vunpack.c.l.b16 %v832
  %v3909 = vunpack.c.l.b16 %v833
  %v3910 = vunpack.c.l.b16 %v834
  %v3911 = vunpack.c.l.b16 %v835
  %v3912 = vunpack.c.l.b16 %v836
  %v3913 = vunpack.c.l.b16 %v837
  %v3914 = vunpack.c.l.b16 %v838
  %v3915 = vunpack.c.l.b16 %v839
  %v3916 = vunpack.c.l.b16 %v840
  %v3917 = vunpack.c.l.b16 %v841
  %v3918 = vunpack.c.l.b16 %v842
  %v3919 = vunpack.c.l.b16 %v843
  %v3920 = vunpack.c.l.b16 %v844
  %v3921 = vunpack.c.l.b16 %v845
  %v3922 = vunpack.c.l.b16 %v846
  %v3923 = vunpack.c.l.b16 %v847
  %v3924 = vunpack.c.l.b16 %v848
  %v3925 = vunpack.c.l.b16 %v849
  %v3926 = vunpack.c.l.b16 %v850
  %v3927 = vunpack.c.l.b16 %v851
  %v3928 = vunpack.c.l.b16 %v852
  %v3929 = vunpack.c.l.b16 %v853
  %v3930 = vunpack.c.l.b16 %v854
  %v3931 = vunpack.c.l.b16 %v855
  %v3932 = vunpack.c.l.b16 %v856
  %v3933 = vunpack.c.l.b16 %v857
  %v3934 = vunpack.c.l.b16 %v858
  %v3935 = vunpack.c.l.b16 %v859
  %v3936 = vunpack.c.l.b16 %v860
  %v3937 = vunpack.c.l.b16 %v861
  %v3938 = vunpack.c.l.b16 %v862
  %v3939 = vunpack.c.l.b16 %v863
  %v3940 = vunpack.c.l.b16 %v864
  %v3941 = vunpack.c.l.b16 %v865
  %v3942 = vunpack.c.l.b16 %v866
  %v3943 = vunpack.c.l.b16 %v867
  %v3944 = vunpack.c.l.b16 %v868
  %v3945 = vunpack.c.l.b16 %v869
  %v3946 = vunpack.c.l.b16 %v870
  %v3947 = vunpack.c.l.b16 %v871
  %v3948 = vunpack.c.l.b16 %v872
  %v3949 = vunpack.c.l.b16 %v873
  %v3950 = vunpack.c.l.b16 %v874
  %v3951 = vunpack.c.l.b16 %v875
  %v3952 = vunpack.c.l.b16 %v876
  %v3953 = vunpack.c.l.b16 %v877
  %v3954 = vunpack.c.l.b16 %v878
  %v3955 = vunpack.c.l.b16 %v879
  %v3956 = vunpack.c.l.b16 %v880
  %v3957 = vunpack.c.l.b16 %v881
  %v3958 = vunpack.c.l.b16 %v882
  %v3959 = vunpack.c.l.b16 %v883
  %v3960 = vunpack.c.l.b16 %v884
  %v3961 = vunpack.c.l.b16 %v885
  %v3962 = vunpack.c.l.b16 %v886
  %v3963 = vunpack.c.l.b16 %v887
  %v3964 = vunpack.c.l.b16 %v888
  %v3965 = vunpack.c.l.b16 %v889
  %v3966 = vunpack.c.l.b16 %v890
  %v3967 = vunpack.c.l.b16 %v891
  %v3968 = vunpack.c.l.b16 %v892
  %v3969 = vunpack.c.l.b16 %v893
  %v3970 = vunpack.c.l.b16 %v894
  %v3971 = vunpack.c.l.b16 %v895
  %v3972 = vunpack.c.l.b16 %v896
  %v3973 = vunpack.c.l.b16 %v897
  %v3974 = vunpack.c.l.b16 %v898
  %v3975 = vunpack.c.l.b16 %v899
  %v3976 = vunpack.c.l.b16 %v900
  %v3977 = vunpack.c.l.b16 %v901
  %v3978 = vunpack.c.l.b16 %v902
  %v3979 = vunpack.c.l.b16 %v903
  %v3980 = vunpack.c.l.b16 %v904
  %v3981 = vunpack.c.l.b16 %v905
  %v3982 = vunpack.c.l.b16 %v906
  %v3983 = vunpack.c.l.b16 %v907
  %v3984 = vunpack.c.l.b16 %v908
  %v3985 = vunpack.c.l.b16 %v909
  %v3986 = vunpack.c.l.b16 %v910
  %v3987 = vunpack.c.l.b16 %v911
  %v3988 = vunpack.c.l.b16 %v912
  %v3989 = vunpack.c.l.b16 %v913
  %v3990 = vunpack.c.l.b16 %v914
  %v3991 = vunpack.c.l.b16 %v915
  %v3992 = vunpack.c.l.b16 %v916
  %v3993 = vunpack.c.l.b16 %v917
  %v3994 = vunpack.c.l.b16 %v918
  %v3995 = vunpack.c.l.b16 %v919
  %v3996 = vunpack.c.l.b16 %v920
  %v3997 = vunpack.c.l.b16 %v921
  %v3998 = vunpack.c.l.b16 %v922
  %v3999 = vunpack.c.l.b16 %v923
  %v4000 = vunpack.c.l.b16 %v924
  %v4001 = vunpack.c.l.b16 %v925
  %v4002 = vunpack.c.l.b16 %v926
  %v4003 = vunpack.c.l.b16 %v927
  %v4004 = vunpack.c.l.b16 %v928
  %v4005 = vunpack.c.l.b16 %v929
  %v4006 = vunpack.c.l.b16 %v930
  %v4007 = vunpack.c.l.b16 %v931
  %v4008 = vunpack.c.l.b16 %v932
  %v4009 = vunpack.c.l.b16 %v933
  %v4010 = vunpack.c.l.b16 %v934
  %v4011 = vunpack.c.l.b16 %v935
  %v4012 = vunpack.c.l.b16 %v936
  %v4013 = vunpack.c.l.b16 %v937
  %v4014 = vunpack.c.l.b16 %v938
  %v4015 = vunpack.c.l.b16 %v939
  %v4016 = vunpack.c.l.b16 %v940
  %v4017 = vunpack.c.l.b16 %v941
  %v4018 = vunpack.c.l.b16 %v942
  %v4019 = vunpack.c.l.b16 %v943
  %v4020 = vunpack.c.l.b16 %v944
  %v4021 = vunpack.c.l.b16 %v945
  %v4022 = vunpack.c.l.b16 %v946
  %v4023 = vunpack.c.l.b16 %v947
  %v4024 = vunpack.c.l.b16 %v948
  %v4025 = vunpack.c.l.b16 %v949
  %v4026 = vunpack.c.l.b16 %v950
  %v4027 = vunpack.c.l.b16 %v951
  %v4028 = vunpack.c.l.b16 %v952
  %v4029 = vunpack.c.l.b16 %v953
  %v4030 = vunpack.c.l.b16 %v954
  %v4031 = vunpack.c.l.b16 %v955
  %v4032 = vunpack.c.l.b16 %v956
  %v4033 = vunpack.c.l.b16 %v957
  %v4034 = vunpack.c.l.b16 %v958
  %v4035 = vunpack.c.l.b16 %v959
  %v4036 = vunpack.c.l.b16 %v960
  %v4037 = vunpack.c.l.b16 %v961
  %v4038 = vunpack.c.l.b16 %v962
  %v4039 = vunpack.c.l.b16 %v963
  %v4040 = vunpack.c.l.b16 %v964
  %v4041 = vunpack.c.l.b16 %v965
  %v4042 = vunpack.c.l.b16 %v966
  %v4043 = vunpack.c.l.b16 %v967
  %v4044 = vunpack.c.l.b16 %v968
  %v4045 = vunpack.c.l.b16 %v969
  %v4046 = vunpack.c.l.b16 %v970
  %v4047 = vunpack.c.l.b16 %v971
  %v4048 = vunpack.c.l.b16 %v972
  %v4049 = vunpack.c.l.b16 %v973
  %v4050 = vunpack.c.l.b16 %v974
  %v4051 = vunpack.c.l.b16 %v975
  %v4052 = vunpack.c.l.b16 %v976
  %v4053 = vunpack.c.l.b16 %v977
  %v4054 = vunpack.c.l.b16 %v978
  %v4055 = vunpack.c.l.b16 %v979
  %v4056 = vunpack.c.l.b16 %v980
  %v4057 = vunpack.c.l.b16 %v981
  %v4058 = vunpack.c.l.b16 %v982
  %v4059 = vunpack.c.l.b16 %v983
  %v4060 = vunpack.c.l.b16 %v984
  %v4061 = vunpack.c.l.b16 %v985
  %v4062 = vunpack.c.l.b16 %v986
  %v4063 = vunpack.c.l.b16 %v987
  %v4064 = vunpack.c.l.b16 %v988
  %v4065 = vunpack.c.l.b16 %v989
  %v4066 = vunpack.c.l.b16 %v990
  %v4067 = vunpack.c.l.b16 %v991
  %v4068 = vunpack.c.l.b16 %v992
  %v4069 = vunpack.c.l.b16 %v993
  %v4070 = vunpack.c.l.b16 %v994
  %v4071 = vunpack.c.l.b16 %v995
  %v4072 = vunpack.c.l.b16 %v996
  %v4073 = vunpack.c.l.b16 %v997
  %v4074 = vunpack.c.l.b16 %v998
  %v4075 = vunpack.c.l.b16 %v999
  %v4076 = vunpack.c.l.b16 %v1000
  %v4077 = vunpack.c.l.b16 %v1001
  %v4078 = vunpack.c.l.b16 %v1002
  %v4079 = vunpack.c.l.b16 %v1003
  %v4080 = vunpack.c.l.b16 %v1004
  %v4081 = vunpack.c.l.b16 %v1005
  %v4082 = vunpack.c.l.b16 %v1006
  %v4083 = vunpack.c.l.b16 %v1007
  %v4084 = vunpack.c.l.b16 %v1008
  %v4085 = vunpack.c.l.b16 %v1009
  %v4086 = vunpack.c.l.b16 %v1010
  %v4087 = vunpack.c.l.b16 %v1011
  %v4088 = vunpack.c.l.b16 %v1012
  %v4089 = vunpack.c.l.b16 %v1013
  %v4090 = vunpack.c.l.b16 %v1014
  %v4091 = vunpack.c.l.b16 %v1015
  %v4092 = vunpack.c.l.b16 %v1016
  %v4093 = vunpack.c.l.b16 %v1017
  %v4094 = vunpack.c.l.b16 %v1018
  %v4095 = vunpack.c.l.b16 %v1019
  %v4096 = vunpack.c.l.b16 %v1020
  %v4097 = vunpack.c.l.b16 %v1021
  %v4098 = vunpack.c.l.b16 %v1022
  %v4099 = vunpack.c.l.b16 %v1023
  %v4100 = vunpack.c.l.b16 %v1024
  %v4101 = vunpack.c.l.b16 %v1025
  %v4102 = vunpack.c.l.b16 %v1026
  %v4103 = vunpack.c.l.b16 %v1027
  %v4104 = vunpack.c.l.b16 %v1028
  %v4105 = vunpack.c.l.b16 %v1029
  %v4106 = vunpack.c.l.b16 %v1030
  %v4107 = vunpack.c.l.b16 %v1031
  %v4108 = vunpack.c.l.b16 %v1032
  %v4109 = vunpack.c.l.b16 %v1033
  %v4110 = vunpack.c.l.b16 %v1034
  %v4111 = vunpack.c.l.b16 %v1035
  %v4112 = vunpack.c.l.b16 %v1036
  %v4113 = vunpack.c.l.b16 %v1037
  %v4114 = vunpack.c.l.b16 %v1038
  %v4115 = vunpack.c.l.b16 %v1039
  %v4116 = vunpack.c.l.b16 %v1040
  %v4117 = vunpack.c.l.b16 %v1041
  %v4118 = vunpack.c.l.b16 %v1042
  %v4119 = vunpack.c.l.b16 %v1043
  %v4120 = vunpack.c.l.b16 %v1044
  %v4121 = vunpack.c.l.b16 %v1045
  %v4122 = vunpack.c.l.b16 %v1046
  %v4123 = vunpack.c.l.b16 %v1047
  %v4124 = vunpack.c.l.b16 %v1048
  %v4125 = vunpack.c.l.b16 %v1049
  %v4126 = vunpack.c.l.b16 %v1050
  %v4127 = vunpack.c.l.b16 %v1051
  %v4128 = vunpack.c.l.b16 %v1052
  %v4129 = vunpack.c.l.b16 %v1053
  %v4130 = vunpack.c.l.b16 %v1054
  %v4131 = vunpack.c.l.b16 %v1055
  %v4132 = vunpack.c.l.b16 %v1056
  %v4133 = vunpack.c.l.b16 %v1057
  %v4134 = vunpack.c.l.b16 %v1058
  %v4135 = vunpack.c.l.b16 %v1059
  %v4136 = vunpack.c.l.b16 %v1060
  %v4137 = vunpack.c.l.b16 %v1061
  %v4138 = vunpack.c.l.b16 %v1062
  %v4139 = vunpack.c.l.b16 %v1063
  %v4140 = vunpack.c.l.b16 %v1064
  %v4141 = vunpack.c.l.b16 %v1065
  %v4142 = vunpack.c.l.b16 %v1066
  %v4143 = vunpack.c.l.b16 %v1067
  %v4144 = vunpack.c.l.b16 %v1068
  %v4145 = vunpack.c.l.b16 %v1069
  %v4146 = vunpack.c.l.b16 %v1070
  %v4147 = vunpack.c.l.b16 %v1071
  %v4148 = vunpack.c.l.b16 %v1072
  %v4149 = vunpack.c.l.b16 %v1073
  %v4150 = vunpack.c.l.b16 %v1074
  %v4151 = vunpack.c.l.b16 %v1075
  %v4152 = vunpack.c.l.b16 %v1076
  %v4153 = vunpack.c.l.b16 %v1077
  %v4154 = vunpack.c.l.b16 %v1078
  %v4155 = vunpack.c.l.b16 %v1079
  %v4156 = vunpack.c.l.b16 %v1080
  %v4157 = vunpack.c.l.b16 %v1081
  %v4158 = vunpack.c.l.b16 %v1082
  %v4159 = vunpack.c.l.b16 %v1083
  %v4160 = vunpack.c.l.b16 %v1084
  %v4161 = vunpack.c.l.b16 %v1085
  %v4162 = vunpack.c.l.b16 %v1086
  %v4163 = vunpack.c.l.b16 %v1087
  %v4164 = vunpack.c.l.b16 %v1088
  %v4165 = vunpack.c.l.b16 %v1089
  %v4166 = vunpack.c.l.b16 %v1090
  %v4167 = vunpack.c.l.b16 %v1091
  %v4168 = vunpack.c.l.b16 %v1092
  %v4169 = vunpack.c.l.b16 %v1093
  %v4170 = vunpack.c.l.b16 %v1094
  %v4171 = vunpack.c.l.b16 %v1095
  %v4172 = vunpack.c.l.b16 %v1096
  %v4173 = vunpack.c.l.b16 %v1097
  %v4174 = vunpack.c.l.b16 %v1098
  %v4175 = vunpack.c.l.b16 %v1099
  %v4176 = vunpack.c.l.b16 %v1100
  %v4177 = vunpack.c.l.b16 %v1101
  %v4178 = vunpack.c.l.b16 %v1102
  %v4179 = vunpack.c.l.b16 %v1103
  %v4180 = vunpack.c.l.b16 %v1104
  %v4181 = vunpack.c.l.b16 %v1105
  %v4182 = vunpack.c.l.b16 %v1106
  %v4183 = vunpack.c.l.b16 %v1107
  %v4184 = vunpack.c.l.b16 %v1108
  %v4185 = vunpack.c.l.b16 %v1109
  %v4186 = vunpack.c.l.b16 %v1110
  %v4187 = vunpack.c.l.b16 %v1111
  %v4188 = vunpack.c.l.b16 %v1112
  %v4189 = vunpack.c.l.b16 %v1113
  %v4190 = vunpack.c.l.b16 %v1114
  %v4191 = vunpack.c.l.b16 %v1115
  %v4192 = vunpack.c.l.b16 %v1116
  %v4193 = vunpack.c.l.b16 %v1117
  %v4194 = vunpack.c.l.b16 %v1118
  %v4195 = vunpack.c.l.b16 %v1119
  %v4196 = vunpack.c.l.b16 %v1120
  %v4197 = vunpack.c.l.b16 %v1121
  %v4198 = vunpack.c.l.b16 %v1122
  %v4199 = vunpack.c.l.b16 %v1123
  %v4200 = vunpack.c.l.b16 %v1124
  %v4201 = vunpack.c.l.b16 %v1125
  %v4202 = vunpack.c.l.b16 %v1126
  %v4203 = vunpack.c.l.b16 %v1127
  %v4204 = vunpack.c.l.b16 %v1128
  %v4205 = vunpack.c.l.b16 %v1129
  %v4206 = vunpack.c.l.b16 %v1130
  %v4207 = vunpack.c.l.b16 %v1131
  %v4208 = vunpack.c.l.b16 %v1132
  %v4209 = vunpack.c.l.b16 %v1133
  %v4210 = vunpack.c.l.b16 %v1134
  %v4211 = vunpack.c.l.b16 %v1135
  %v4212 = vunpack.c.l.b16 %v1136
  %v4213 = vunpack.c.l.b16 %v1137
  %v4214 = vunpack.c.l.b16 %v1138
  %v4215 = vunpack.c.l.b16 %v1139
  %v4216 = vunpack.c.l.b16 %v1140
  %v4217 = vunpack.c.l.b16 %v1141
  %v4218 = vunpack.c.l.b16 %v1142
  %v4219 = vunpack.c.l.b16 %v1143
  %v4220 = vunpack.c.l.b16 %v1144
  %v4221 = vunpack.c.l.b16 %v1145
  %v4222 = vunpack.c.l.b16 %v1146
  %v4223 = vunpack.c.l.b16 %v1147
  %v4224 = vunpack.c.l.b16 %v1148
  %v4225 = vunpack.c.l.b16 %v1149
  %v4226 = vunpack.c.l.b16 %v1150
  %v4227 = vunpack.c.l.b16 %v1151
  %v4228 = vunpack.c.l.b16 %v1152
  %v4229 = vunpack.c.l.b16 %v1153
  %v4230 = vunpack.c.l.b16 %v1154
  %v4231 = vunpack.c.l.b16 %v1155
  %v4232 = vunpack.c.l.b16 %v1156
  %v4233 = vunpack.c.l.b16 %v1157
  %v4234 = vunpack.c.l.b16 %v1158
  %v4235 = vunpack.c.l.b16 %v1159
  %v4236 = vunpack.c.l.b16 %v1160
  %v4237 = vunpack.c.l.b16 %v1161
  %v4238 = vunpack.c.l.b16 %v1162
  %v4239 = vunpack.c.l.b16 %v1163
  %v4240 = vunpack.c.l.b16 %v1164
  %v4241 = vunpack.c.l.b16 %v1165
  %v4242 = vunpack.c.l.b16 %v1166
  %v4243 = vunpack.c.l.b16 %v1167
  %v4244 = vunpack.c.l.b16 %v1168
  %v4245 = vunpack.c.l.b16 %v1169
  %v4246 = vunpack.c.l.b16 %v1170
  %v4247 = vunpack.c.l.b16 %v1171
  %v4248 = vunpack.c.l.b16 %v1172
  %v4249 = vunpack.c.l.b16 %v1173
  %v4250 = vunpack.c.l.b16 %v1174
  %v4251 = vunpack.c.l.b16 %v1175
  %v4252 = vunpack.c.l.b16 %v1176
  %v4253 = vunpack.c.l.b16 %v1177
  %v4254 = vunpack.c.l.b16 %v1178
  %v4255 = vunpack.c.l.b16 %v1179
  %v4256 = vunpack.c.l.b16 %v1180
  %v4257 = vunpack.c.l.b16 %v1181
  %v4258 = vunpack.c.l.b16 %v1182
  %v4259 = vunpack.c.l.b16 %v1183
  %v4260 = vunpack.c.l.b16 %v1184
  %v4261 = vunpack.c.l.b16 %v1185
  %v4262 = vunpack.c.l.b16 %v1186
  %v4263 = vunpack.c.l.b16 %v1187
  %v4264 = vunpack.c.l.b16 %v1188
  %v4265 = vunpack.c.l.b16 %v1189
  %v4266 = vunpack.c.l.b16 %v1190
  %v4267 = vunpack.c.l.b16 %v1191
  %v4268 = vunpack.c.l.b16 %v1192
  %v4269 = vunpack.c.l.b16 %v1193
  %v4270 = vunpack.c.l.b16 %v1194
  %v4271 = vunpack.c.l.b16 %v1195
  %v4272 = vunpack.c.l.b16 %v1196
  %v4273 = vunpack.c.l.b16 %v1197
  %v4274 = vunpack.c.l.b16 %v1198
  %v4275 = vunpack.c.l.b16 %v1199
  %v4276 = vunpack.c.l.b16 %v1200
  %v4277 = vunpack.c.l.b16 %v1201
  %v4278 = vunpack.c.l.b16 %v1202
  %v4279 = vunpack.c.l.b16 %v1203
  %v4280 = vunpack.c.l.b16 %v1204
  %v4281 = vunpack.c.l.b16 %v1205
  %v4282 = vunpack.c.l.b16 %v1206
  %v4283 = vunpack.c.l.b16 %v1207
  %v4284 = vunpack.c.l.b16 %v1208
  %v4285 = vunpack.c.l.b16 %v1209
  %v4286 = vunpack.c.l.b16 %v1210
  %v4287 = vunpack.c.l.b16 %v1211
  %v4288 = vunpack.c.l.b16 %v1212
  %v4289 = vunpack.c.l.b16 %v1213
  %v4290 = vunpack.c.l.b16 %v1214
  %v4291 = vunpack.c.l.b16 %v1215
  %v4292 = vunpack.c.l.b16 %v1216
  %v4293 = vunpack.c.l.b16 %v1217
  %v4294 = vunpack.c.l.b16 %v1218
  %v4295 = vunpack.c.l.b16 %v1219
  %v4296 = vunpack.c.l.b16 %v1220
  %v4297 = vunpack.c.l.b16 %v1221
  %v4298 = vunpack.c.l.b16 %v1222
  %v4299 = vunpack.c.l.b16 %v1223
  %v4300 = vunpack.c.l.b16 %v1224
  %v4301 = vunpack.c.l.b16 %v1225
  %v4302 = vunpack.c.l.b16 %v1226
  %v4303 = vunpack.c.l.b16 %v1227
  %v4304 = vunpack.c.l.b16 %v1228
  %v4305 = vunpack.c.l.b16 %v1229
  %v4306 = vunpack.c.l.b16 %v1230
  %v4307 = vunpack.c.l.b16 %v1231
  %v4308 = vunpack.c.l.b16 %v1232
  %v4309 = vunpack.c.l.b16 %v1233
  %v4310 = vunpack.c.l.b16 %v1234
  %v4311 = vunpack.c.l.b16 %v1235
  %v4312 = vunpack.c.l.b16 %v1236
  %v4313 = vunpack.c.l.b16 %v1237
  %v4314 = vunpack.c.l.b16 %v1238
  %v4315 = vunpack.c.l.b16 %v1239
  %v4316 = vunpack.c.l.b16 %v1240
  %v4317 = vunpack.c.l.b16 %v1241
  %v4318 = vunpack.c.l.b16 %v1242
  %v4319 = vunpack.c.l.b16 %v1243
  %v4320 = vunpack.c.l.b16 %v1244
  %v4321 = vunpack.c.l.b16 %v1245
  %v4322 = vunpack.c.l.b16 %v1246
  %v4323 = vunpack.c.l.b16 %v1247
  %v4324 = vunpack.c.l.b16 %v1248
  %v4325 = vunpack.c.l.b16 %v1249
  %v4326 = vunpack.c.l.b16 %v1250
  %v4327 = vunpack.c.l.b16 %v1251
  %v4328 = vunpack.c.l.b16 %v1252
  %v4329 = vunpack.c.l.b16 %v1253
  %v4330 = vunpack.c.l.b16 %v1254
  %v4331 = vunpack.c.l.b16 %v1255
  %v4332 = vunpack.c.l.b16 %v1256
  %v4333 = vunpack.c.l.b16 %v1257
  %v4334 = vunpack.c.l.b16 %v1258
  %v4335 = vunpack.c.l.b16 %v1259
  %v4336 = vunpack.c.l.b16 %v1260
  %v4337 = vunpack.c.l.b16 %v1261
  %v4338 = vunpack.c.l.b16 %v1262
  %v4339 = vunpack.c.l.b16 %v1263
  %v4340 = vunpack.c.l.b16 %v1264
  %v4341 = vunpack.c.l.b16 %v1265
  %v4342 = vunpack.c.l.b16 %v1266
  %v4343 = vunpack.c.l.b16 %v1267
  %v4344 = vunpack.c.l.b16 %v1268
  %v4345 = vunpack.c.l.b16 %v1269
  %v4346 = vunpack.c.l.b16 %v1270
  %v4347 = vunpack.c.l.b16 %v1271
  %v4348 = vunpack.c.l.b16 %v1272
  %v4349 = vunpack.c.l.b16 %v1273
  %v4350 = vunpack.c.l.b16 %v1274
  %v4351 = vunpack.c.l.b16 %v1275
  %v4352 = vunpack.c.l.b16 %v1276
  %v4353 = vunpack.c.l.b16 %v1277
  %v4354 = vunpack.c.l.b16 %v1278
  %v4355 = vunpack.c.l.b16 %v1279
  %v4356 = vunpack.c.l.b16 %v1280
  %v4357 = vunpack.c.l.b16 %v1281
  %v4358 = vunpack.c.l.b16 %v1282
  %v4359 = vunpack.c.l.b16 %v1283
  %v4360 = vunpack.c.l.b16 %v1284
  %v4361 = vunpack.c.l.b16 %v1285
  %v4362 = vunpack.c.l.b16 %v1286
  %v4363 = vunpack.c.l.b16 %v1287
  %v4364 = vunpack.c.l.b16 %v1288
  %v4365 = vunpack.c.l.b16 %v1289
  %v4366 = vunpack.c.l.b16 %v1290
  %v4367 = vunpack.c.l.b16 %v1291
  %v4368 = vunpack.c.l.b16 %v1292
  %v4369 = vunpack.c.l.b16 %v1293
  %v4370 = vunpack.c.l.b16 %v1294
  %v4371 = vunpack.c.l.b16 %v1295
  %v4372 = vunpack.c.l.b16 %v1296
  %v4373 = vunpack.c.l.b16 %v1297
  %v4374 = vunpack.c.l.b16 %v1298
  %v4375 = vunpack.c.l.b16 %v1299
  %v4376 = vunpack.c.l.b16 %v1300
  %v4377 = vunpack.c.l.b16 %v1301
  %v4378 = vunpack.c.l.b16 %v1302
  %v4379 = vunpack.c.l.b16 %v1303
  %v4380 = vunpack.c.l.b16 %v1304
  %v4381 = vunpack.c.l.b16 %v1305
  %v4382 = vunpack.c.l.b16 %v1306
  %v4383 = vunpack.c.l.b16 %v1307
  %v4384 = vunpack.c.l.b16 %v1308
  %v4385 = vunpack.c.l.b16 %v1309
  %v4386 = vunpack.c.l.b16 %v1310
  %v4387 = vunpack.c.l.b16 %v1311
  %v4388 = vunpack.c.l.b16 %v1312
  %v4389 = vunpack.c.l.b16 %v1313
  %v4390 = vunpack.c.l.b16 %v1314
  %v4391 = vunpack.c.l.b16 %v1315
  %v4392 = vunpack.c.l.b16 %v1316
  %v4393 = vunpack.c.l.b16 %v1317
  %v4394 = vunpack.c.l.b16 %v1318
  %v4395 = vunpack.c.l.b16 %v1319
  %v4396 = vunpack.c.l.b16 %v1320
  %v4397 = vunpack.c.l.b16 %v1321
  %v4398 = vunpack.c.l.b16 %v1322
  %v4399 = vunpack.c.l.b16 %v1323
  %v4400 = vunpack.c.l.b16 %v1324
  %v4401 = vunpack.c.l.b16 %v1325
  %v4402 = vunpack.c.l.b16 %v1326
  %v4403 = vunpack.c.l.b16 %v1327
  %v4404 = vunpack.c.l.b16 %v1328
  %v4405 = vunpack.c.l.b16 %v1329
  %v4406 = vunpack.c.l.b16 %v1330
  %v4407 = vunpack.c.l.b16 %v1331
  %v4408 = vunpack.c.l.b16 %v1332
  %v4409 = vunpack.c.l.b16 %v1333
  %v4410 = vunpack.c.l.b16 %v1334
  %v4411 = vunpack.c.l.b16 %v1335
  %v4412 = vunpack.c.l.b16 %v1336
  %v4413 = vunpack.c.l.b16 %v1337
  %v4414 = vunpack.c.l.b16 %v1338
  %v4415 = vunpack.c.l.b16 %v1339
  %v4416 = vunpack.c.l.b16 %v1340
  %v4417 = vunpack.c.l.b16 %v1341
  %v4418 = vunpack.c.l.b16 %v1342
  %v4419 = vunpack.c.l.b16 %v1343
  %v4420 = vunpack.c.l.b16 %v1344
  %v4421 = vunpack.c.l.b16 %v1345
  %v4422 = vunpack.c.l.b16 %v1346
  %v4423 = vunpack.c.l.b16 %v1347
  %v4424 = vunpack.c.l.b16 %v1348
  %v4425 = vunpack.c.l.b16 %v1349
  %v4426 = vunpack.c.l.b16 %v1350
  %v4427 = vunpack.c.l.b16 %v1351
  %v4428 = vunpack.c.l.b16 %v1352
  %v4429 = vunpack.c.l.b16 %v1353
  %v4430 = vunpack.c.l.b16 %v1354
  %v4431 = vunpack.c.l.b16 %v1355
  %v4432 = vunpack.c.l.b16 %v1356
  %v4433 = vunpack.c.l.b16 %v1357
  %v4434 = vunpack.c.l.b16 %v1358
  %v4435 = vunpack.c.l.b16 %v1359
  %v4436 = vunpack.c.l.b16 %v1360
  %v4437 = vunpack.c.l.b16 %v1361
  %v4438 = vunpack.c.l.b16 %v1362
  %v4439 = vunpack.c.l.b16 %v1363
  %v4440 = vunpack.c.l.b16 %v1364
  %v4441 = vunpack.c.l.b16 %v1365
  %v4442 = vunpack.c.l.b16 %v1366
  %v4443 = vunpack.c.l.b16 %v1367
  %v4444 = vunpack.c.l.b16 %v1368
  %v4445 = vunpack.c.l.b16 %v1369
  %v4446 = vunpack.c.l.b16 %v1370
  %v4447 = vunpack.c.l.b16 %v1371
  %v4448 = vunpack.c.l.b16 %v1372
  %v4449 = vunpack.c.l.b16 %v1373
  %v4450 = vunpack.c.l.b16 %v1374
  %v4451 = vunpack.c.l.b16 %v1375
  %v4452 = vunpack.c.l.b16 %v1376
  %v4453 = vunpack.c.l.b16 %v1377
  %v4454 = vunpack.c.l.b16 %v1378
  %v4455 = vunpack.c.l.b16 %v1379
  %v4456 = vunpack.c.l.b16 %v1380
  %v4457 = vunpack.c.l.b16 %v1381
  %v4458 = vunpack.c.l.b16 %v1382
  %v4459 = vunpack.c.l.b16 %v1383
  %v4460 = vunpack.c.l.b16 %v1384
  %v4461 = vunpack.c.l.b16 %v1385
  %v4462 = vunpack.c.l.b16 %v1386
  %v4463 = vunpack.c.l.b16 %v1387
  %v4464 = vunpack.c.l.b16 %v1388
  %v4465 = vunpack.c.l.b16 %v1389
  %v4466 = vunpack.c.l.b16 %v1390
  %v4467 = vunpack.c.l.b16 %v1391
  %v4468 = vunpack.c.l.b16 %v1392
  %v4469 = vunpack.c.l.b16 %v1393
  %v4470 = vunpack.c.l.b16 %v1394
  %v4471 = vunpack.c.l.b16 %v1395
  %v4472 = vunpack.c.l.b16 %v1396
  %v4473 = vunpack.c.l.b16 %v1397
  %v4474 = vunpack.c.l.b16 %v1398
  %v4475 = vunpack.c.l.b16 %v1399
  %v4476 = vunpack.c.l.b16 %v1400
  %v4477 = vunpack.c.l.b16 %v1401
  %v4478 = vunpack.c.l.b16 %v1402
  %v4479 = vunpack.c.l.b16 %v1403
  %v4480 = vunpack.c.l.b16 %v1404
  %v4481 = vunpack.c.l.b16 %v1405
  %v4482 = vunpack.c.l.b16 %v1406
  %v4483 = vunpack.c.l.b16 %v1407
  %v4484 = vunpack.c.l.b16 %v1408
  %v4485 = vunpack.c.l.b16 %v1409
  %v4486 = vunpack.c.l.b16 %v1410
  %v4487 = vunpack.c.l.b16 %v1411
  %v4488 = vunpack.c.l.b16 %v1412
  %v4489 = vunpack.c.l.b16 %v1413
  %v4490 = vunpack.c.l.b16 %v1414
  %v4491 = vunpack.c.l.b16 %v1415
  %v4492 = vunpack.c.l.b16 %v1416
  %v4493 = vunpack.c.l.b16 %v1417
  %v4494 = vunpack.c.l.b16 %v1418
  %v4495 = vunpack.c.l.b16 %v1419
  %v4496 = vunpack.c.l.b16 %v1420
  %v4497 = vunpack.c.l.b16 %v1421
  %v4498 = vunpack.c.l.b16 %v1422
  %v4499 = vunpack.c.l.b16 %v1423
  %v4500 = vunpack.c.l.b16 %v1424
  %v4501 = vunpack.c.l.b16 %v1425
  %v4502 = vunpack.c.l.b16 %v1426
  %v4503 = vunpack.c.l.b16 %v1427
  %v4504 = vunpack.c.l.b16 %v1428
  %v4505 = vunpack.c.l.b16 %v1429
  %v4506 = vunpack.c.l.b16 %v1430
  %v4507 = vunpack.c.l.b16 %v1431
  %v4508 = vunpack.c.l.b16 %v1432
  %v4509 = vunpack.c.l.b16 %v1433
  %v4510 = vunpack.c.l.b16 %v1434
  %v4511 = vunpack.c.l.b16 %v1435
  %v4512 = vunpack.c.l.b16 %v1436
  %v4513 = vunpack.c.l.b16 %v1437
  %v4514 = vunpack.c.l.b16 %v1438
  %v4515 = vunpack.c.l.b16 %v1439
  %v4516 = vunpack.c.l.b16 %v1440
  %v4517 = vunpack.c.l.b16 %v1441
  %v4518 = vunpack.c.l.b16 %v1442
  %v4519 = vunpack.c.l.b16 %v1443
  %v4520 = vunpack.c.l.b16 %v1444
  %v4521 = vunpack.c.l.b16 %v1445
  %v4522 = vunpack.c.l.b16 %v1446
  %v4523 = vunpack.c.l.b16 %v1447
  %v4524 = vunpack.c.l.b16 %v1448
  %v4525 = vunpack.c.l.b16 %v1449
  %v4526 = vunpack.c.l.b16 %v1450
  %v4527 = vunpack.c.l.b16 %v1451
  %v4528 = vunpack.c.l.b16 %v1452
  %v4529 = vunpack.c.l.b16 %v1453
  %v4530 = vunpack.c.l.b16 %v1454
  %v4531 = vunpack.c.l.b16 %v1455
  %v4532 = vunpack.c.l.b16 %v1456
  %v4533 = vunpack.c.l.b16 %v1457
  %v4534 = vunpack.c.l.b16 %v1458
  %v4535 = vunpack.c.l.b16 %v1459
  %v4536 = vunpack.c.l.b16 %v1460
  %v4537 = vunpack.c.l.b16 %v1461
  %v4538 = vunpack.c.l.b16 %v1462
  %v4539 = vunpack.c.l.b16 %v1463
  %v4540 = vunpack.c.l.b16 %v1464
  %v4541 = vunpack.c.l.b16 %v1465
  %v4542 = vunpack.c.l.b16 %v1466
  %v4543 = vunpack.c.l.b16 %v1467
  %v4544 = vunpack.c.l.b16 %v1468
  %v4545 = vunpack.c.l.b16 %v1469
  %v4546 = vunpack.c.l.b16 %v1470
  %v4547 = vunpack.c.l.b16 %v1471
  %v4548 = vunpack.c.l.b16 %v1472
  %v4549 = vunpack.c.l.b16 %v1473
  %v4550 = vunpack.c.l.b16 %v1474
  %v4551 = vunpack.c.l.b16 %v1475
  %v4552 = vunpack.c.l.b16 %v1476
  %v4553 = vunpack.c.l.b16 %v1477
  %v4554 = vunpack.c.l.b16 %v1478
  %v4555 = vunpack.c.l.b16 %v1479
  %v4556 = vunpack.c.l.b16 %v1480
  %v4557 = vunpack.c.l.b16 %v1481
  %v4558 = vunpack.c.l.b16 %v1482
  %v4559 = vunpack.c.l.b16 %v1483
  %v4560 = vunpack.c.l.b16 %v1484
  %v4561 = vunpack.c.l.b16 %v1485
  %v4562 = vunpack.c.l.b16 %v1486
  %v4563 = vunpack.c.l.b16 %v1487
  %v4564 = vunpack.c.l.b16 %v1488
  %v4565 = vunpack.c.l.b16 %v1489
  %v4566 = vunpack.c.l.b16 %v1490
  %v4567 = vunpack.c.l.b16 %v1491
  %v4568 = vunpack.c.l.b16 %v1492
  %v4569 = vunpack.c.l.b16 %v1493
  %v4570 = vunpack.c.l.b16 %v1494
  %v4571 = vunpack.c.l.b16 %v1495
  %v4572 = vunpack.c.l.b16 %v1496
  %v4573 = vunpack.c.l.b16 %v1497
  %v4574 = vunpack.c.l.b16 %v1498
  %v4575 = vunpack.c.l.b16 %v1499
  %v4576 = vunpack.c.l.b16 %v1500
  %v4577 = vunpack.c.l.b16 %v1501
  %v4578 = vunpack.c.l.b16 %v1502
  %v4579 = vunpack.c.l.b16 %v1503
  %v4580 = vunpack.c.l.b16 %v1504
  %v4581 = vunpack.c.l.b16 %v1505
  %v4582 = vunpack.c.l.b16 %v1506
  %v4583 = vunpack.c.l.b16 %v1507
  %v4584 = vunpack.c.l.b16 %v1508
  %v4585 = vunpack.c.l.b16 %v1509
  %v4586 = vunpack.c.l.b16 %v1510
  %v4587 = vunpack.c.l.b16 %v1511
  %v4588 = vunpack.c.l.b16 %v1512
  %v4589 = vunpack.c.l.b16 %v1513
  %v4590 = vunpack.c.l.b16 %v1514
  %v4591 = vunpack.c.l.b16 %v1515
  %v4592 = vunpack.c.l.b16 %v1516
  %v4593 = vunpack.c.l.b16 %v1517
  %v4594 = vunpack.c.l.b16 %v1518
  %v4595 = vunpack.c.l.b16 %v1519
  %v4596 = vunpack.c.l.b16 %v1520
  %v4597 = vunpack.c.l.b16 %v1521
  %v4598 = vunpack.c.l.b16 %v1522
  %v4599 = vunpack.c.l.b16 %v1523
  %v4600 = vunpack.c.l.b16 %v1524
  %v4601 = vunpack.c.l.b16 %v1525
  %v4602 = vunpack.c.l.b16 %v1526
  %v4603 = vunpack.c.l.b16 %v1527
  %v4604 = vunpack.c.l.b16 %v1528
  %v4605 = vunpack.c.l.b16 %v1529
  %v4606 = vunpack.c.l.b16 %v1530
  %v4607 = vunpack.c.l.b16 %v1531
  %v4608 = vunpack.c.l.b16 %v1532
  %v4609 = vunpack.c.l.b16 %v1533
  %v4610 = vunpack.c.l.b16 %v1534
  %v4611 = vunpack.c.l.b16 %v1535
  %v4612 = vunpack.c.l.b16 %v1536
  %v4613 = vunpack.c.l.b16 %v1537
  %v4614 = vunpack.c.l.b16 %v1538
  %v4615 = vunpack.c.l.b16 %v1539
  %v4616 = vunpack.c.l.b16 %v1540
  %v4617 = vunpack.c.l.b16 %v1541
  %v4618 = vunpack.c.l.b16 %v1542
  %v4619 = vunpack.c.l.b16 %v1543
  %v4620 = vunpack.c.l.b16 %v1544
  %v4621 = vunpack.c.l.b16 %v1545
  %v4622 = vunpack.c.l.b16 %v1546
  %v4623 = vunpack.c.l.b16 %v1547
  %v4624 = vunpack.c.l.b16 %v1548
  %v4625 = vunpack.c.l.b16 %v1549
  %v4626 = vunpack.c.l.b16 %v1550
  %v4627 = vunpack.c.l.b16 %v1551
  %v4628 = vunpack.c.l.b16 %v1552
  %v4629 = vunpack.c.l.b16 %v1553
  %v4630 = vunpack.c.l.b16 %v1554
  %v4631 = vunpack.c.l.b16 %v1555
  %v4632 = vunpack.c.l.b16 %v1556
  %v4633 = vunpack.c.l.b16 %v1557
  %v4634 = vunpack.c.l.b16 %v1558
  %v4635 = vunpack.c.l.b16 %v1559
  %v4636 = vunpack.c.l.b16 %v1560
  %v4637 = vunpack.c.l.b16 %v1561
  %v4638 = vunpack.c.l.b16 %v1562
  %v4639 = vunpack.c.l.b16 %v1563
  %v4640 = vunpack.c.l.b16 %v1564
  %v4641 = vunpack.c.l.b16 %v1565
  %v4642 = vunpack.c.l.b16 %v1566
  %v4643 = vunpack.c.l.b16 %v1567
  %v4644 = vunpack.c.l.b16 %v1568
  %v4645 = vunpack.c.l.b16 %v1569
  %v4646 = vunpack.c.l.b16 %v1570
  %v4647 = vunpack.c.l.b16 %v1571
  %v4648 = vunpack.c.l.b16 %v1572
  %v4649 = vunpack.c.l.b16 %v1573
  %v4650 = vunpack.c.l.b16 %v1574
  %v4651 = vunpack.c.l.b16 %v1575
  %v4652 = vunpack.c.l.b16 %v1576
  %v4653 = vunpack.c.l.b16 %v1577
  %v4654 = vunpack.c.l.b16 %v1578
  %v4655 = vunpack.c.l.b16 %v1579
  %v4656 = vunpack.c.l.b16 %v1580
  %v4657 = vunpack.c.l.b16 %v1581
  %v4658 = vunpack.c.l.b16 %v1582
  %v4659 = vunpack.c.l.b16 %v1583
  %v4660 = vunpack.c.l.b16 %v1584
  %v4661 = vunpack.c.l.b16 %v1585
  %v4662 = vunpack.c.l.b16 %v1586
  %v4663 = vunpack.c.l.b16 %v1587
  %v4664 = vunpack.c.l.b16 %v1588
  %v4665 = vunpack.c.l.b16 %v1589
  %v4666 = vunpack.c.l.b16 %v1590
  %v4667 = vunpack.c.l.b16 %v1591
  %v4668 = vunpack.c.l.b16 %v1592
  %v4669 = vunpack.c.l.b16 %v1593
  %v4670 = vunpack.c.l.b16 %v1594
  %v4671 = vunpack.c.l.b16 %v1595
  %v4672 = vunpack.c.l.b16 %v1596
  %v4673 = vunpack.c.l.b16 %v1597
  %v4674 = vunpack.c.l.b16 %v1598
  %v4675 = vunpack.c.l.b16 %v1599
  %v4676 = vunpack.c.l.b16 %v1600
  %v4677 = vunpack.c.l.b16 %v1601
  %v4678 = vunpack.c.l.b16 %v1602
  %v4679 = vunpack.c.l.b16 %v1603
  %v4680 = vunpack.c.l.b16 %v1604
  %v4681 = vunpack.c.l.b16 %v1605
  %v4682 = vunpack.c.l.b16 %v1606
  %v4683 = vunpack.c.l.b16 %v1607
  %v4684 = vunpack.c.l.b16 %v1608
  %v4685 = vunpack.c.l.b16 %v1609
  %v4686 = vunpack.c.l.b16 %v1610
  %v4687 = vunpack.c.l.b16 %v1611
  %v4688 = vunpack.c.l.b16 %v1612
  %v4689 = vunpack.c.l.b16 %v1613
  %v4690 = vunpack.c.l.b16 %v1614
  %v4691 = vunpack.c.l.b16 %v1615
  %v4692 = vunpack.c.l.b16 %v1616
  %v4693 = vunpack.c.l.b16 %v1617
  %v4694 = vunpack.c.l.b16 %v1618
  %v4695 = vunpack.c.l.b16 %v1619
  %v4696 = vunpack.c.l.b16 %v1620
  %v4697 = vunpack.c.l.b16 %v1621
  %v4698 = vunpack.c.l.b16 %v1622
  %v4699 = vunpack.c.l.b16 %v1623
  %v4700 = vunpack.c.l.b16 %v1624
  %v4701 = vunpack.c.l.b16 %v1625
  %v4702 = vunpack.c.l.b16 %v1626
  %v4703 = vunpack.c.l.b16 %v1627
  %v4704 = vunpack.c.l.b16 %v1628
  %v4705 = vunpack.c.l.b16 %v1629
  %v4706 = vunpack.c.l.b16 %v1630
  %v4707 = vunpack.c.l.b16 %v1631
  %v4708 = vunpack.c.l.b16 %v1632
  %v4709 = vunpack.c.l.b16 %v1633
  %v4710 = vunpack.c.l.b16 %v1634
  %v4711 = vunpack.c.l.b16 %v1635
  %v4712 = vunpack.c.l.b16 %v1636
  %v4713 = vunpack.c.l.b16 %v1637
  %v4714 = vunpack.c.l.b16 %v1638
  %v4715 = vunpack.c.l.b16 %v1639
  %v4716 = vunpack.c.l.b16 %v1640
  %v4717 = vunpack.c.l.b16 %v1641
  %v4718 = vunpack.c.l.b16 %v1642
  %v4719 = vunpack.c.l.b16 %v1643
  %v4720 = vunpack.c.l.b16 %v1644
  %v4721 = vunpack.c.l.b16 %v1645
  %v4722 = vunpack.c.l.b16 %v1646
  %v4723 = vunpack.c.l.b16 %v1647
  %v4724 = vunpack.c.l.b16 %v1648
  %v4725 = vunpack.c.l.b16 %v1649
  %v4726 = vunpack.c.l.b16 %v1650
  %v4727 = vunpack.c.l.b16 %v1651
  %v4728 = vunpack.c.l.b16 %v1652
  %v4729 = vunpack.c.l.b16 %v1653
  %v4730 = vunpack.c.l.b16 %v1654
  %v4731 = vunpack.c.l.b16 %v1655
  %v4732 = vunpack.c.l.b16 %v1656
  %v4733 = vunpack.c.l.b16 %v1657
  %v4734 = vunpack.c.l.b16 %v1658
  %v4735 = vunpack.c.l.b16 %v1659
  %v4736 = vunpack.c.l.b16 %v1660
  %v4737 = vunpack.c.l.b16 %v1661
  %v4738 = vunpack.c.l.b16 %v1662
  %v4739 = vunpack.c.l.b16 %v1663
  %v4740 = vunpack.c.l.b16 %v1664
  %v4741 = vunpack.c.l.b16 %v1665
  %v4742 = vunpack.c.l.b16 %v1666
  %v4743 = vunpack.c.l.b16 %v1667
  %v4744 = vunpack.c.l.b16 %v1668
  %v4745 = vunpack.c.l.b16 %v1669
  %v4746 = vunpack.c.l.b16 %v1670
  %v4747 = vunpack.c.l.b16 %v1671
  %v4748 = vunpack.c.l.b16 %v1672
  %v4749 = vunpack.c.l.b16 %v1673
  %v4750 = vunpack.c.l.b16 %v1674
  %v4751 = vunpack.c.l.b16 %v1675
  %v4752 = vunpack.c.l.b16 %v1676
  %v4753 = vunpack.c.l.b16 %v1677
  %v4754 = vunpack.c.l.b16 %v1678
  %v4755 = vunpack.c.l.b16 %v1679
  %v4756 = vunpack.c.l.b16 %v1680
  %v4757 = vunpack.c.l.b16 %v1681
  %v4758 = vunpack.c.l.b16 %v1682
  %v4759 = vunpack.c.l.b16 %v1683
  %v4760 = vunpack.c.l.b16 %v1684
  %v4761 = vunpack.c.l.b16 %v1685
  %v4762 = vunpack.c.l.b16 %v1686
  %v4763 = vunpack.c.l.b16 %v1687
  %v4764 = vunpack.c.l.b16 %v1688
  %v4765 = vunpack.c.l.b16 %v1689
  %v4766 = vunpack.c.l.b16 %v1690
  %v4767 = vunpack.c.l.b16 %v1691
  %v4768 = vunpack.c.l.b16 %v1692
  %v4769 = vunpack.c.l.b16 %v1693
  %v4770 = vunpack.c.l.b16 %v1694
  %v4771 = vunpack.c.l.b16 %v1695
  %v4772 = vunpack.c.l.b16 %v1696
  %v4773 = vunpack.c.l.b16 %v1697
  %v4774 = vunpack.c.l.b16 %v1698
  %v4775 = vunpack.c.l.b16 %v1699
  %v4776 = vunpack.c.l.b16 %v1700
  %v4777 = vunpack.c.l.b16 %v1701
  %v4778 = vunpack.c.l.b16 %v1702
  %v4779 = vunpack.c.l.b16 %v1703
  %v4780 = vunpack.c.l.b16 %v1704
  %v4781 = vunpack.c.l.b16 %v1705
  %v4782 = vunpack.c.l.b16 %v1706
  %v4783 = vunpack.c.l.b16 %v1707
  %v4784 = vunpack.c.l.b16 %v1708
  %v4785 = vunpack.c.l.b16 %v1709
  %v4786 = vunpack.c.l.b16 %v1710
  %v4787 = vunpack.c.l.b16 %v1711
  %v4788 = vunpack.c.l.b16 %v1712
  %v4789 = vunpack.c.l.b16 %v1713
  %v4790 = vunpack.c.l.b16 %v1714
  %v4791 = vunpack.c.l.b16 %v1715
  %v4792 = vunpack.c.l.b16 %v1716
  %v4793 = vunpack.c.l.b16 %v1717
  %v4794 = vunpack.c.l.b16 %v1718
  %v4795 = vunpack.c.l.b16 %v1719
  %v4796 = vunpack.c.l.b16 %v1720
  %v4797 = vunpack.c.l.b16 %v1721
  %v4798 = vunpack.c.l.b16 %v1722
  %v4799 = vunpack.c.l.b16 %v1723
  %v4800 = vunpack.c.l.b16 %v1724
  %v4801 = vunpack.c.l.b16 %v1725
  %v4802 = vunpack.c.l.b16 %v1726
  %v4803 = vunpack.c.l.b16 %v1727
  %v4804 = vunpack.c.l.b16 %v1728
  %v4805 = vunpack.c.l.b16 %v1729
  %v4806 = vunpack.c.l.b16 %v1730
  %v4807 = vunpack.c.l.b16 %v1731
  %v4808 = vunpack.c.l.b16 %v1732
  %v4809 = vunpack.c.l.b16 %v1733
  %v4810 = vunpack.c.l.b16 %v1734
  %v4811 = vunpack.c.l.b16 %v1735
  %v4812 = vunpack.c.l.b16 %v1736
  %v4813 = vunpack.c.l.b16 %v1737
  %v4814 = vunpack.c.l.b16 %v1738
  %v4815 = vunpack.c.l.b16 %v1739
  %v4816 = vunpack.c.l.b16 %v1740
  %v4817 = vunpack.c.l.b16 %v1741
  %v4818 = vunpack.c.l.b16 %v1742
  %v4819 = vunpack.c.l.b16 %v1743
  %v4820 = vunpack.c.l.b16 %v1744
  %v4821 = vunpack.c.l.b16 %v1745
  %v4822 = vunpack.c.l.b16 %v1746
  %v4823 = vunpack.c.l.b16 %v1747
  %v4824 = vunpack.c.l.b16 %v1748
  %v4825 = vunpack.c.l.b16 %v1749
  %v4826 = vunpack.c.l.b16 %v1750
  %v4827 = vunpack.c.l.b16 %v1751
  %v4828 = vunpack.c.l.b16 %v1752
  %v4829 = vunpack.c.l.b16 %v1753
  %v4830 = vpack.c.b16 %v3295, %v3294
  %v4831 = vpack.c.b16 %v3297, %v3296
  %v4832 = vpack.c.b16 %v3299, %v3298
  %v4833 = vpack.c.b16 %v3301, %v3300
  %v4834 = vpack.c.b16 %v3303, %v3302
  %v4835 = vpack.c.b16 %v3305, %v3304
  %v4836 = vpack.c.b16 %v3307, %v3306
  %v4837 = vpack.c.b16 %v3309, %v3308
  %v4838 = vpack.c.b16 %v3311, %v3310
  %v4839 = vpack.c.b16 %v3313, %v3312
  %v4840 = vpack.c.b16 %v3315, %v3314
  %v4841 = vpack.c.b16 %v3317, %v3316
  %v4842 = vpack.c.b16 %v3319, %v3318
  %v4843 = vpack.c.b16 %v3321, %v3320
  %v4844 = vpack.c.b16 %v3323, %v3322
  %v4845 = vpack.c.b16 %v3325, %v3324
  %v4846 = vpack.c.b16 %v3327, %v3326
  %v4847 = vpack.c.b16 %v3329, %v3328
  %v4848 = vpack.c.b16 %v3331, %v3330
  %v4849 = vpack.c.b16 %v3333, %v3332
  %v4850 = vpack.c.b16 %v3335, %v3334
  %v4851 = vpack.c.b16 %v3337, %v3336
  %v4852 = vpack.c.b16 %v3339, %v3338
  %v4853 = vpack.c.b16 %v3341, %v3340
  %v4854 = vpack.c.b16 %v3343, %v3342
  %v4855 = vpack.c.b16 %v3345, %v3344
  %v4856 = vpack.c.b16 %v3347, %v3346
  %v4857 = vpack.c.b16 %v3349, %v3348
  %v4858 = vpack.c.b16 %v3351, %v3350
  %v4859 = vpack.c.b16 %v3353, %v3352
  %v4860 = vpack.c.b16 %v3355, %v3354
  %v4861 = vpack.c.b16 %v3357, %v3356
  %v4862 = vpack.c.b16 %v3359, %v3358
  %v4863 = vpack.c.b16 %v3361, %v3360
  %v4864 = vpack.c.b16 %v3363, %v3362
  %v4865 = vpack.c.b16 %v3365, %v3364
  %v4866 = vpack.c.b16 %v3367, %v3366
  %v4867 = vpack.c.b16 %v3369, %v3368
  %v4868 = vpack.c.b16 %v3371, %v3370
  %v4869 = vpack.c.b16 %v3373, %v3372
  %v4870 = vpack.c.b16 %v3375, %v3374
  %v4871 = vpack.c.b16 %v3377, %v3376
  %v4872 = vpack.c.b16 %v3379, %v3378
  %v4873 = vpack.c.b16 %v3381, %v3380
  %v4874 = vpack.c.b16 %v3383, %v3382
  %v4875 = vpack.c.b16 %v3385, %v3384
  %v4876 = vpack.c.b16 %v3387, %v3386
  %v4877 = vpack.c.b16 %v3389, %v3388
  %v4878 = vpack.c.b16 %v3391, %v3390
  %v4879 = vpack.c.b16 %v3393, %v3392
  %v4880 = vpack.c.b16 %v3395, %v3394
  %v4881 = vpack.c.b16 %v3397, %v3396
  %v4882 = vpack.c.b16 %v3399, %v3398
  %v4883 = vpack.c.b16 %v3401, %v3400
  %v4884 = vpack.c.b16 %v3403, %v3402
  %v4885 = vpack.c.b16 %v3405, %v3404
  %v4886 = vpack.c.b16 %v3407, %v3406
  %v4887 = vpack.c.b16 %v3409, %v3408
  %v4888 = vpack.c.b16 %v3411, %v3410
  %v4889 = vpack.c.b16 %v3413, %v3412
  %v4890 = vpack.c.b16 %v3415, %v3414
  %v4891 = vpack.c.b16 %v3417, %v3416
  %v4892 = vpack.c.b16 %v3419, %v3418
  %v4893 = vpack.c.b16 %v3421, %v3420
  %v4894 = vpack.c.b16 %v3423, %v3422
  %v4895 = vpack.c.b16 %v3425, %v3424
  %v4896 = vpack.c.b16 %v3427, %v3426
  %v4897 = vpack.c.b16 %v3429, %v3428
  %v4898 = vpack.c.b16 %v3431, %v3430
  %v4899 = vpack.c.b16 %v3433, %v3432
  %v4900 = vpack.c.b16 %v3435, %v3434
  %v4901 = vpack.c.b16 %v3437, %v3436
  %v4902 = vpack.c.b16 %v3439, %v3438
  %v4903 = vpack.c.b16 %v3441, %v3440
  %v4904 = vpack.c.b16 %v3443, %v3442
  %v4905 = vpack.c.b16 %v3445, %v3444
  %v4906 = vpack.c.b16 %v3447, %v3446
  %v4907 = vpack.c.b16 %v3449, %v3448
  %v4908 = vpack.c.b16 %v3451, %v3450
  %v4909 = vpack.c.b16 %v3453, %v3452
  %v4910 = vpack.c.b16 %v3455, %v3454
  %v4911 = vpack.c.b16 %v3457, %v3456
  %v4912 = vpack.c.b16 %v3459, %v3458
  %v4913 = vpack.c.b16 %v3461, %v3460
  %v4914 = vpack.c.b16 %v3463, %v3462
  %v4915 = vpack.c.b16 %v3465, %v3464
  %v4916 = vpack.c.b16 %v3467, %v3466
  %v4917 = vpack.c.b16 %v3469, %v3468
  %v4918 = vpack.c.b16 %v3471, %v3470
  %v4919 = vpack.c.b16 %v3473, %v3472
  %v4920 = vpack.c.b16 %v3475, %v3474
  %v4921 = vpack.c.b16 %v3477, %v3476
  %v4922 = vpack.c.b16 %v3479, %v3478
  %v4923 = vpack.c.b16 %v3481, %v3480
  %v4924 = vpack.c.b16 %v3483, %v3482
  %v4925 = vpack.c.b16 %v3485, %v3484
  %v4926 = vpack.c.b16 %v3487, %v3486
  %v4927 = vpack.c.b16 %v3489, %v3488
  %v4928 = vpack.c.b16 %v3491, %v3490
  %v4929 = vpack.c.b16 %v3493, %v3492
  %v4930 = vpack.c.b16 %v3495, %v3494
  %v4931 = vpack.c.b16 %v3497, %v3496
  %v4932 = vpack.c.b16 %v3499, %v3498
  %v4933 = vpack.c.b16 %v3501, %v3500
  %v4934 = vpack.c.b16 %v3503, %v3502
  %v4935 = vpack.c.b16 %v3505, %v3504
  %v4936 = vpack.c.b16 %v3507, %v3506
  %v4937 = vpack.c.b16 %v3509, %v3508
  %v4938 = vpack.c.b16 %v3511, %v3510
  %v4939 = vpack.c.b16 %v3513, %v3512
  %v4940 = vpack.c.b16 %v3515, %v3514
  %v4941 = vpack.c.b16 %v3517, %v3516
  %v4942 = vpack.c.b16 %v3519, %v3518
  %v4943 = vpack.c.b16 %v3521, %v3520
  %v4944 = vpack.c.b16 %v3523, %v3522
  %v4945 = vpack.c.b16 %v3525, %v3524
  %v4946 = vpack.c.b16 %v3527, %v3526
  %v4947 = vpack.c.b16 %v3529, %v3528
  %v4948 = vpack.c.b16 %v3531, %v3530
  %v4949 = vpack.c.b16 %v3533, %v3532
  %v4950 = vpack.c.b16 %v3535, %v3534
  %v4951 = vpack.c.b16 %v3537, %v3536
  %v4952 = vpack.c.b16 %v3539, %v3538
  %v4953 = vpack.c.b16 %v3541, %v3540
  %v4954 = vpack.c.b16 %v3543, %v3542
  %v4955 = vpack.c.b16 %v3545, %v3544
  %v4956 = vpack.c.b16 %v3547, %v3546
  %v4957 = vpack.c.b16 %v3549, %v3548
  %v4958 = vpack.c.b16 %v3551, %v3550
  %v4959 = vpack.c.b16 %v3553, %v3552
  %v4960 = vpack.c.b16 %v3555, %v3554
  %v4961 = vpack.c.b16 %v3557, %v3556
  %v4962 = vpack.c.b16 %v3559, %v3558
  %v4963 = vpack.c.b16 %v3561, %v3560
  %v4964 = vpack.c.b16 %v3563, %v3562
  %v4965 = vpack.c.b16 %v3565, %v3564
  %v4966 = vpack.c.b16 %v3567, %v3566
  %v4967 = vpack.c.b16 %v3569, %v3568
  %v4968 = vpack.c.b16 %v3571, %v3570
  %v4969 = vpack.c.b16 %v3573, %v3572
  %v4970 = vpack.c.b16 %v3575, %v3574
  %v4971 = vpack.c.b16 %v3577, %v3576
  %v4972 = vpack.c.b16 %v3579, %v3578
  %v4973 = vpack.c.b16 %v3581, %v3580
  %v4974 = vpack.c.b16 %v3583, %v3582
  %v4975 = vpack.c.b16 %v3585, %v3584
  %v4976 = vpack.c.b16 %v3587, %v3586
  %v4977 = vpack.c.b16 %v3589, %v3588
  %v4978 = vpack.c.b16 %v3591, %v3590
  %v4979 = vpack.c.b16 %v3593, %v3592
  %v4980 = vpack.c.b16 %v3595, %v3594
  %v4981 = vpack.c.b16 %v3597, %v3596
  %v4982 = vpack.c.b16 %v3599, %v3598
  %v4983 = vpack.c.b16 %v3601, %v3600
  %v4984 = vpack.c.b16 %v3603, %v3602
  %v4985 = vpack.c.b16 %v3605, %v3604
  %v4986 = vpack.c.b16 %v3607, %v3606
  %v4987 = vpack.c.b16 %v3609, %v3608
  %v4988 = vpack.c.b16 %v3611, %v3610
  %v4989 = vpack.c.b16 %v3613, %v3612
  %v4990 = vpack.c.b16 %v3615, %v3614
  %v4991 = vpack.c.b16 %v3617, %v3616
  %v4992 = vpack.c.b16 %v3619, %v3618
  %v4993 = vpack.c.b16 %v3621, %v3620
  %v4994 = vpack.c.b16 %v3623, %v3622
  %v4995 = vpack.c.b16 %v3625, %v3624
  %v4996 = vpack.c.b16 %v3627, %v3626
  %v4997 = vpack.c.b16 %v3629, %v3628
  %v4998 = vpack.c.b16 %v3631, %v3630
  %v4999 = vpack.c.b16 %v3633, %v3632
  %v5000 = vpack.c.b16 %v3635, %v3634
  %v5001 = vpack.c.b16 %v3637, %v3636
  %v5002 = vpack.c.b16 %v3639, %v3638
  %v5003 = vpack.c.b16 %v3641, %v3640
  %v5004 = vpack.c.b16 %v3643, %v3642
  %v5005 = vpack.c.b16 %v3645, %v3644
  %v5006 = vpack.c.b16 %v3647, %v3646
  %v5007 = vpack.c.b16 %v3649, %v3648
  %v5008 = vpack.c.b16 %v3651, %v3650
  %v5009 = vpack.c.b16 %v3653, %v3652
  %v5010 = vpack.c.b16 %v3655, %v3654
  %v5011 = vpack.c.b16 %v3657, %v3656
  %v5012 = vpack.c.b16 %v3659, %v3658
  %v5013 = vpack.c.b16 %v3661, %v3660
  %v5014 = vpack.c.b16 %v3663, %v3662
  %v5015 = vpack.c.b16 %v3665, %v3664
  %v5016 = vpack.c.b16 %v3667, %v3666
  %v5017 = vpack.c.b16 %v3669, %v3668
  %v5018 = vpack.c.b16 %v3671, %v3670
  %v5019 = vpack.c.b16 %v3673, %v3672
  %v5020 = vpack.c.b16 %v3675, %v3674
  %v5021 = vpack.c.b16 %v3677, %v3676
  %v5022 = vpack.c.b16 %v3679, %v3678
  %v5023 = vpack.c.b16 %v3681, %v3680
  %v5024 = vpack.c.b16 %v3683, %v3682
  %v5025 = vpack.c.b16 %v3685, %v3684
  %v5026 = vpack.c.b16 %v3687, %v3686
  %v5027 = vpack.c.b16 %v3689, %v3688
  %v5028 = vpack.c.b16 %v3691, %v3690
  %v5029 = vpack.c.b16 %v3693, %v3692
  %v5030 = vpack.c.b16 %v3695, %v3694
  %v5031 = vpack.c.b16 %v3697, %v3696
  %v5032 = vpack.c.b16 %v3699, %v3698
  %v5033 = vpack.c.b16 %v3701, %v3700
  %v5034 = vpack.c.b16 %v3703, %v3702
  %v5035 = vpack.c.b16 %v3705, %v3704
  %v5036 = vpack.c.b16 %v3707, %v3706
  %v5037 = vpack.c.b16 %v3709, %v3708
  %v5038 = vpack.c.b16 %v3711, %v3710
  %v5039 = vpack.c.b16 %v3713, %v3712
  %v5040 = vpack.c.b16 %v3715, %v3714
  %v5041 = vpack.c.b16 %v3717, %v3716
  %v5042 = vpack.c.b16 %v3719, %v3718
  %v5043 = vpack.c.b16 %v3721, %v3720
  %v5044 = vpack.c.b16 %v3723, %v3722
  %v5045 = vpack.c.b16 %v3725, %v3724
  %v5046 = vpack.c.b16 %v3727, %v3726
  %v5047 = vpack.c.b16 %v3729, %v3728
  %v5048 = vpack.c.b16 %v3731, %v3730
  %v5049 = vpack.c.b16 %v3733, %v3732
  %v5050 = vpack.c.b16 %v3735, %v3734
  %v5051 = vpack.c.b16 %v3737, %v3736
  %v5052 = vpack.c.b16 %v3739, %v3738
  %v5053 = vpack.c.b16 %v3741, %v3740
  %v5054 = vpack.c.b16 %v3743, %v3742
  %v5055 = vpack.c.b16 %v3745, %v3744
  %v5056 = vpack.c.b16 %v3747, %v3746
  %v5057 = vpack.c.b16 %v3749, %v3748
  %v5058 = vpack.c.b16 %v3751, %v3750
  %v5059 = vpack.c.b16 %v3753, %v3752
  %v5060 = vpack.c.b16 %v3755, %v3754
  %v5061 = vpack.c.b16 %v3757, %v3756
  %v5062 = vpack.c.b16 %v3759, %v3758
  %v5063 = vpack.c.b16 %v3761, %v3760
  %v5064 = vpack.c.b16 %v3763, %v3762
  %v5065 = vpack.c.b16 %v3765, %v3764
  %v5066 = vpack.c.b16 %v3767, %v3766
  %v5067 = vpack.c.b16 %v3769, %v3768
  %v5068 = vpack.c.b16 %v3771, %v3770
  %v5069 = vpack.c.b16 %v3773, %v3772
  %v5070 = vpack.c.b16 %v3775, %v3774
  %v5071 = vpack.c.b16 %v3777, %v3776
  %v5072 = vpack.c.b16 %v3779, %v3778
  %v5073 = vpack.c.b16 %v3781, %v3780
  %v5074 = vpack.c.b16 %v3783, %v3782
  %v5075 = vpack.c.b16 %v3785, %v3784
  %v5076 = vpack.c.b16 %v3787, %v3786
  %v5077 = vpack.c.b16 %v3789, %v3788
  %v5078 = vpack.c.b16 %v3791, %v3790
  %v5079 = vpack.c.b16 %v3793, %v3792
  %v5080 = vpack.c.b16 %v3795, %v3794
  %v5081 = vpack.c.b16 %v3797, %v3796
  %v5082 = vpack.c.b16 %v3799, %v3798
  %v5083 = vpack.c.b16 %v3801, %v3800
  %v5084 = vpack.c.b16 %v3803, %v3802
  %v5085 = vpack.c.b16 %v3805, %v3804
  %v5086 = vpack.c.b16 %v3807, %v3806
  %v5087 = vpack.c.b16 %v3809, %v3808
  %v5088 = vpack.c.b16 %v3811, %v3810
  %v5089 = vpack.c.b16 %v3813, %v3812
  %v5090 = vpack.c.b16 %v3815, %v3814
  %v5091 = vpack.c.b16 %v3817, %v3816
  %v5092 = vpack.c.b16 %v3819, %v3818
  %v5093 = vpack.c.b16 %v3821, %v3820
  %v5094 = vpack.c.b16 %v3823, %v3822
  %v5095 = vpack.c.b16 %v3825, %v3824
  %v5096 = vpack.c.b16 %v3827, %v3826
  %v5097 = vpack.c.b16 %v3829, %v3828
  %v5098 = vpack.c.b16 %v3831, %v3830
  %v5099 = vpack.c.b16 %v3833, %v3832
  %v5100 = vpack.c.b16 %v3835, %v3834
  %v5101 = vpack.c.b16 %v3837, %v3836
  %v5102 = vpack.c.b16 %v3839, %v3838
  %v5103 = vpack.c.b16 %v3841, %v3840
  %v5104 = vpack.c.b16 %v3843, %v3842
  %v5105 = vpack.c.b16 %v3845, %v3844
  %v5106 = vpack.c.b16 %v3847, %v3846
  %v5107 = vpack.c.b16 %v3849, %v3848
  %v5108 = vpack.c.b16 %v3851, %v3850
  %v5109 = vpack.c.b16 %v3853, %v3852
  %v5110 = vpack.c.b16 %v3855, %v3854
  %v5111 = vpack.c.b16 %v3857, %v3856
  %v5112 = vpack.c.b16 %v3859, %v3858
  %v5113 = vpack.c.b16 %v3861, %v3860
  %v5114 = vpack.c.b16 %v3863, %v3862
  %v5115 = vpack.c.b16 %v3865, %v3864
  %v5116 = vpack.c.b16 %v3867, %v3866
  %v5117 = vpack.c.b16 %v3869, %v3868
  %v5118 = vpack.c.b16 %v3871, %v3870
  %v5119 = vpack.c.b16 %v3873, %v3872
  %v5120 = vpack.c.b16 %v3875, %v3874
  %v5121 = vpack.c.b16 %v3877, %v3876
  %v5122 = vpack.c.b16 %v3879, %v3878
  %v5123 = vpack.c.b16 %v3881, %v3880
  %v5124 = vpack.c.b16 %v3883, %v3882
  %v5125 = vpack.c.b16 %v3885, %v3884
  %v5126 = vpack.c.b16 %v3887, %v3886
  %v5127 = vpack.c.b16 %v3889, %v3888
  %v5128 = vpack.c.b16 %v3891, %v3890
  %v5129 = vpack.c.b16 %v3893, %v3892
  %v5130 = vpack.c.b16 %v3895, %v3894
  %v5131 = vpack.c.b16 %v3897, %v3896
  %v5132 = vpack.c.b16 %v3899, %v3898
  %v5133 = vpack.c.b16 %v3901, %v3900
  %v5134 = vpack.c.b16 %v3903, %v3902
  %v5135 = vpack.c.b16 %v3905, %v3904
  %v5136 = vpack.c.b16 %v3907, %v3906
  %v5137 = vpack.c.b16 %v3909, %v3908
  %v5138 = vpack.c.b16 %v3911, %v3910
  %v5139 = vpack.c.b16 %v3913, %v3912
  %v5140 = vpack.c.b16 %v3915, %v3914
  %v5141 = vpack.c.b16 %v3917, %v3916
  %v5142 = vpack.c.b16 %v3919, %v3918
  %v5143 = vpack.c.b16 %v3921, %v3920
  %v5144 = vpack.c.b16 %v3923, %v3922
  %v5145 = vpack.c.b16 %v3925, %v3924
  %v5146 = vpack.c.b16 %v3927, %v3926
  %v5147 = vpack.c.b16 %v3929, %v3928
  %v5148 = vpack.c.b16 %v3931, %v3930
  %v5149 = vpack.c.b16 %v3933, %v3932
  %v5150 = vpack.c.b16 %v3935, %v3934
  %v5151 = vpack.c.b16 %v3937, %v3936
  %v5152 = vpack.c.b16 %v3939, %v3938
  %v5153 = vpack.c.b16 %v3941, %v3940
  %v5154 = vpack.c.b16 %v3943, %v3942
  %v5155 = vpack.c.b16 %v3945, %v3944
  %v5156 = vpack.c.b16 %v3947, %v3946
  %v5157 = vpack.c.b16 %v3949, %v3948
  %v5158 = vpack.c.b16 %v3951, %v3950
  %v5159 = vpack.c.b16 %v3953, %v3952
  %v5160 = vpack.c.b16 %v3955, %v3954
  %v5161 = vpack.c.b16 %v3957, %v3956
  %v5162 = vpack.c.b16 %v3959, %v3958
  %v5163 = vpack.c.b16 %v3961, %v3960
  %v5164 = vpack.c.b16 %v3963, %v3962
  %v5165 = vpack.c.b16 %v3965, %v3964
  %v5166 = vpack.c.b16 %v3967, %v3966
  %v5167 = vpack.c.b16 %v3969, %v3968
  %v5168 = vpack.c.b16 %v3971, %v3970
  %v5169 = vpack.c.b16 %v3973, %v3972
  %v5170 = vpack.c.b16 %v3975, %v3974
  %v5171 = vpack.c.b16 %v3977, %v3976
  %v5172 = vpack.c.b16 %v3979, %v3978
  %v5173 = vpack.c.b16 %v3981, %v3980
  %v5174 = vpack.c.b16 %v3983, %v3982
  %v5175 = vpack.c.b16 %v3985, %v3984
  %v5176 = vpack.c.b16 %v3987, %v3986
  %v5177 = vpack.c.b16 %v3989, %v3988
  %v5178 = vpack.c.b16 %v3991, %v3990
  %v5179 = vpack.c.b16 %v3993, %v3992
  %v5180 = vpack.c.b16 %v3995, %v3994
  %v5181 = vpack.c.b16 %v3997, %v3996
  %v5182 = vpack.c.b16 %v3999, %v3998
  %v5183 = vpack.c.b16 %v4001, %v4000
  %v5184 = vpack.c.b16 %v4003, %v4002
  %v5185 = vpack.c.b16 %v4005, %v4004
  %v5186 = vpack.c.b16 %v4007, %v4006
  %v5187 = vpack.c.b16 %v4009, %v4008
  %v5188 = vpack.c.b16 %v4011, %v4010
  %v5189 = vpack.c.b16 %v4013, %v4012
  %v5190 = vpack.c.b16 %v4015, %v4014
  %v5191 = vpack.c.b16 %v4017, %v4016
  %v5192 = vpack.c.b16 %v4019, %v4018
  %v5193 = vpack.c.b16 %v4021, %v4020
  %v5194 = vpack.c.b16 %v4023, %v4022
  %v5195 = vpack.c.b16 %v4025, %v4024
  %v5196 = vpack.c.b16 %v4027, %v4026
  %v5197 = vpack.c.b16 %v4029, %v4028
  %v5198 = vpack.c.b16 %v4031, %v4030
  %v5199 = vpack.c.b16 %v4033, %v4032
  %v5200 = vpack.c.b16 %v4035, %v4034
  %v5201 = vpack.c.b16 %v4037, %v4036
  %v5202 = vpack.c.b16 %v4039, %v4038
  %v5203 = vpack.c.b16 %v4041, %v4040
  %v5204 = vpack.c.b16 %v4043, %v4042
  %v5205 = vpack.c.b16 %v4045, %v4044
  %v5206 = vpack.c.b16 %v4047, %v4046
  %v5207 = vpack.c.b16 %v4049, %v4048
  %v5208 = vpack.c.b16 %v4051, %v4050
  %v5209 = vpack.c.b16 %v4053, %v4052
  %v5210 = vpack.c.b16 %v4055, %v4054
  %v5211 = vpack.c.b16 %v4057, %v4056
  %v5212 = vpack.c.b16 %v4059, %v4058
  %v5213 = vpack.c.b16 %v4061, %v4060
  %v5214 = vpack.c.b16 %v4063, %v4062
  %v5215 = vpack.c.b16 %v4065, %v4064
  %v5216 = vpack.c.b16 %v4067, %v4066
  %v5217 = vpack.c.b16 %v4069, %v4068
  %v5218 = vpack.c.b16 %v4071, %v4070
  %v5219 = vpack.c.b16 %v4073, %v4072
  %v5220 = vpack.c.b16 %v4075, %v4074
  %v5221 = vpack.c.b16 %v4077, %v4076
  %v5222 = vpack.c.b16 %v4079, %v4078
  %v5223 = vpack.c.b16 %v4081, %v4080
  %v5224 = vpack.c.b16 %v4083, %v4082
  %v5225 = vpack.c.b16 %v4085, %v4084
  %v5226 = vpack.c.b16 %v4087, %v4086
  %v5227 = vpack.c.b16 %v4089, %v4088
  %v5228 = vpack.c.b16 %v4091, %v4090
  %v5229 = vpack.c.b16 %v4093, %v4092
  %v5230 = vpack.c.b16 %v4095, %v4094
  %v5231 = vpack.c.b16 %v4097, %v4096
  %v5232 = vpack.c.b16 %v4099, %v4098
  %v5233 = vpack.c.b16 %v4101, %v4100
  %v5234 = vpack.c.b16 %v4103, %v4102
  %v5235 = vpack.c.b16 %v4105, %v4104
  %v5236 = vpack.c.b16 %v4107, %v4106
  %v5237 = vpack.c.b16 %v4109, %v4108
  %v5238 = vpack.c.b16 %v4111, %v4110
  %v5239 = vpack.c.b16 %v4113, %v4112
  %v5240 = vpack.c.b16 %v4115, %v4114
  %v5241 = vpack.c.b16 %v4117, %v4116
  %v5242 = vpack.c.b16 %v4119, %v4118
  %v5243 = vpack.c.b16 %v4121, %v4120
  %v5244 = vpack.c.b16 %v4123, %v4122
  %v5245 = vpack.c.b16 %v4125, %v4124
  %v5246 = vpack.c.b16 %v4127, %v4126
  %v5247 = vpack.c.b16 %v4129, %v4128
  %v5248 = vpack.c.b16 %v4131, %v4130
  %v5249 = vpack.c.b16 %v4133, %v4132
  %v5250 = vpack.c.b16 %v4135, %v4134
  %v5251 = vpack.c.b16 %v4137, %v4136
  %v5252 = vpack.c.b16 %v4139, %v4138
  %v5253 = vpack.c.b16 %v4141, %v4140
  %v5254 = vpack.c.b16 %v4143, %v4142
  %v5255 = vpack.c.b16 %v4145, %v4144
  %v5256 = vpack.c.b16 %v4147, %v4146
  %v5257 = vpack.c.b16 %v4149, %v4148
  %v5258 = vpack.c.b16 %v4151, %v4150
  %v5259 = vpack.c.b16 %v4153, %v4152
  %v5260 = vpack.c.b16 %v4155, %v4154
  %v5261 = vpack.c.b16 %v4157, %v4156
  %v5262 = vpack.c.b16 %v4159, %v4158
  %v5263 = vpack.c.b16 %v4161, %v4160
  %v5264 = vpack.c.b16 %v4163, %v4162
  %v5265 = vpack.c.b16 %v4165, %v4164
  %v5266 = vpack.c.b16 %v4167, %v4166
  %v5267 = vpack.c.b16 %v4169, %v4168
  %v5268 = vpack.c.b16 %v4171, %v4170
  %v5269 = vpack.c.b16 %v4173, %v4172
  %v5270 = vpack.c.b16 %v4175, %v4174
  %v5271 = vpack.c.b16 %v4177, %v4176
  %v5272 = vpack.c.b16 %v4179, %v4178
  %v5273 = vpack.c.b16 %v4181, %v4180
  %v5274 = vpack.c.b16 %v4183, %v4182
  %v5275 = vpack.c.b16 %v4185, %v4184
  %v5276 = vpack.c.b16 %v4187, %v4186
  %v5277 = vpack.c.b16 %v4189, %v4188
  %v5278 = vpack.c.b16 %v4191, %v4190
  %v5279 = vpack.c.b16 %v4193, %v4192
  %v5280 = vpack.c.b16 %v4195, %v4194
  %v5281 = vpack.c.b16 %v4197, %v4196
  %v5282 = vpack.c.b16 %v4199, %v4198
  %v5283 = vpack.c.b16 %v4201, %v4200
  %v5284 = vpack.c.b16 %v4203, %v4202
  %v5285 = vpack.c.b16 %v4205, %v4204
  %v5286 = vpack.c.b16 %v4207, %v4206
  %v5287 = vpack.c.b16 %v4209, %v4208
  %v5288 = vpack.c.b16 %v4211, %v4210
  %v5289 = vpack.c.b16 %v4213, %v4212
  %v5290 = vpack.c.b16 %v4215, %v4214
  %v5291 = vpack.c.b16 %v4217, %v4216
  %v5292 = vpack.c.b16 %v4219, %v4218
  %v5293 = vpack.c.b16 %v4221, %v4220
  %v5294 = vpack.c.b16 %v4223, %v4222
  %v5295 = vpack.c.b16 %v4225, %v4224
  %v5296 = vpack.c.b16 %v4227, %v4226
  %v5297 = vpack.c.b16 %v4229, %v4228
  %v5298 = vpack.c.b16 %v4231, %v4230
  %v5299 = vpack.c.b16 %v4233, %v4232
  %v5300 = vpack.c.b16 %v4235, %v4234
  %v5301 = vpack.c.b16 %v4237, %v4236
  %v5302 = vpack.c.b16 %v4239, %v4238
  %v5303 = vpack.c.b16 %v4241, %v4240
  %v5304 = vpack.c.b16 %v4243, %v4242
  %v5305 = vpack.c.b16 %v4245, %v4244
  %v5306 = vpack.c.b16 %v4247, %v4246
  %v5307 = vpack.c.b16 %v4249, %v4248
  %v5308 = vpack.c.b16 %v4251, %v4250
  %v5309 = vpack.c.b16 %v4253, %v4252
  %v5310 = vpack.c.b16 %v4255, %v4254
  %v5311 = vpack.c.b16 %v4257, %v4256
  %v5312 = vpack.c.b16 %v4259, %v4258
  %v5313 = vpack.c.b16 %v4261, %v4260
  %v5314 = vpack.c.b16 %v4263, %v4262
  %v5315 = vpack.c.b16 %v4265, %v4264
  %v5316 = vpack.c.b16 %v4267, %v4266
  %v5317 = vpack.c.b16 %v4269, %v4268
  %v5318 = vpack.c.b16 %v4271, %v4270
  %v5319 = vpack.c.b16 %v4273, %v4272
  %v5320 = vpack.c.b16 %v4275, %v4274
  %v5321 = vpack.c.b16 %v4277, %v4276
  %v5322 = vpack.c.b16 %v4279, %v4278
  %v5323 = vpack.c.b16 %v4281, %v4280
  %v5324 = vpack.c.b16 %v4283, %v4282
  %v5325 = vpack.c.b16 %v4285, %v4284
  %v5326 = vpack.c.b16 %v4287, %v4286
  %v5327 = vpack.c.b16 %v4289, %v4288
  %v5328 = vpack.c.b16 %v4291, %v4290
  %v5329 = vpack.c.b16 %v4293, %v4292
  %v5330 = vpack.c.b16 %v4295, %v4294
  %v5331 = vpack.c.b16 %v4297, %v4296
  %v5332 = vpack.c.b16 %v4299, %v4298
  %v5333 = vpack.c.b16 %v4301, %v4300
  %v5334 = vpack.c.b16 %v4303, %v4302
  %v5335 = vpack.c.b16 %v4305, %v4304
  %v5336 = vpack.c.b16 %v4307, %v4306
  %v5337 = vpack.c.b16 %v4309, %v4308
  %v5338 = vpack.c.b16 %v4311, %v4310
  %v5339 = vpack.c.b16 %v4313, %v4312
  %v5340 = vpack.c.b16 %v4315, %v4314
  %v5341 = vpack.c.b16 %v4317, %v4316
  %v5342 = vpack.c.b16 %v4319, %v4318
  %v5343 = vpack.c.b16 %v4321, %v4320
  %v5344 = vpack.c.b16 %v4323, %v4322
  %v5345 = vpack.c.b16 %v4325, %v4324
  %v5346 = vpack.c.b16 %v4327, %v4326
  %v5347 = vpack.c.b16 %v4329, %v4328
  %v5348 = vpack.c.b16 %v4331, %v4330
  %v5349 = vpack.c.b16 %v4333, %v4332
  %v5350 = vpack.c.b16 %v4335, %v4334
  %v5351 = vpack.c.b16 %v4337, %v4336
  %v5352 = vpack.c.b16 %v4339, %v4338
  %v5353 = vpack.c.b16 %v4341, %v4340
  %v5354 = vpack.c.b16 %v4343, %v4342
  %v5355 = vpack.c.b16 %v4345, %v4344
  %v5356 = vpack.c.b16 %v4347, %v4346
  %v5357 = vpack.c.b16 %v4349, %v4348
  %v5358 = vpack.c.b16 %v4351, %v4350
  %v5359 = vpack.c.b16 %v4353, %v4352
  %v5360 = vpack.c.b16 %v4355, %v4354
  %v5361 = vpack.c.b16 %v4357, %v4356
  %v5362 = vpack.c.b16 %v4359, %v4358
  %v5363 = vpack.c.b16 %v4361, %v4360
  %v5364 = vpack.c.b16 %v4363, %v4362
  %v5365 = vpack.c.b16 %v4365, %v4364
  %v5366 = vpack.c.b16 %v4367, %v4366
  %v5367 = vpack.c.b16 %v4369, %v4368
  %v5368 = vpack.c.b16 %v4371, %v4370
  %v5369 = vpack.c.b16 %v4373, %v4372
  %v5370 = vpack.c.b16 %v4375, %v4374
  %v5371 = vpack.c.b16 %v4377, %v4376
  %v5372 = vpack.c.b16 %v4379, %v4378
  %v5373 = vpack.c.b16 %v4381, %v4380
  %v5374 = vpack.c.b16 %v4383, %v4382
  %v5375 = vpack.c.b16 %v4385, %v4384
  %v5376 = vpack.c.b16 %v4387, %v4386
  %v5377 = vpack.c.b16 %v4389, %v4388
  %v5378 = vpack.c.b16 %v4391, %v4390
  %v5379 = vpack.c.b16 %v4393, %v4392
  %v5380 = vpack.c.b16 %v4395, %v4394
  %v5381 = vpack.c.b16 %v4397, %v4396
  %v5382 = vpack.c.b16 %v4399, %v4398
  %v5383 = vpack.c.b16 %v4401, %v4400
  %v5384 = vpack.c.b16 %v4403, %v4402
  %v5385 = vpack.c.b16 %v4405, %v4404
  %v5386 = vpack.c.b16 %v4407, %v4406
  %v5387 = vpack.c.b16 %v4409, %v4408
  %v5388 = vpack.c.b16 %v4411, %v4410
  %v5389 = vpack.c.b16 %v4413, %v4412
  %v5390 = vpack.c.b16 %v4415, %v4414
  %v5391 = vpack.c.b16 %v4417, %v4416
  %v5392 = vpack.c.b16 %v4419, %v4418
  %v5393 = vpack.c.b16 %v4421, %v4420
  %v5394 = vpack.c.b16 %v4423, %v4422
  %v5395 = vpack.c.b16 %v4425, %v4424
  %v5396 = vpack.c.b16 %v4427, %v4426
  %v5397 = vpack.c.b16 %v4429, %v4428
  %v5398 = vpack.c.b16 %v4431, %v4430
  %v5399 = vpack.c.b16 %v4433, %v4432
  %v5400 = vpack.c.b16 %v4435, %v4434
  %v5401 = vpack.c.b16 %v4437, %v4436
  %v5402 = vpack.c.b16 %v4439, %v4438
  %v5403 = vpack.c.b16 %v4441, %v4440
  %v5404 = vpack.c.b16 %v4443, %v4442
  %v5405 = vpack.c.b16 %v4445, %v4444
  %v5406 = vpack.c.b16 %v4447, %v4446
  %v5407 = vpack.c.b16 %v4449, %v4448
  %v5408 = vpack.c.b16 %v4451, %v4450
  %v5409 = vpack.c.b16 %v4453, %v4452
  %v5410 = vpack.c.b16 %v4455, %v4454
  %v5411 = vpack.c.b16 %v4457, %v4456
  %v5412 = vpack.c.b16 %v4459, %v4458
  %v5413 = vpack.c.b16 %v4461, %v4460
  %v5414 = vpack.c.b16 %v4463, %v4462
  %v5415 = vpack.c.b16 %v4465, %v4464
  %v5416 = vpack.c.b16 %v4467, %v4466
  %v5417 = vpack.c.b16 %v4469, %v4468
  %v5418 = vpack.c.b16 %v4471, %v4470
  %v5419 = vpack.c.b16 %v4473, %v4472
  %v5420 = vpack.c.b16 %v4475, %v4474
  %v5421 = vpack.c.b16 %v4477, %v4476
  %v5422 = vpack.c.b16 %v4479, %v4478
  %v5423 = vpack.c.b16 %v4481, %v4480
  %v5424 = vpack.c.b16 %v4483, %v4482
  %v5425 = vpack.c.b16 %v4485, %v4484
  %v5426 = vpack.c.b16 %v4487, %v4486
  %v5427 = vpack.c.b16 %v4489, %v4488
  %v5428 = vpack.c.b16 %v4491, %v4490
  %v5429 = vpack.c.b16 %v4493, %v4492
  %v5430 = vpack.c.b16 %v4495, %v4494
  %v5431 = vpack.c.b16 %v4497, %v4496
  %v5432 = vpack.c.b16 %v4499, %v4498
  %v5433 = vpack.c.b16 %v4501, %v4500
  %v5434 = vpack.c.b16 %v4503, %v4502
  %v5435 = vpack.c.b16 %v4505, %v4504
  %v5436 = vpack.c.b16 %v4507, %v4506
  %v5437 = vpack.c.b16 %v4509, %v4508
  %v5438 = vpack.c.b16 %v4511, %v4510
  %v5439 = vpack.c.b16 %v4513, %v4512
  %v5440 = vpack.c.b16 %v4515, %v4514
  %v5441 = vpack.c.b16 %v4517, %v4516
  %v5442 = vpack.c.b16 %v4519, %v4518
  %v5443 = vpack.c.b16 %v4521, %v4520
  %v5444 = vpack.c.b16 %v4523, %v4522
  %v5445 = vpack.c.b16 %v4525, %v4524
  %v5446 = vpack.c.b16 %v4527, %v4526
  %v5447 = vpack.c.b16 %v4529, %v4528
  %v5448 = vpack.c.b16 %v4531, %v4530
  %v5449 = vpack.c.b16 %v4533, %v4532
  %v5450 = vpack.c.b16 %v4535, %v4534
  %v5451 = vpack.c.b16 %v4537, %v4536
  %v5452 = vpack.c.b16 %v4539, %v4538
  %v5453 = vpack.c.b16 %v4541, %v4540
  %v5454 = vpack.c.b16 %v4543, %v4542
  %v5455 = vpack.c.b16 %v4545, %v4544
  %v5456 = vpack.c.b16 %v4547, %v4546
  %v5457 = vpack.c.b16 %v4549, %v4548
  %v5458 = vpack.c.b16 %v4551, %v4550
  %v5459 = vpack.c.b16 %v4553, %v4552
  %v5460 = vpack.c.b16 %v4555, %v4554
  %v5461 = vpack.c.b16 %v4557, %v4556
  %v5462 = vpack.c.b16 %v4559, %v4558
  %v5463 = vpack.c.b16 %v4561, %v4560
  %v5464 = vpack.c.b16 %v4563, %v4562
  %v5465 = vpack.c.b16 %v4565, %v4564
  %v5466 = vpack.c.b16 %v4567, %v4566
  %v5467 = vpack.c.b16 %v4569, %v4568
  %v5468 = vpack.c.b16 %v4571, %v4570
  %v5469 = vpack.c.b16 %v4573, %v4572
  %v5470 = vpack.c.b16 %v4575, %v4574
  %v5471 = vpack.c.b16 %v4577, %v4576
  %v5472 = vpack.c.b16 %v4579, %v4578
  %v5473 = vpack.c.b16 %v4581, %v4580
  %v5474 = vpack.c.b16 %v4583, %v4582
  %v5475 = vpack.c.b16 %v4585, %v4584
  %v5476 = vpack.c.b16 %v4587, %v4586
  %v5477 = vpack.c.b16 %v4589, %v4588
  %v5478 = vpack.c.b16 %v4591, %v4590
  %v5479 = vpack.c.b16 %v4593, %v4592
  %v5480 = vpack.c.b16 %v4595, %v4594
  %v5481 = vpack.c.b16 %v4597, %v4596
  %v5482 = vpack.c.b16 %v4599, %v4598
  %v5483 = vpack.c.b16 %v4601, %v4600
  %v5484 = vpack.c.b16 %v4603, %v4602
  %v5485 = vpack.c.b16 %v4605, %v4604
  %v5486 = vpack.c.b16 %v4607, %v4606
  %v5487 = vpack.c.b16 %v4609, %v4608
  %v5488 = vpack.c.b16 %v4611, %v4610
  %v5489 = vpack.c.b16 %v4613, %v4612
  %v5490 = vpack.c.b16 %v4615, %v4614
  %v5491 = vpack.c.b16 %v4617, %v4616
  %v5492 = vpack.c.b16 %v4619, %v4618
  %v5493 = vpack.c.b16 %v4621, %v4620
  %v5494 = vpack.c.b16 %v4623, %v4622
  %v5495 = vpack.c.b16 %v4625, %v4624
  %v5496 = vpack.c.b16 %v4627, %v4626
  %v5497 = vpack.c.b16 %v4629, %v4628
  %v5498 = vpack.c.b16 %v4631, %v4630
  %v5499 = vpack.c.b16 %v4633, %v4632
  %v5500 = vpack.c.b16 %v4635, %v4634
  %v5501 = vpack.c.b16 %v4637, %v4636
  %v5502 = vpack.c.b16 %v4639, %v4638
  %v5503 = vpack.c.b16 %v4641, %v4640
  %v5504 = vpack.c.b16 %v4643, %v4642
  %v5505 = vpack.c.b16 %v4645, %v4644
  %v5506 = vpack.c.b16 %v4647, %v4646
  %v5507 = vpack.c.b16 %v4649, %v4648
  %v5508 = vpack.c.b16 %v4651, %v4650
  %v5509 = vpack.c.b16 %v4653, %v4652
  %v5510 = vpack.c.b16 %v4655, %v4654
  %v5511 = vpack.c.b16 %v4657, %v4656
  %v5512 = vpack.c.b16 %v4659, %v4658
  %v5513 = vpack.c.b16 %v4661, %v4660
  %v5514 = vpack.c.b16 %v4663, %v4662
  %v5515 = vpack.c.b16 %v4665, %v4664
  %v5516 = vpack.c.b16 %v4667, %v4666
  %v5517 = vpack.c.b16 %v4669, %v4668
  %v5518 = vpack.c.b16 %v4671, %v4670
  %v5519 = vpack.c.b16 %v4673, %v4672
  %v5520 = vpack.c.b16 %v4675, %v4674
  %v5521 = vpack.c.b16 %v4677, %v4676
  %v5522 = vpack.c.b16 %v4679, %v4678
  %v5523 = vpack.c.b16 %v4681, %v4680
  %v5524 = vpack.c.b16 %v4683, %v4682
  %v5525 = vpack.c.b16 %v4685, %v4684
  %v5526 = vpack.c.b16 %v4687, %v4686
  %v5527 = vpack.c.b16 %v4689, %v4688
  %v5528 = vpack.c.b16 %v4691, %v4690
  %v5529 = vpack.c.b16 %v4693, %v4692
  %v5530 = vpack.c.b16 %v4695, %v4694
  %v5531 = vpack.c.b16 %v4697, %v4696
  %v5532 = vpack.c.b16 %v4699, %v4698
  %v5533 = vpack.c.b16 %v4701, %v4700
  %v5534 = vpack.c.b16 %v4703, %v4702
  %v5535 = vpack.c.b16 %v4705, %v4704
  %v5536 = vpack.c.b16 %v4707, %v4706
  %v5537 = vpack.c.b16 %v4709, %v4708
  %v5538 = vpack.c.b16 %v4711, %v4710
  %v5539 = vpack.c.b16 %v4713, %v4712
  %v5540 = vpack.c.b16 %v4715, %v4714
  %v5541 = vpack.c.b16 %v4717, %v4716
  %v5542 = vpack.c.b16 %v4719, %v4718
  %v5543 = vpack.c.b16 %v4721, %v4720
  %v5544 = vpack.c.b16 %v4723, %v4722
  %v5545 = vpack.c.b16 %v4725, %v4724
  %v5546 = vpack.c.b16 %v4727, %v4726
  %v5547 = vpack.c.b16 %v4729, %v4728
  %v5548 = vpack.c.b16 %v4731, %v4730
  %v5549 = vpack.c.b16 %v4733, %v4732
  %v5550 = vpack.c.b16 %v4735, %v4734
  %v5551 = vpack.c.b16 %v4737, %v4736
  %v5552 = vpack.c.b16 %v4739, %v4738
  %v5553 = vpack.c.b16 %v4741, %v4740
  %v5554 = vpack.c.b16 %v4743, %v4742
  %v5555 = vpack.c.b16 %v4745, %v4744
  %v5556 = vpack.c.b16 %v4747, %v4746
  %v5557 = vpack.c.b16 %v4749, %v4748
  %v5558 = vpack.c.b16 %v4751, %v4750
  %v5559 = vpack.c.b16 %v4753, %v4752
  %v5560 = vpack.c.b16 %v4755, %v4754
  %v5561 = vpack.c.b16 %v4757, %v4756
  %v5562 = vpack.c.b16 %v4759, %v4758
  %v5563 = vpack.c.b16 %v4761, %v4760
  %v5564 = vpack.c.b16 %v4763, %v4762
  %v5565 = vpack.c.b16 %v4765, %v4764
  %v5566 = vpack.c.b16 %v4767, %v4766
  %v5567 = vpack.c.b16 %v4769, %v4768
  %v5568 = vpack.c.b16 %v4771, %v4770
  %v5569 = vpack.c.b16 %v4773, %v4772
  %v5570 = vpack.c.b16 %v4775, %v4774
  %v5571 = vpack.c.b16 %v4777, %v4776
  %v5572 = vpack.c.b16 %v4779, %v4778
  %v5573 = vpack.c.b16 %v4781, %v4780
  %v5574 = vpack.c.b16 %v4783, %v4782
  %v5575 = vpack.c.b16 %v4785, %v4784
  %v5576 = vpack.c.b16 %v4787, %v4786
  %v5577 = vpack.c.b16 %v4789, %v4788
  %v5578 = vpack.c.b16 %v4791, %v4790
  %v5579 = vpack.c.b16 %v4793, %v4792
  %v5580 = vpack.c.b16 %v4795, %v4794
  %v5581 = vpack.c.b16 %v4797, %v4796
  %v5582 = vpack.c.b16 %v4799, %v4798
  %v5583 = vpack.c.b16 %v4801, %v4800
  %v5584 = vpack.c.b16 %v4803, %v4802
  %v5585 = vpack.c.b16 %v4805, %v4804
  %v5586 = vpack.c.b16 %v4807, %v4806
  %v5587 = vpack.c.b16 %v4809, %v4808
  %v5588 = vpack.c.b16 %v4811, %v4810
  %v5589 = vpack.c.b16 %v4813, %v4812
  %v5590 = vpack.c.b16 %v4815, %v4814
  %v5591 = vpack.c.b16 %v4817, %v4816
  %v5592 = vpack.c.b16 %v4819, %v4818
  %v5593 = vpack.c.b16 %v4821, %v4820
  %v5594 = vpack.c.b16 %v4823, %v4822
  %v5595 = vpack.c.b16 %v4825, %v4824
  %v5596 = vpack.c.b16 %v4827, %v4826
  %v5597 = vpack.c.b16 %v4829, %v4828
  %6366 = vmatpush.bf16.msra.mxu0 %v4837
  %6367 = vmatpush.bf16.msra.mxu0 %v4836
  %6368 = vmatpush.bf16.msra.mxu0 %v4835
  %6369 = vmatpush.bf16.msra.mxu0 %v4834
  %6370 = vmatpush.bf16.msra.mxu0 %v4833
  %6371 = vmatpush.bf16.msra.mxu0 %v4832
  %6372 = vmatpush.bf16.msra.mxu0 %v4831
  %6373 = vmatpush.bf16.msra.mxu0 %v4830
  %6374 = vmatmul.bf16.gmra.mxu0 %v122
  %v6375 = vpop.f32.mrf.mxu0
  %v6376 = vadd.f32 %v1756, %v6375
  %v6377 = vpop.f32.mrf.mxu0
  %6378 = vdwg.mxu0
  %6379 = vmatpush.bf16.msra.mxu0 %v4845
  %6380 = vmatpush.bf16.msra.mxu0 %v4844
  %6381 = vmatpush.bf16.msra.mxu0 %v4843
  %6382 = vmatpush.bf16.msra.mxu0 %v4842
  %6383 = vmatpush.bf16.msra.mxu0 %v4841
  %6384 = vmatpush.bf16.msra.mxu0 %v4840
  %6385 = vmatpush.bf16.msra.mxu0 %v4839
  %6386 = vmatpush.bf16.msra.mxu0 %v4838
  %6387 = vmatmul.bf16.gmra.mxu0 %v123
  %v6388 = vpop.f32.mrf.mxu0
  %v6389 = vadd.f32 %v6376, %v6388
  %v6390 = vpop.f32.mrf.mxu0
  %6391 = vdwg.mxu0
  %6392 = vmatpush.bf16.msra.mxu0 %v4853
  %6393 = vmatpush.bf16.msra.mxu0 %v4852
  %6394 = vmatpush.bf16.msra.mxu0 %v4851
  %6395 = vmatpush.bf16.msra.mxu0 %v4850
  %6396 = vmatpush.bf16.msra.mxu0 %v4849
  %6397 = vmatpush.bf16.msra.mxu0 %v4848
  %6398 = vmatpush.bf16.msra.mxu0 %v4847
  %6399 = vmatpush.bf16.msra.mxu0 %v4846
  %6400 = vmatmul.bf16.gmra.mxu0 %v124
  %v6401 = vpop.f32.mrf.mxu0
  %v6402 = vadd.f32 %v6389, %v6401
  %v6403 = vpop.f32.mrf.mxu0
  %6404 = vdwg.mxu0
  %6405 = vmatpush.bf16.msra.mxu0 %v4861
  %6406 = vmatpush.bf16.msra.mxu0 %v4860
  %6407 = vmatpush.bf16.msra.mxu0 %v4859
  %6408 = vmatpush.bf16.msra.mxu0 %v4858
  %6409 = vmatpush.bf16.msra.mxu0 %v4857
  %6410 = vmatpush.bf16.msra.mxu0 %v4856
  %6411 = vmatpush.bf16.msra.mxu0 %v4855
  %6412 = vmatpush.bf16.msra.mxu0 %v4854
  %6413 = vmatmul.bf16.gmra.mxu0 %v125
  %v6414 = vpop.f32.mrf.mxu0
  %v6415 = vadd.f32 %v6402, %v6414
  %v6416 = vpop.f32.mrf.mxu0
  %6417 = vdwg.mxu0
  %6418 = vmatpush.bf16.msra.mxu0 %v4869
  %6419 = vmatpush.bf16.msra.mxu0 %v4868
  %6420 = vmatpush.bf16.msra.mxu0 %v4867
  %6421 = vmatpush.bf16.msra.mxu0 %v4866
  %6422 = vmatpush.bf16.msra.mxu0 %v4865
  %6423 = vmatpush.bf16.msra.mxu0 %v4864
  %6424 = vmatpush.bf16.msra.mxu0 %v4863
  %6425 = vmatpush.bf16.msra.mxu0 %v4862
  %6426 = vmatmul.bf16.gmra.mxu0 %v126
  %v6427 = vpop.f32.mrf.mxu0
  %v6428 = vadd.f32 %v6415, %v6427
  %v6429 = vpop.f32.mrf.mxu0
  %6430 = vdwg.mxu0
  %6431 = vmatpush.bf16.msra.mxu0 %v4877
  %6432 = vmatpush.bf16.msra.mxu0 %v4876
  %6433 = vmatpush.bf16.msra.mxu0 %v4875
  %6434 = vmatpush.bf16.msra.mxu0 %v4874
  %6435 = vmatpush.bf16.msra.mxu0 %v4873
  %6436 = vmatpush.bf16.msra.mxu0 %v4872
  %6437 = vmatpush.bf16.msra.mxu0 %v4871
  %6438 = vmatpush.bf16.msra.mxu0 %v4870
  %6439 = vmatmul.bf16.gmra.mxu0 %v127
  %v6440 = vpop.f32.mrf.mxu0
  %v6441 = vadd.f32 %v6428, %v6440
  %v6442 = vpop.f32.mrf.mxu0
  %6443 = vdwg.mxu0
  %6444 = vmatpush.bf16.msra.mxu0 %v4885
  %6445 = vmatpush.bf16.msra.mxu0 %v4884
  %6446 = vmatpush.bf16.msra.mxu0 %v4883
  %6447 = vmatpush.bf16.msra.mxu0 %v4882
  %6448 = vmatpush.bf16.msra.mxu0 %v4881
  %6449 = vmatpush.bf16.msra.mxu0 %v4880
  %6450 = vmatpush.bf16.msra.mxu0 %v4879
  %6451 = vmatpush.bf16.msra.mxu0 %v4878
  %6452 = vmatmul.bf16.gmra.mxu0 %v128
  %v6453 = vpop.f32.mrf.mxu0
  %v6454 = vadd.f32 %v6441, %v6453
  %v6455 = vpop.f32.mrf.mxu0
  %6456 = vdwg.mxu0
  %6457 = vmatpush.bf16.msra.mxu0 %v4893
  %6458 = vmatpush.bf16.msra.mxu0 %v4892
  %6459 = vmatpush.bf16.msra.mxu0 %v4891
  %6460 = vmatpush.bf16.msra.mxu0 %v4890
  %6461 = vmatpush.bf16.msra.mxu0 %v4889
  %6462 = vmatpush.bf16.msra.mxu0 %v4888
  %6463 = vmatpush.bf16.msra.mxu0 %v4887
  %6464 = vmatpush.bf16.msra.mxu0 %v4886
  %6465 = vmatmul.bf16.gmra.mxu0 %v129
  %v6466 = vpop.f32.mrf.mxu0
  %v6467 = vadd.f32 %v6454, %v6466
  %v6468 = vpop.f32.mrf.mxu0
  %6469 = vdwg.mxu0
  %6470 = vmatpush.bf16.msra.mxu0 %v4901
  %6471 = vmatpush.bf16.msra.mxu0 %v4900
  %6472 = vmatpush.bf16.msra.mxu0 %v4899
  %6473 = vmatpush.bf16.msra.mxu0 %v4898
  %6474 = vmatpush.bf16.msra.mxu0 %v4897
  %6475 = vmatpush.bf16.msra.mxu0 %v4896
  %6476 = vmatpush.bf16.msra.mxu0 %v4895
  %6477 = vmatpush.bf16.msra.mxu0 %v4894
  %6478 = vmatmul.bf16.gmra.mxu0 %v130
  %v6479 = vpop.f32.mrf.mxu0
  %v6480 = vadd.f32 %v6467, %v6479
  %v6481 = vpop.f32.mrf.mxu0
  %6482 = vdwg.mxu0
  %6483 = vmatpush.bf16.msra.mxu0 %v4909
  %6484 = vmatpush.bf16.msra.mxu0 %v4908
  %6485 = vmatpush.bf16.msra.mxu0 %v4907
  %6486 = vmatpush.bf16.msra.mxu0 %v4906
  %6487 = vmatpush.bf16.msra.mxu0 %v4905
  %6488 = vmatpush.bf16.msra.mxu0 %v4904
  %6489 = vmatpush.bf16.msra.mxu0 %v4903
  %6490 = vmatpush.bf16.msra.mxu0 %v4902
  %6491 = vmatmul.bf16.gmra.mxu0 %v131
  %v6492 = vpop.f32.mrf.mxu0
  %v6493 = vadd.f32 %v6480, %v6492
  %v6494 = vpop.f32.mrf.mxu0
  %6495 = vdwg.mxu0
  %6496 = vmatpush.bf16.msra.mxu0 %v4917
  %6497 = vmatpush.bf16.msra.mxu0 %v4916
  %6498 = vmatpush.bf16.msra.mxu0 %v4915
  %6499 = vmatpush.bf16.msra.mxu0 %v4914
  %6500 = vmatpush.bf16.msra.mxu0 %v4913
  %6501 = vmatpush.bf16.msra.mxu0 %v4912
  %6502 = vmatpush.bf16.msra.mxu0 %v4911
  %6503 = vmatpush.bf16.msra.mxu0 %v4910
  %6504 = vmatmul.bf16.gmra.mxu0 %v132
  %v6505 = vpop.f32.mrf.mxu0
  %v6506 = vadd.f32 %v6493, %v6505
  %v6507 = vpop.f32.mrf.mxu0
  %6508 = vdwg.mxu0
  %6509 = vmatpush.bf16.msra.mxu0 %v4925
  %6510 = vmatpush.bf16.msra.mxu0 %v4924
  %6511 = vmatpush.bf16.msra.mxu0 %v4923
  %6512 = vmatpush.bf16.msra.mxu0 %v4922
  %6513 = vmatpush.bf16.msra.mxu0 %v4921
  %6514 = vmatpush.bf16.msra.mxu0 %v4920
  %6515 = vmatpush.bf16.msra.mxu0 %v4919
  %6516 = vmatpush.bf16.msra.mxu0 %v4918
  %6517 = vmatmul.bf16.gmra.mxu0 %v133
  %v6518 = vpop.f32.mrf.mxu0
  %v6519 = vadd.f32 %v6506, %v6518
  %v6520 = vpop.f32.mrf.mxu0
  %6521 = vdwg.mxu0
  %6522 = vmatpush.bf16.msra.mxu0 %v4933
  %6523 = vmatpush.bf16.msra.mxu0 %v4932
  %6524 = vmatpush.bf16.msra.mxu0 %v4931
  %6525 = vmatpush.bf16.msra.mxu0 %v4930
  %6526 = vmatpush.bf16.msra.mxu0 %v4929
  %6527 = vmatpush.bf16.msra.mxu0 %v4928
  %6528 = vmatpush.bf16.msra.mxu0 %v4927
  %6529 = vmatpush.bf16.msra.mxu0 %v4926
  %6530 = vmatmul.bf16.gmra.mxu0 %v134
  %v6531 = vpop.f32.mrf.mxu0
  %v6532 = vadd.f32 %v6519, %v6531
  %v6533 = vpop.f32.mrf.mxu0
  %6534 = vdwg.mxu0
  %6535 = vmatpush.bf16.msra.mxu0 %v4941
  %6536 = vmatpush.bf16.msra.mxu0 %v4940
  %6537 = vmatpush.bf16.msra.mxu0 %v4939
  %6538 = vmatpush.bf16.msra.mxu0 %v4938
  %6539 = vmatpush.bf16.msra.mxu0 %v4937
  %6540 = vmatpush.bf16.msra.mxu0 %v4936
  %6541 = vmatpush.bf16.msra.mxu0 %v4935
  %6542 = vmatpush.bf16.msra.mxu0 %v4934
  %6543 = vmatmul.bf16.gmra.mxu0 %v135
  %v6544 = vpop.f32.mrf.mxu0
  %v6545 = vadd.f32 %v6532, %v6544
  %v6546 = vpop.f32.mrf.mxu0
  %6547 = vdwg.mxu0
  %6548 = vmatpush.bf16.msra.mxu0 %v4949
  %6549 = vmatpush.bf16.msra.mxu0 %v4948
  %6550 = vmatpush.bf16.msra.mxu0 %v4947
  %6551 = vmatpush.bf16.msra.mxu0 %v4946
  %6552 = vmatpush.bf16.msra.mxu0 %v4945
  %6553 = vmatpush.bf16.msra.mxu0 %v4944
  %6554 = vmatpush.bf16.msra.mxu0 %v4943
  %6555 = vmatpush.bf16.msra.mxu0 %v4942
  %6556 = vmatmul.bf16.gmra.mxu0 %v136
  %v6557 = vpop.f32.mrf.mxu0
  %v6558 = vadd.f32 %v6545, %v6557
  %v6559 = vpop.f32.mrf.mxu0
  %6560 = vdwg.mxu0
  %6561 = vmatpush.bf16.msra.mxu0 %v4957
  %6562 = vmatpush.bf16.msra.mxu0 %v4956
  %6563 = vmatpush.bf16.msra.mxu0 %v4955
  %6564 = vmatpush.bf16.msra.mxu0 %v4954
  %6565 = vmatpush.bf16.msra.mxu0 %v4953
  %6566 = vmatpush.bf16.msra.mxu0 %v4952
  %6567 = vmatpush.bf16.msra.mxu0 %v4951
  %6568 = vmatpush.bf16.msra.mxu0 %v4950
  %6569 = vmatmul.bf16.gmra.mxu0 %v137
  %v6570 = vpop.f32.mrf.mxu0
  %v6571 = vadd.f32 %v6558, %v6570
  %v6572 = vpop.f32.mrf.mxu0
  %6573 = vdwg.mxu0
  %6574 = vmatpush.bf16.msra.mxu0 %v4965
  %6575 = vmatpush.bf16.msra.mxu0 %v4964
  %6576 = vmatpush.bf16.msra.mxu0 %v4963
  %6577 = vmatpush.bf16.msra.mxu0 %v4962
  %6578 = vmatpush.bf16.msra.mxu0 %v4961
  %6579 = vmatpush.bf16.msra.mxu0 %v4960
  %6580 = vmatpush.bf16.msra.mxu0 %v4959
  %6581 = vmatpush.bf16.msra.mxu0 %v4958
  %6582 = vmatmul.bf16.gmra.mxu0 %v138
  %v6583 = vpop.f32.mrf.mxu0
  %v6584 = vadd.f32 %v6571, %v6583
  %v6585 = vpop.f32.mrf.mxu0
  %6586 = vdwg.mxu0
  %6587 = vmatpush.bf16.msra.mxu0 %v4973
  %6588 = vmatpush.bf16.msra.mxu0 %v4972
  %6589 = vmatpush.bf16.msra.mxu0 %v4971
  %6590 = vmatpush.bf16.msra.mxu0 %v4970
  %6591 = vmatpush.bf16.msra.mxu0 %v4969
  %6592 = vmatpush.bf16.msra.mxu0 %v4968
  %6593 = vmatpush.bf16.msra.mxu0 %v4967
  %6594 = vmatpush.bf16.msra.mxu0 %v4966
  %6595 = vmatmul.bf16.gmra.mxu0 %v139
  %v6596 = vpop.f32.mrf.mxu0
  %v6597 = vadd.f32 %v6584, %v6596
  %v6598 = vpop.f32.mrf.mxu0
  %6599 = vdwg.mxu0
  %6600 = vmatpush.bf16.msra.mxu0 %v4981
  %6601 = vmatpush.bf16.msra.mxu0 %v4980
  %6602 = vmatpush.bf16.msra.mxu0 %v4979
  %6603 = vmatpush.bf16.msra.mxu0 %v4978
  %6604 = vmatpush.bf16.msra.mxu0 %v4977
  %6605 = vmatpush.bf16.msra.mxu0 %v4976
  %6606 = vmatpush.bf16.msra.mxu0 %v4975
  %6607 = vmatpush.bf16.msra.mxu0 %v4974
  %6608 = vmatmul.bf16.gmra.mxu0 %v140
  %v6609 = vpop.f32.mrf.mxu0
  %v6610 = vadd.f32 %v6597, %v6609
  %v6611 = vpop.f32.mrf.mxu0
  %6612 = vdwg.mxu0
  %6613 = vmatpush.bf16.msra.mxu0 %v4989
  %6614 = vmatpush.bf16.msra.mxu0 %v4988
  %6615 = vmatpush.bf16.msra.mxu0 %v4987
  %6616 = vmatpush.bf16.msra.mxu0 %v4986
  %6617 = vmatpush.bf16.msra.mxu0 %v4985
  %6618 = vmatpush.bf16.msra.mxu0 %v4984
  %6619 = vmatpush.bf16.msra.mxu0 %v4983
  %6620 = vmatpush.bf16.msra.mxu0 %v4982
  %6621 = vmatmul.bf16.gmra.mxu0 %v141
  %v6622 = vpop.f32.mrf.mxu0
  %v6623 = vadd.f32 %v6610, %v6622
  %v6624 = vpop.f32.mrf.mxu0
  %6625 = vdwg.mxu0
  %6626 = vmatpush.bf16.msra.mxu0 %v4997
  %6627 = vmatpush.bf16.msra.mxu0 %v4996
  %6628 = vmatpush.bf16.msra.mxu0 %v4995
  %6629 = vmatpush.bf16.msra.mxu0 %v4994
  %6630 = vmatpush.bf16.msra.mxu0 %v4993
  %6631 = vmatpush.bf16.msra.mxu0 %v4992
  %6632 = vmatpush.bf16.msra.mxu0 %v4991
  %6633 = vmatpush.bf16.msra.mxu0 %v4990
  %6634 = vmatmul.bf16.gmra.mxu0 %v142
  %v6635 = vpop.f32.mrf.mxu0
  %v6636 = vadd.f32 %v6623, %v6635
  %v6637 = vpop.f32.mrf.mxu0
  %6638 = vdwg.mxu0
  %6639 = vmatpush.bf16.msra.mxu0 %v5005
  %6640 = vmatpush.bf16.msra.mxu0 %v5004
  %6641 = vmatpush.bf16.msra.mxu0 %v5003
  %6642 = vmatpush.bf16.msra.mxu0 %v5002
  %6643 = vmatpush.bf16.msra.mxu0 %v5001
  %6644 = vmatpush.bf16.msra.mxu0 %v5000
  %6645 = vmatpush.bf16.msra.mxu0 %v4999
  %6646 = vmatpush.bf16.msra.mxu0 %v4998
  %6647 = vmatmul.bf16.gmra.mxu0 %v143
  %v6648 = vpop.f32.mrf.mxu0
  %v6649 = vadd.f32 %v6636, %v6648
  %v6650 = vpop.f32.mrf.mxu0
  %6651 = vdwg.mxu0
  %6652 = vmatpush.bf16.msra.mxu0 %v5013
  %6653 = vmatpush.bf16.msra.mxu0 %v5012
  %6654 = vmatpush.bf16.msra.mxu0 %v5011
  %6655 = vmatpush.bf16.msra.mxu0 %v5010
  %6656 = vmatpush.bf16.msra.mxu0 %v5009
  %6657 = vmatpush.bf16.msra.mxu0 %v5008
  %6658 = vmatpush.bf16.msra.mxu0 %v5007
  %6659 = vmatpush.bf16.msra.mxu0 %v5006
  %6660 = vmatmul.bf16.gmra.mxu0 %v144
  %v6661 = vpop.f32.mrf.mxu0
  %v6662 = vadd.f32 %v6649, %v6661
  %v6663 = vpop.f32.mrf.mxu0
  %6664 = vdwg.mxu0
  %6665 = vmatpush.bf16.msra.mxu0 %v5021
  %6666 = vmatpush.bf16.msra.mxu0 %v5020
  %6667 = vmatpush.bf16.msra.mxu0 %v5019
  %6668 = vmatpush.bf16.msra.mxu0 %v5018
  %6669 = vmatpush.bf16.msra.mxu0 %v5017
  %6670 = vmatpush.bf16.msra.mxu0 %v5016
  %6671 = vmatpush.bf16.msra.mxu0 %v5015
  %6672 = vmatpush.bf16.msra.mxu0 %v5014
  %6673 = vmatmul.bf16.gmra.mxu0 %v145
  %v6674 = vpop.f32.mrf.mxu0
  %v6675 = vadd.f32 %v6662, %v6674
  %v6676 = vpop.f32.mrf.mxu0
  %6677 = vdwg.mxu0
  %6678 = vmatpush.bf16.msra.mxu0 %v5029
  %6679 = vmatpush.bf16.msra.mxu0 %v5028
  %6680 = vmatpush.bf16.msra.mxu0 %v5027
  %6681 = vmatpush.bf16.msra.mxu0 %v5026
  %6682 = vmatpush.bf16.msra.mxu0 %v5025
  %6683 = vmatpush.bf16.msra.mxu0 %v5024
  %6684 = vmatpush.bf16.msra.mxu0 %v5023
  %6685 = vmatpush.bf16.msra.mxu0 %v5022
  %6686 = vmatmul.bf16.gmra.mxu0 %v146
  %v6687 = vpop.f32.mrf.mxu0
  %v6688 = vadd.f32 %v6675, %v6687
  %v6689 = vpop.f32.mrf.mxu0
  %6690 = vdwg.mxu0
  %6691 = vmatpush.bf16.msra.mxu0 %v5037
  %6692 = vmatpush.bf16.msra.mxu0 %v5036
  %6693 = vmatpush.bf16.msra.mxu0 %v5035
  %6694 = vmatpush.bf16.msra.mxu0 %v5034
  %6695 = vmatpush.bf16.msra.mxu0 %v5033
  %6696 = vmatpush.bf16.msra.mxu0 %v5032
  %6697 = vmatpush.bf16.msra.mxu0 %v5031
  %6698 = vmatpush.bf16.msra.mxu0 %v5030
  %6699 = vmatmul.bf16.gmra.mxu0 %v147
  %v6700 = vpop.f32.mrf.mxu0
  %v6701 = vadd.f32 %v6688, %v6700
  %v6702 = vpop.f32.mrf.mxu0
  %6703 = vdwg.mxu0
  %6704 = vmatpush.bf16.msra.mxu0 %v5045
  %6705 = vmatpush.bf16.msra.mxu0 %v5044
  %6706 = vmatpush.bf16.msra.mxu0 %v5043
  %6707 = vmatpush.bf16.msra.mxu0 %v5042
  %6708 = vmatpush.bf16.msra.mxu0 %v5041
  %6709 = vmatpush.bf16.msra.mxu0 %v5040
  %6710 = vmatpush.bf16.msra.mxu0 %v5039
  %6711 = vmatpush.bf16.msra.mxu0 %v5038
  %6712 = vmatmul.bf16.gmra.mxu0 %v148
  %v6713 = vpop.f32.mrf.mxu0
  %v6714 = vadd.f32 %v6701, %v6713
  %v6715 = vpop.f32.mrf.mxu0
  %6716 = vdwg.mxu0
  %6717 = vmatpush.bf16.msra.mxu0 %v5053
  %6718 = vmatpush.bf16.msra.mxu0 %v5052
  %6719 = vmatpush.bf16.msra.mxu0 %v5051
  %6720 = vmatpush.bf16.msra.mxu0 %v5050
  %6721 = vmatpush.bf16.msra.mxu0 %v5049
  %6722 = vmatpush.bf16.msra.mxu0 %v5048
  %6723 = vmatpush.bf16.msra.mxu0 %v5047
  %6724 = vmatpush.bf16.msra.mxu0 %v5046
  %6725 = vmatmul.bf16.gmra.mxu0 %v149
  %v6726 = vpop.f32.mrf.mxu0
  %v6727 = vadd.f32 %v6714, %v6726
  %v6728 = vpop.f32.mrf.mxu0
  %6729 = vdwg.mxu0
  %6730 = vmatpush.bf16.msra.mxu0 %v5061
  %6731 = vmatpush.bf16.msra.mxu0 %v5060
  %6732 = vmatpush.bf16.msra.mxu0 %v5059
  %6733 = vmatpush.bf16.msra.mxu0 %v5058
  %6734 = vmatpush.bf16.msra.mxu0 %v5057
  %6735 = vmatpush.bf16.msra.mxu0 %v5056
  %6736 = vmatpush.bf16.msra.mxu0 %v5055
  %6737 = vmatpush.bf16.msra.mxu0 %v5054
  %6738 = vmatmul.bf16.gmra.mxu0 %v150
  %v6739 = vpop.f32.mrf.mxu0
  %v6740 = vadd.f32 %v6727, %v6739
  %v6741 = vpop.f32.mrf.mxu0
  %6742 = vdwg.mxu0
  %6743 = vmatpush.bf16.msra.mxu0 %v5069
  %6744 = vmatpush.bf16.msra.mxu0 %v5068
  %6745 = vmatpush.bf16.msra.mxu0 %v5067
  %6746 = vmatpush.bf16.msra.mxu0 %v5066
  %6747 = vmatpush.bf16.msra.mxu0 %v5065
  %6748 = vmatpush.bf16.msra.mxu0 %v5064
  %6749 = vmatpush.bf16.msra.mxu0 %v5063
  %6750 = vmatpush.bf16.msra.mxu0 %v5062
  %6751 = vmatmul.bf16.gmra.mxu0 %v151
  %v6752 = vpop.f32.mrf.mxu0
  %v6753 = vadd.f32 %v6740, %v6752
  %v6754 = vpop.f32.mrf.mxu0
  %6755 = vdwg.mxu0
  %6756 = vmatpush.bf16.msra.mxu0 %v5077
  %6757 = vmatpush.bf16.msra.mxu0 %v5076
  %6758 = vmatpush.bf16.msra.mxu0 %v5075
  %6759 = vmatpush.bf16.msra.mxu0 %v5074
  %6760 = vmatpush.bf16.msra.mxu0 %v5073
  %6761 = vmatpush.bf16.msra.mxu0 %v5072
  %6762 = vmatpush.bf16.msra.mxu0 %v5071
  %6763 = vmatpush.bf16.msra.mxu0 %v5070
  %6764 = vmatmul.bf16.gmra.mxu0 %v152
  %v6765 = vpop.f32.mrf.mxu0
  %v6766 = vadd.f32 %v6753, %v6765
  %v6767 = vpop.f32.mrf.mxu0
  %6768 = vdwg.mxu0
  %6769 = vmatpush.bf16.msra.mxu0 %v5085
  %6770 = vmatpush.bf16.msra.mxu0 %v5084
  %6771 = vmatpush.bf16.msra.mxu0 %v5083
  %6772 = vmatpush.bf16.msra.mxu0 %v5082
  %6773 = vmatpush.bf16.msra.mxu0 %v5081
  %6774 = vmatpush.bf16.msra.mxu0 %v5080
  %6775 = vmatpush.bf16.msra.mxu0 %v5079
  %6776 = vmatpush.bf16.msra.mxu0 %v5078
  %6777 = vmatmul.bf16.gmra.mxu0 %v153
  %v6778 = vpop.f32.mrf.mxu0
  %v6779 = vadd.f32 %v6766, %v6778
  %v6780 = vpop.f32.mrf.mxu0
  %6781 = vdwg.mxu0
  %6782 = vmatpush.bf16.msra.mxu0 %v5093
  %6783 = vmatpush.bf16.msra.mxu0 %v5092
  %6784 = vmatpush.bf16.msra.mxu0 %v5091
  %6785 = vmatpush.bf16.msra.mxu0 %v5090
  %6786 = vmatpush.bf16.msra.mxu0 %v5089
  %6787 = vmatpush.bf16.msra.mxu0 %v5088
  %6788 = vmatpush.bf16.msra.mxu0 %v5087
  %6789 = vmatpush.bf16.msra.mxu0 %v5086
  %6790 = vmatmul.bf16.gmra.mxu0 %v154
  %v6791 = vpop.f32.mrf.mxu0
  %v6792 = vadd.f32 %v6779, %v6791
  %v6793 = vpop.f32.mrf.mxu0
  %6794 = vdwg.mxu0
  %6795 = vmatpush.bf16.msra.mxu0 %v5101
  %6796 = vmatpush.bf16.msra.mxu0 %v5100
  %6797 = vmatpush.bf16.msra.mxu0 %v5099
  %6798 = vmatpush.bf16.msra.mxu0 %v5098
  %6799 = vmatpush.bf16.msra.mxu0 %v5097
  %6800 = vmatpush.bf16.msra.mxu0 %v5096
  %6801 = vmatpush.bf16.msra.mxu0 %v5095
  %6802 = vmatpush.bf16.msra.mxu0 %v5094
  %6803 = vmatmul.bf16.gmra.mxu0 %v155
  %v6804 = vpop.f32.mrf.mxu0
  %v6805 = vadd.f32 %v6792, %v6804
  %v6806 = vpop.f32.mrf.mxu0
  %6807 = vdwg.mxu0
  %6808 = vmatpush.bf16.msra.mxu0 %v5109
  %6809 = vmatpush.bf16.msra.mxu0 %v5108
  %6810 = vmatpush.bf16.msra.mxu0 %v5107
  %6811 = vmatpush.bf16.msra.mxu0 %v5106
  %6812 = vmatpush.bf16.msra.mxu0 %v5105
  %6813 = vmatpush.bf16.msra.mxu0 %v5104
  %6814 = vmatpush.bf16.msra.mxu0 %v5103
  %6815 = vmatpush.bf16.msra.mxu0 %v5102
  %6816 = vmatmul.bf16.gmra.mxu0 %v156
  %v6817 = vpop.f32.mrf.mxu0
  %v6818 = vadd.f32 %v6805, %v6817
  %v6819 = vpop.f32.mrf.mxu0
  %6820 = vdwg.mxu0
  %6821 = vmatpush.bf16.msra.mxu0 %v5117
  %6822 = vmatpush.bf16.msra.mxu0 %v5116
  %6823 = vmatpush.bf16.msra.mxu0 %v5115
  %6824 = vmatpush.bf16.msra.mxu0 %v5114
  %6825 = vmatpush.bf16.msra.mxu0 %v5113
  %6826 = vmatpush.bf16.msra.mxu0 %v5112
  %6827 = vmatpush.bf16.msra.mxu0 %v5111
  %6828 = vmatpush.bf16.msra.mxu0 %v5110
  %6829 = vmatmul.bf16.gmra.mxu0 %v157
  %v6830 = vpop.f32.mrf.mxu0
  %v6831 = vadd.f32 %v6818, %v6830
  %v6832 = vpop.f32.mrf.mxu0
  %6833 = vdwg.mxu0
  %6834 = vmatpush.bf16.msra.mxu0 %v5125
  %6835 = vmatpush.bf16.msra.mxu0 %v5124
  %6836 = vmatpush.bf16.msra.mxu0 %v5123
  %6837 = vmatpush.bf16.msra.mxu0 %v5122
  %6838 = vmatpush.bf16.msra.mxu0 %v5121
  %6839 = vmatpush.bf16.msra.mxu0 %v5120
  %6840 = vmatpush.bf16.msra.mxu0 %v5119
  %6841 = vmatpush.bf16.msra.mxu0 %v5118
  %6842 = vmatmul.bf16.gmra.mxu0 %v158
  %v6843 = vpop.f32.mrf.mxu0
  %v6844 = vadd.f32 %v6831, %v6843
  %v6845 = vpop.f32.mrf.mxu0
  %6846 = vdwg.mxu0
  %6847 = vmatpush.bf16.msra.mxu0 %v5133
  %6848 = vmatpush.bf16.msra.mxu0 %v5132
  %6849 = vmatpush.bf16.msra.mxu0 %v5131
  %6850 = vmatpush.bf16.msra.mxu0 %v5130
  %6851 = vmatpush.bf16.msra.mxu0 %v5129
  %6852 = vmatpush.bf16.msra.mxu0 %v5128
  %6853 = vmatpush.bf16.msra.mxu0 %v5127
  %6854 = vmatpush.bf16.msra.mxu0 %v5126
  %6855 = vmatmul.bf16.gmra.mxu0 %v159
  %v6856 = vpop.f32.mrf.mxu0
  %v6857 = vadd.f32 %v6844, %v6856
  %v6858 = vpop.f32.mrf.mxu0
  %6859 = vdwg.mxu0
  %6860 = vmatpush.bf16.msra.mxu0 %v5141
  %6861 = vmatpush.bf16.msra.mxu0 %v5140
  %6862 = vmatpush.bf16.msra.mxu0 %v5139
  %6863 = vmatpush.bf16.msra.mxu0 %v5138
  %6864 = vmatpush.bf16.msra.mxu0 %v5137
  %6865 = vmatpush.bf16.msra.mxu0 %v5136
  %6866 = vmatpush.bf16.msra.mxu0 %v5135
  %6867 = vmatpush.bf16.msra.mxu0 %v5134
  %6868 = vmatmul.bf16.gmra.mxu0 %v160
  %v6869 = vpop.f32.mrf.mxu0
  %v6870 = vadd.f32 %v6857, %v6869
  %v6871 = vpop.f32.mrf.mxu0
  %6872 = vdwg.mxu0
  %6873 = vmatpush.bf16.msra.mxu0 %v5149
  %6874 = vmatpush.bf16.msra.mxu0 %v5148
  %6875 = vmatpush.bf16.msra.mxu0 %v5147
  %6876 = vmatpush.bf16.msra.mxu0 %v5146
  %6877 = vmatpush.bf16.msra.mxu0 %v5145
  %6878 = vmatpush.bf16.msra.mxu0 %v5144
  %6879 = vmatpush.bf16.msra.mxu0 %v5143
  %6880 = vmatpush.bf16.msra.mxu0 %v5142
  %6881 = vmatmul.bf16.gmra.mxu0 %v161
  %v6882 = vpop.f32.mrf.mxu0
  %v6883 = vadd.f32 %v6870, %v6882
  %v6884 = vpop.f32.mrf.mxu0
  %6885 = vdwg.mxu0
  %6886 = vmatpush.bf16.msra.mxu0 %v5157
  %6887 = vmatpush.bf16.msra.mxu0 %v5156
  %6888 = vmatpush.bf16.msra.mxu0 %v5155
  %6889 = vmatpush.bf16.msra.mxu0 %v5154
  %6890 = vmatpush.bf16.msra.mxu0 %v5153
  %6891 = vmatpush.bf16.msra.mxu0 %v5152
  %6892 = vmatpush.bf16.msra.mxu0 %v5151
  %6893 = vmatpush.bf16.msra.mxu0 %v5150
  %6894 = vmatmul.bf16.gmra.mxu0 %v162
  %v6895 = vpop.f32.mrf.mxu0
  %v6896 = vadd.f32 %v6883, %v6895
  %v6897 = vpop.f32.mrf.mxu0
  %6898 = vdwg.mxu0
  %6899 = vmatpush.bf16.msra.mxu0 %v5165
  %6900 = vmatpush.bf16.msra.mxu0 %v5164
  %6901 = vmatpush.bf16.msra.mxu0 %v5163
  %6902 = vmatpush.bf16.msra.mxu0 %v5162
  %6903 = vmatpush.bf16.msra.mxu0 %v5161
  %6904 = vmatpush.bf16.msra.mxu0 %v5160
  %6905 = vmatpush.bf16.msra.mxu0 %v5159
  %6906 = vmatpush.bf16.msra.mxu0 %v5158
  %6907 = vmatmul.bf16.gmra.mxu0 %v163
  %v6908 = vpop.f32.mrf.mxu0
  %v6909 = vadd.f32 %v6896, %v6908
  %v6910 = vpop.f32.mrf.mxu0
  %6911 = vdwg.mxu0
  %6912 = vmatpush.bf16.msra.mxu0 %v5173
  %6913 = vmatpush.bf16.msra.mxu0 %v5172
  %6914 = vmatpush.bf16.msra.mxu0 %v5171
  %6915 = vmatpush.bf16.msra.mxu0 %v5170
  %6916 = vmatpush.bf16.msra.mxu0 %v5169
  %6917 = vmatpush.bf16.msra.mxu0 %v5168
  %6918 = vmatpush.bf16.msra.mxu0 %v5167
  %6919 = vmatpush.bf16.msra.mxu0 %v5166
  %6920 = vmatmul.bf16.gmra.mxu0 %v164
  %v6921 = vpop.f32.mrf.mxu0
  %v6922 = vadd.f32 %v6909, %v6921
  %v6923 = vpop.f32.mrf.mxu0
  %6924 = vdwg.mxu0
  %6925 = vmatpush.bf16.msra.mxu0 %v5181
  %6926 = vmatpush.bf16.msra.mxu0 %v5180
  %6927 = vmatpush.bf16.msra.mxu0 %v5179
  %6928 = vmatpush.bf16.msra.mxu0 %v5178
  %6929 = vmatpush.bf16.msra.mxu0 %v5177
  %6930 = vmatpush.bf16.msra.mxu0 %v5176
  %6931 = vmatpush.bf16.msra.mxu0 %v5175
  %6932 = vmatpush.bf16.msra.mxu0 %v5174
  %6933 = vmatmul.bf16.gmra.mxu0 %v165
  %v6934 = vpop.f32.mrf.mxu0
  %v6935 = vadd.f32 %v6922, %v6934
  %v6936 = vpop.f32.mrf.mxu0
  %6937 = vdwg.mxu0
  %6938 = vmatpush.bf16.msra.mxu0 %v5189
  %6939 = vmatpush.bf16.msra.mxu0 %v5188
  %6940 = vmatpush.bf16.msra.mxu0 %v5187
  %6941 = vmatpush.bf16.msra.mxu0 %v5186
  %6942 = vmatpush.bf16.msra.mxu0 %v5185
  %6943 = vmatpush.bf16.msra.mxu0 %v5184
  %6944 = vmatpush.bf16.msra.mxu0 %v5183
  %6945 = vmatpush.bf16.msra.mxu0 %v5182
  %6946 = vmatmul.bf16.gmra.mxu0 %v166
  %v6947 = vpop.f32.mrf.mxu0
  %v6948 = vadd.f32 %v6935, %v6947
  %v6949 = vpop.f32.mrf.mxu0
  %6950 = vdwg.mxu0
  %6951 = vmatpush.bf16.msra.mxu0 %v5197
  %6952 = vmatpush.bf16.msra.mxu0 %v5196
  %6953 = vmatpush.bf16.msra.mxu0 %v5195
  %6954 = vmatpush.bf16.msra.mxu0 %v5194
  %6955 = vmatpush.bf16.msra.mxu0 %v5193
  %6956 = vmatpush.bf16.msra.mxu0 %v5192
  %6957 = vmatpush.bf16.msra.mxu0 %v5191
  %6958 = vmatpush.bf16.msra.mxu0 %v5190
  %6959 = vmatmul.bf16.gmra.mxu0 %v167
  %v6960 = vpop.f32.mrf.mxu0
  %v6961 = vadd.f32 %v6948, %v6960
  %v6962 = vpop.f32.mrf.mxu0
  %6963 = vdwg.mxu0
  %6964 = vmatpush.bf16.msra.mxu0 %v5205
  %6965 = vmatpush.bf16.msra.mxu0 %v5204
  %6966 = vmatpush.bf16.msra.mxu0 %v5203
  %6967 = vmatpush.bf16.msra.mxu0 %v5202
  %6968 = vmatpush.bf16.msra.mxu0 %v5201
  %6969 = vmatpush.bf16.msra.mxu0 %v5200
  %6970 = vmatpush.bf16.msra.mxu0 %v5199
  %6971 = vmatpush.bf16.msra.mxu0 %v5198
  %6972 = vmatmul.bf16.gmra.mxu0 %v168
  %v6973 = vpop.f32.mrf.mxu0
  %v6974 = vadd.f32 %v6961, %v6973
  %v6975 = vpop.f32.mrf.mxu0
  %6976 = vdwg.mxu0
  %6977 = vmatpush.bf16.msra.mxu0 %v5213
  %6978 = vmatpush.bf16.msra.mxu0 %v5212
  %6979 = vmatpush.bf16.msra.mxu0 %v5211
  %6980 = vmatpush.bf16.msra.mxu0 %v5210
  %6981 = vmatpush.bf16.msra.mxu0 %v5209
  %6982 = vmatpush.bf16.msra.mxu0 %v5208
  %6983 = vmatpush.bf16.msra.mxu0 %v5207
  %6984 = vmatpush.bf16.msra.mxu0 %v5206
  %6985 = vmatmul.bf16.gmra.mxu0 %v169
  %v6986 = vpop.f32.mrf.mxu0
  %v6987 = vadd.f32 %v6974, %v6986
  %v6988 = vpop.f32.mrf.mxu0
  %6989 = vdwg.mxu0
  %6990 = vmatpush.bf16.msra.mxu0 %v5221
  %6991 = vmatpush.bf16.msra.mxu0 %v5220
  %6992 = vmatpush.bf16.msra.mxu0 %v5219
  %6993 = vmatpush.bf16.msra.mxu0 %v5218
  %6994 = vmatpush.bf16.msra.mxu0 %v5217
  %6995 = vmatpush.bf16.msra.mxu0 %v5216
  %6996 = vmatpush.bf16.msra.mxu0 %v5215
  %6997 = vmatpush.bf16.msra.mxu0 %v5214
  %6998 = vmatmul.bf16.gmra.mxu0 %v170
  %v6999 = vpop.f32.mrf.mxu0
  %v7000 = vadd.f32 %v6987, %v6999
  %v7001 = vpop.f32.mrf.mxu0
  %7002 = vdwg.mxu0
  %7003 = vmatpush.bf16.msra.mxu0 %v5229
  %7004 = vmatpush.bf16.msra.mxu0 %v5228
  %7005 = vmatpush.bf16.msra.mxu0 %v5227
  %7006 = vmatpush.bf16.msra.mxu0 %v5226
  %7007 = vmatpush.bf16.msra.mxu0 %v5225
  %7008 = vmatpush.bf16.msra.mxu0 %v5224
  %7009 = vmatpush.bf16.msra.mxu0 %v5223
  %7010 = vmatpush.bf16.msra.mxu0 %v5222
  %7011 = vmatmul.bf16.gmra.mxu0 %v171
  %v7012 = vpop.f32.mrf.mxu0
  %v7013 = vadd.f32 %v7000, %v7012
  %v7014 = vpop.f32.mrf.mxu0
  %7015 = vdwg.mxu0
  %7016 = vmatpush.bf16.msra.mxu0 %v5237
  %7017 = vmatpush.bf16.msra.mxu0 %v5236
  %7018 = vmatpush.bf16.msra.mxu0 %v5235
  %7019 = vmatpush.bf16.msra.mxu0 %v5234
  %7020 = vmatpush.bf16.msra.mxu0 %v5233
  %7021 = vmatpush.bf16.msra.mxu0 %v5232
  %7022 = vmatpush.bf16.msra.mxu0 %v5231
  %7023 = vmatpush.bf16.msra.mxu0 %v5230
  %7024 = vmatmul.bf16.gmra.mxu0 %v172
  %v7025 = vpop.f32.mrf.mxu0
  %v7026 = vadd.f32 %v7013, %v7025
  %v7027 = vpop.f32.mrf.mxu0
  %7028 = vdwg.mxu0
  %7029 = vmatpush.bf16.msra.mxu0 %v5245
  %7030 = vmatpush.bf16.msra.mxu0 %v5244
  %7031 = vmatpush.bf16.msra.mxu0 %v5243
  %7032 = vmatpush.bf16.msra.mxu0 %v5242
  %7033 = vmatpush.bf16.msra.mxu0 %v5241
  %7034 = vmatpush.bf16.msra.mxu0 %v5240
  %7035 = vmatpush.bf16.msra.mxu0 %v5239
  %7036 = vmatpush.bf16.msra.mxu0 %v5238
  %7037 = vmatmul.bf16.gmra.mxu0 %v173
  %v7038 = vpop.f32.mrf.mxu0
  %v7039 = vadd.f32 %v7026, %v7038
  %v7040 = vpop.f32.mrf.mxu0
  %7041 = vdwg.mxu0
  %7042 = vmatpush.bf16.msra.mxu0 %v5253
  %7043 = vmatpush.bf16.msra.mxu0 %v5252
  %7044 = vmatpush.bf16.msra.mxu0 %v5251
  %7045 = vmatpush.bf16.msra.mxu0 %v5250
  %7046 = vmatpush.bf16.msra.mxu0 %v5249
  %7047 = vmatpush.bf16.msra.mxu0 %v5248
  %7048 = vmatpush.bf16.msra.mxu0 %v5247
  %7049 = vmatpush.bf16.msra.mxu0 %v5246
  %7050 = vmatmul.bf16.gmra.mxu0 %v174
  %v7051 = vpop.f32.mrf.mxu0
  %v7052 = vadd.f32 %v7039, %v7051
  %v7053 = vpop.f32.mrf.mxu0
  %7054 = vdwg.mxu0
  %7055 = vmatpush.bf16.msra.mxu0 %v5261
  %7056 = vmatpush.bf16.msra.mxu0 %v5260
  %7057 = vmatpush.bf16.msra.mxu0 %v5259
  %7058 = vmatpush.bf16.msra.mxu0 %v5258
  %7059 = vmatpush.bf16.msra.mxu0 %v5257
  %7060 = vmatpush.bf16.msra.mxu0 %v5256
  %7061 = vmatpush.bf16.msra.mxu0 %v5255
  %7062 = vmatpush.bf16.msra.mxu0 %v5254
  %7063 = vmatmul.bf16.gmra.mxu0 %v175
  %v7064 = vpop.f32.mrf.mxu0
  %v7065 = vadd.f32 %v7052, %v7064
  %v7066 = vpop.f32.mrf.mxu0
  %7067 = vdwg.mxu0
  %7068 = vmatpush.bf16.msra.mxu0 %v5269
  %7069 = vmatpush.bf16.msra.mxu0 %v5268
  %7070 = vmatpush.bf16.msra.mxu0 %v5267
  %7071 = vmatpush.bf16.msra.mxu0 %v5266
  %7072 = vmatpush.bf16.msra.mxu0 %v5265
  %7073 = vmatpush.bf16.msra.mxu0 %v5264
  %7074 = vmatpush.bf16.msra.mxu0 %v5263
  %7075 = vmatpush.bf16.msra.mxu0 %v5262
  %7076 = vmatmul.bf16.gmra.mxu0 %v176
  %v7077 = vpop.f32.mrf.mxu0
  %v7078 = vadd.f32 %v7065, %v7077
  %v7079 = vpop.f32.mrf.mxu0
  %7080 = vdwg.mxu0
  %7081 = vmatpush.bf16.msra.mxu0 %v5277
  %7082 = vmatpush.bf16.msra.mxu0 %v5276
  %7083 = vmatpush.bf16.msra.mxu0 %v5275
  %7084 = vmatpush.bf16.msra.mxu0 %v5274
  %7085 = vmatpush.bf16.msra.mxu0 %v5273
  %7086 = vmatpush.bf16.msra.mxu0 %v5272
  %7087 = vmatpush.bf16.msra.mxu0 %v5271
  %7088 = vmatpush.bf16.msra.mxu0 %v5270
  %7089 = vmatmul.bf16.gmra.mxu0 %v177
  %v7090 = vpop.f32.mrf.mxu0
  %v7091 = vadd.f32 %v7078, %v7090
  %v7092 = vpop.f32.mrf.mxu0
  %7093 = vdwg.mxu0
  %7094 = vmatpush.bf16.msra.mxu0 %v5285
  %7095 = vmatpush.bf16.msra.mxu0 %v5284
  %7096 = vmatpush.bf16.msra.mxu0 %v5283
  %7097 = vmatpush.bf16.msra.mxu0 %v5282
  %7098 = vmatpush.bf16.msra.mxu0 %v5281
  %7099 = vmatpush.bf16.msra.mxu0 %v5280
  %7100 = vmatpush.bf16.msra.mxu0 %v5279
  %7101 = vmatpush.bf16.msra.mxu0 %v5278
  %7102 = vmatmul.bf16.gmra.mxu0 %v178
  %v7103 = vpop.f32.mrf.mxu0
  %v7104 = vadd.f32 %v7091, %v7103
  %v7105 = vpop.f32.mrf.mxu0
  %7106 = vdwg.mxu0
  %7107 = vmatpush.bf16.msra.mxu0 %v5293
  %7108 = vmatpush.bf16.msra.mxu0 %v5292
  %7109 = vmatpush.bf16.msra.mxu0 %v5291
  %7110 = vmatpush.bf16.msra.mxu0 %v5290
  %7111 = vmatpush.bf16.msra.mxu0 %v5289
  %7112 = vmatpush.bf16.msra.mxu0 %v5288
  %7113 = vmatpush.bf16.msra.mxu0 %v5287
  %7114 = vmatpush.bf16.msra.mxu0 %v5286
  %7115 = vmatmul.bf16.gmra.mxu0 %v179
  %v7116 = vpop.f32.mrf.mxu0
  %v7117 = vadd.f32 %v7104, %v7116
  %v7118 = vpop.f32.mrf.mxu0
  %7119 = vdwg.mxu0
  %7120 = vmatpush.bf16.msra.mxu0 %v5301
  %7121 = vmatpush.bf16.msra.mxu0 %v5300
  %7122 = vmatpush.bf16.msra.mxu0 %v5299
  %7123 = vmatpush.bf16.msra.mxu0 %v5298
  %7124 = vmatpush.bf16.msra.mxu0 %v5297
  %7125 = vmatpush.bf16.msra.mxu0 %v5296
  %7126 = vmatpush.bf16.msra.mxu0 %v5295
  %7127 = vmatpush.bf16.msra.mxu0 %v5294
  %7128 = vmatmul.bf16.gmra.mxu0 %v180
  %v7129 = vpop.f32.mrf.mxu0
  %v7130 = vadd.f32 %v7117, %v7129
  %v7131 = vpop.f32.mrf.mxu0
  %7132 = vdwg.mxu0
  %7133 = vmatpush.bf16.msra.mxu0 %v5309
  %7134 = vmatpush.bf16.msra.mxu0 %v5308
  %7135 = vmatpush.bf16.msra.mxu0 %v5307
  %7136 = vmatpush.bf16.msra.mxu0 %v5306
  %7137 = vmatpush.bf16.msra.mxu0 %v5305
  %7138 = vmatpush.bf16.msra.mxu0 %v5304
  %7139 = vmatpush.bf16.msra.mxu0 %v5303
  %7140 = vmatpush.bf16.msra.mxu0 %v5302
  %7141 = vmatmul.bf16.gmra.mxu0 %v181
  %v7142 = vpop.f32.mrf.mxu0
  %v7143 = vadd.f32 %v7130, %v7142
  %v7144 = vpop.f32.mrf.mxu0
  %7145 = vdwg.mxu0
  %7146 = vmatpush.bf16.msra.mxu0 %v5317
  %7147 = vmatpush.bf16.msra.mxu0 %v5316
  %7148 = vmatpush.bf16.msra.mxu0 %v5315
  %7149 = vmatpush.bf16.msra.mxu0 %v5314
  %7150 = vmatpush.bf16.msra.mxu0 %v5313
  %7151 = vmatpush.bf16.msra.mxu0 %v5312
  %7152 = vmatpush.bf16.msra.mxu0 %v5311
  %7153 = vmatpush.bf16.msra.mxu0 %v5310
  %7154 = vmatmul.bf16.gmra.mxu0 %v182
  %v7155 = vpop.f32.mrf.mxu0
  %v7156 = vadd.f32 %v7143, %v7155
  %v7157 = vpop.f32.mrf.mxu0
  %7158 = vdwg.mxu0
  %7159 = vmatpush.bf16.msra.mxu0 %v5325
  %7160 = vmatpush.bf16.msra.mxu0 %v5324
  %7161 = vmatpush.bf16.msra.mxu0 %v5323
  %7162 = vmatpush.bf16.msra.mxu0 %v5322
  %7163 = vmatpush.bf16.msra.mxu0 %v5321
  %7164 = vmatpush.bf16.msra.mxu0 %v5320
  %7165 = vmatpush.bf16.msra.mxu0 %v5319
  %7166 = vmatpush.bf16.msra.mxu0 %v5318
  %7167 = vmatmul.bf16.gmra.mxu0 %v183
  %v7168 = vpop.f32.mrf.mxu0
  %v7169 = vadd.f32 %v7156, %v7168
  %v7170 = vpop.f32.mrf.mxu0
  %7171 = vdwg.mxu0
  %7172 = vmatpush.bf16.msra.mxu0 %v5333
  %7173 = vmatpush.bf16.msra.mxu0 %v5332
  %7174 = vmatpush.bf16.msra.mxu0 %v5331
  %7175 = vmatpush.bf16.msra.mxu0 %v5330
  %7176 = vmatpush.bf16.msra.mxu0 %v5329
  %7177 = vmatpush.bf16.msra.mxu0 %v5328
  %7178 = vmatpush.bf16.msra.mxu0 %v5327
  %7179 = vmatpush.bf16.msra.mxu0 %v5326
  %7180 = vmatmul.bf16.gmra.mxu0 %v184
  %v7181 = vpop.f32.mrf.mxu0
  %v7182 = vadd.f32 %v7169, %v7181
  %v7183 = vpop.f32.mrf.mxu0
  %7184 = vdwg.mxu0
  %7185 = vmatpush.bf16.msra.mxu0 %v5341
  %7186 = vmatpush.bf16.msra.mxu0 %v5340
  %7187 = vmatpush.bf16.msra.mxu0 %v5339
  %7188 = vmatpush.bf16.msra.mxu0 %v5338
  %7189 = vmatpush.bf16.msra.mxu0 %v5337
  %7190 = vmatpush.bf16.msra.mxu0 %v5336
  %7191 = vmatpush.bf16.msra.mxu0 %v5335
  %7192 = vmatpush.bf16.msra.mxu0 %v5334
  %7193 = vmatmul.bf16.gmra.mxu0 %v185
  %v7194 = vpop.f32.mrf.mxu0
  %v7195 = vadd.f32 %v7182, %v7194
  %v7196 = vpop.f32.mrf.mxu0
  %7197 = vdwg.mxu0
  %7198 = vmatpush.bf16.msra.mxu0 %v5349
  %7199 = vmatpush.bf16.msra.mxu0 %v5348
  %7200 = vmatpush.bf16.msra.mxu0 %v5347
  %7201 = vmatpush.bf16.msra.mxu0 %v5346
  %7202 = vmatpush.bf16.msra.mxu0 %v5345
  %7203 = vmatpush.bf16.msra.mxu0 %v5344
  %7204 = vmatpush.bf16.msra.mxu0 %v5343
  %7205 = vmatpush.bf16.msra.mxu0 %v5342
  %7206 = vmatmul.bf16.gmra.mxu0 %v186
  %v7207 = vpop.f32.mrf.mxu0
  %v7208 = vadd.f32 %v7195, %v7207
  %v7209 = vpop.f32.mrf.mxu0
  %7210 = vdwg.mxu0
  %7211 = vmatpush.bf16.msra.mxu0 %v5357
  %7212 = vmatpush.bf16.msra.mxu0 %v5356
  %7213 = vmatpush.bf16.msra.mxu0 %v5355
  %7214 = vmatpush.bf16.msra.mxu0 %v5354
  %7215 = vmatpush.bf16.msra.mxu0 %v5353
  %7216 = vmatpush.bf16.msra.mxu0 %v5352
  %7217 = vmatpush.bf16.msra.mxu0 %v5351
  %7218 = vmatpush.bf16.msra.mxu0 %v5350
  %7219 = vmatmul.bf16.gmra.mxu0 %v187
  %v7220 = vpop.f32.mrf.mxu0
  %v7221 = vadd.f32 %v7208, %v7220
  %v7222 = vpop.f32.mrf.mxu0
  %7223 = vdwg.mxu0
  %7224 = vmatpush.bf16.msra.mxu0 %v5365
  %7225 = vmatpush.bf16.msra.mxu0 %v5364
  %7226 = vmatpush.bf16.msra.mxu0 %v5363
  %7227 = vmatpush.bf16.msra.mxu0 %v5362
  %7228 = vmatpush.bf16.msra.mxu0 %v5361
  %7229 = vmatpush.bf16.msra.mxu0 %v5360
  %7230 = vmatpush.bf16.msra.mxu0 %v5359
  %7231 = vmatpush.bf16.msra.mxu0 %v5358
  %7232 = vmatmul.bf16.gmra.mxu0 %v188
  %v7233 = vpop.f32.mrf.mxu0
  %v7234 = vadd.f32 %v7221, %v7233
  %v7235 = vpop.f32.mrf.mxu0
  %7236 = vdwg.mxu0
  %7237 = vmatpush.bf16.msra.mxu0 %v5373
  %7238 = vmatpush.bf16.msra.mxu0 %v5372
  %7239 = vmatpush.bf16.msra.mxu0 %v5371
  %7240 = vmatpush.bf16.msra.mxu0 %v5370
  %7241 = vmatpush.bf16.msra.mxu0 %v5369
  %7242 = vmatpush.bf16.msra.mxu0 %v5368
  %7243 = vmatpush.bf16.msra.mxu0 %v5367
  %7244 = vmatpush.bf16.msra.mxu0 %v5366
  %7245 = vmatmul.bf16.gmra.mxu0 %v189
  %v7246 = vpop.f32.mrf.mxu0
  %v7247 = vadd.f32 %v7234, %v7246
  %v7248 = vpop.f32.mrf.mxu0
  %7249 = vdwg.mxu0
  %7250 = vmatpush.bf16.msra.mxu0 %v5381
  %7251 = vmatpush.bf16.msra.mxu0 %v5380
  %7252 = vmatpush.bf16.msra.mxu0 %v5379
  %7253 = vmatpush.bf16.msra.mxu0 %v5378
  %7254 = vmatpush.bf16.msra.mxu0 %v5377
  %7255 = vmatpush.bf16.msra.mxu0 %v5376
  %7256 = vmatpush.bf16.msra.mxu0 %v5375
  %7257 = vmatpush.bf16.msra.mxu0 %v5374
  %7258 = vmatmul.bf16.gmra.mxu0 %v190
  %v7259 = vpop.f32.mrf.mxu0
  %v7260 = vadd.f32 %v7247, %v7259
  %v7261 = vpop.f32.mrf.mxu0
  %7262 = vdwg.mxu0
  %7263 = vmatpush.bf16.msra.mxu0 %v5389
  %7264 = vmatpush.bf16.msra.mxu0 %v5388
  %7265 = vmatpush.bf16.msra.mxu0 %v5387
  %7266 = vmatpush.bf16.msra.mxu0 %v5386
  %7267 = vmatpush.bf16.msra.mxu0 %v5385
  %7268 = vmatpush.bf16.msra.mxu0 %v5384
  %7269 = vmatpush.bf16.msra.mxu0 %v5383
  %7270 = vmatpush.bf16.msra.mxu0 %v5382
  %7271 = vmatmul.bf16.gmra.mxu0 %v191
  %v7272 = vpop.f32.mrf.mxu0
  %v7273 = vadd.f32 %v7260, %v7272
  %v7274 = vpop.f32.mrf.mxu0
  %7275 = vdwg.mxu0
  %7276 = vmatpush.bf16.msra.mxu0 %v5397
  %7277 = vmatpush.bf16.msra.mxu0 %v5396
  %7278 = vmatpush.bf16.msra.mxu0 %v5395
  %7279 = vmatpush.bf16.msra.mxu0 %v5394
  %7280 = vmatpush.bf16.msra.mxu0 %v5393
  %7281 = vmatpush.bf16.msra.mxu0 %v5392
  %7282 = vmatpush.bf16.msra.mxu0 %v5391
  %7283 = vmatpush.bf16.msra.mxu0 %v5390
  %7284 = vmatmul.bf16.gmra.mxu0 %v192
  %v7285 = vpop.f32.mrf.mxu0
  %v7286 = vadd.f32 %v7273, %v7285
  %v7287 = vpop.f32.mrf.mxu0
  %7288 = vdwg.mxu0
  %7289 = vmatpush.bf16.msra.mxu0 %v5405
  %7290 = vmatpush.bf16.msra.mxu0 %v5404
  %7291 = vmatpush.bf16.msra.mxu0 %v5403
  %7292 = vmatpush.bf16.msra.mxu0 %v5402
  %7293 = vmatpush.bf16.msra.mxu0 %v5401
  %7294 = vmatpush.bf16.msra.mxu0 %v5400
  %7295 = vmatpush.bf16.msra.mxu0 %v5399
  %7296 = vmatpush.bf16.msra.mxu0 %v5398
  %7297 = vmatmul.bf16.gmra.mxu0 %v193
  %v7298 = vpop.f32.mrf.mxu0
  %v7299 = vadd.f32 %v7286, %v7298
  %v7300 = vpop.f32.mrf.mxu0
  %7301 = vdwg.mxu0
  %7302 = vmatpush.bf16.msra.mxu0 %v5413
  %7303 = vmatpush.bf16.msra.mxu0 %v5412
  %7304 = vmatpush.bf16.msra.mxu0 %v5411
  %7305 = vmatpush.bf16.msra.mxu0 %v5410
  %7306 = vmatpush.bf16.msra.mxu0 %v5409
  %7307 = vmatpush.bf16.msra.mxu0 %v5408
  %7308 = vmatpush.bf16.msra.mxu0 %v5407
  %7309 = vmatpush.bf16.msra.mxu0 %v5406
  %7310 = vmatmul.bf16.gmra.mxu0 %v194
  %v7311 = vpop.f32.mrf.mxu0
  %v7312 = vadd.f32 %v7299, %v7311
  %v7313 = vpop.f32.mrf.mxu0
  %7314 = vdwg.mxu0
  %7315 = vmatpush.bf16.msra.mxu0 %v5421
  %7316 = vmatpush.bf16.msra.mxu0 %v5420
  %7317 = vmatpush.bf16.msra.mxu0 %v5419
  %7318 = vmatpush.bf16.msra.mxu0 %v5418
  %7319 = vmatpush.bf16.msra.mxu0 %v5417
  %7320 = vmatpush.bf16.msra.mxu0 %v5416
  %7321 = vmatpush.bf16.msra.mxu0 %v5415
  %7322 = vmatpush.bf16.msra.mxu0 %v5414
  %7323 = vmatmul.bf16.gmra.mxu0 %v195
  %v7324 = vpop.f32.mrf.mxu0
  %v7325 = vadd.f32 %v7312, %v7324
  %v7326 = vpop.f32.mrf.mxu0
  %7327 = vdwg.mxu0
  %7328 = vmatpush.bf16.msra.mxu0 %v5429
  %7329 = vmatpush.bf16.msra.mxu0 %v5428
  %7330 = vmatpush.bf16.msra.mxu0 %v5427
  %7331 = vmatpush.bf16.msra.mxu0 %v5426
  %7332 = vmatpush.bf16.msra.mxu0 %v5425
  %7333 = vmatpush.bf16.msra.mxu0 %v5424
  %7334 = vmatpush.bf16.msra.mxu0 %v5423
  %7335 = vmatpush.bf16.msra.mxu0 %v5422
  %7336 = vmatmul.bf16.gmra.mxu0 %v196
  %v7337 = vpop.f32.mrf.mxu0
  %v7338 = vadd.f32 %v7325, %v7337
  %v7339 = vpop.f32.mrf.mxu0
  %7340 = vdwg.mxu0
  %7341 = vmatpush.bf16.msra.mxu0 %v5437
  %7342 = vmatpush.bf16.msra.mxu0 %v5436
  %7343 = vmatpush.bf16.msra.mxu0 %v5435
  %7344 = vmatpush.bf16.msra.mxu0 %v5434
  %7345 = vmatpush.bf16.msra.mxu0 %v5433
  %7346 = vmatpush.bf16.msra.mxu0 %v5432
  %7347 = vmatpush.bf16.msra.mxu0 %v5431
  %7348 = vmatpush.bf16.msra.mxu0 %v5430
  %7349 = vmatmul.bf16.gmra.mxu0 %v197
  %v7350 = vpop.f32.mrf.mxu0
  %v7351 = vadd.f32 %v7338, %v7350
  %v7352 = vpop.f32.mrf.mxu0
  %7353 = vdwg.mxu0
  %7354 = vmatpush.bf16.msra.mxu0 %v5445
  %7355 = vmatpush.bf16.msra.mxu0 %v5444
  %7356 = vmatpush.bf16.msra.mxu0 %v5443
  %7357 = vmatpush.bf16.msra.mxu0 %v5442
  %7358 = vmatpush.bf16.msra.mxu0 %v5441
  %7359 = vmatpush.bf16.msra.mxu0 %v5440
  %7360 = vmatpush.bf16.msra.mxu0 %v5439
  %7361 = vmatpush.bf16.msra.mxu0 %v5438
  %7362 = vmatmul.bf16.gmra.mxu0 %v198
  %v7363 = vpop.f32.mrf.mxu0
  %v7364 = vadd.f32 %v7351, %v7363
  %v7365 = vpop.f32.mrf.mxu0
  %7366 = vdwg.mxu0
  %7367 = vmatpush.bf16.msra.mxu0 %v5453
  %7368 = vmatpush.bf16.msra.mxu0 %v5452
  %7369 = vmatpush.bf16.msra.mxu0 %v5451
  %7370 = vmatpush.bf16.msra.mxu0 %v5450
  %7371 = vmatpush.bf16.msra.mxu0 %v5449
  %7372 = vmatpush.bf16.msra.mxu0 %v5448
  %7373 = vmatpush.bf16.msra.mxu0 %v5447
  %7374 = vmatpush.bf16.msra.mxu0 %v5446
  %7375 = vmatmul.bf16.gmra.mxu0 %v199
  %v7376 = vpop.f32.mrf.mxu0
  %v7377 = vadd.f32 %v7364, %v7376
  %v7378 = vpop.f32.mrf.mxu0
  %7379 = vdwg.mxu0
  %7380 = vmatpush.bf16.msra.mxu0 %v5461
  %7381 = vmatpush.bf16.msra.mxu0 %v5460
  %7382 = vmatpush.bf16.msra.mxu0 %v5459
  %7383 = vmatpush.bf16.msra.mxu0 %v5458
  %7384 = vmatpush.bf16.msra.mxu0 %v5457
  %7385 = vmatpush.bf16.msra.mxu0 %v5456
  %7386 = vmatpush.bf16.msra.mxu0 %v5455
  %7387 = vmatpush.bf16.msra.mxu0 %v5454
  %7388 = vmatmul.bf16.gmra.mxu0 %v200
  %v7389 = vpop.f32.mrf.mxu0
  %v7390 = vadd.f32 %v7377, %v7389
  %v7391 = vpop.f32.mrf.mxu0
  %7392 = vdwg.mxu0
  %7393 = vmatpush.bf16.msra.mxu0 %v5469
  %7394 = vmatpush.bf16.msra.mxu0 %v5468
  %7395 = vmatpush.bf16.msra.mxu0 %v5467
  %7396 = vmatpush.bf16.msra.mxu0 %v5466
  %7397 = vmatpush.bf16.msra.mxu0 %v5465
  %7398 = vmatpush.bf16.msra.mxu0 %v5464
  %7399 = vmatpush.bf16.msra.mxu0 %v5463
  %7400 = vmatpush.bf16.msra.mxu0 %v5462
  %7401 = vmatmul.bf16.gmra.mxu0 %v201
  %v7402 = vpop.f32.mrf.mxu0
  %v7403 = vadd.f32 %v7390, %v7402
  %v7404 = vpop.f32.mrf.mxu0
  %7405 = vdwg.mxu0
  %7406 = vmatpush.bf16.msra.mxu0 %v5477
  %7407 = vmatpush.bf16.msra.mxu0 %v5476
  %7408 = vmatpush.bf16.msra.mxu0 %v5475
  %7409 = vmatpush.bf16.msra.mxu0 %v5474
  %7410 = vmatpush.bf16.msra.mxu0 %v5473
  %7411 = vmatpush.bf16.msra.mxu0 %v5472
  %7412 = vmatpush.bf16.msra.mxu0 %v5471
  %7413 = vmatpush.bf16.msra.mxu0 %v5470
  %7414 = vmatmul.bf16.gmra.mxu0 %v202
  %v7415 = vpop.f32.mrf.mxu0
  %v7416 = vadd.f32 %v7403, %v7415
  %v7417 = vpop.f32.mrf.mxu0
  %7418 = vdwg.mxu0
  %7419 = vmatpush.bf16.msra.mxu0 %v5485
  %7420 = vmatpush.bf16.msra.mxu0 %v5484
  %7421 = vmatpush.bf16.msra.mxu0 %v5483
  %7422 = vmatpush.bf16.msra.mxu0 %v5482
  %7423 = vmatpush.bf16.msra.mxu0 %v5481
  %7424 = vmatpush.bf16.msra.mxu0 %v5480
  %7425 = vmatpush.bf16.msra.mxu0 %v5479
  %7426 = vmatpush.bf16.msra.mxu0 %v5478
  %7427 = vmatmul.bf16.gmra.mxu0 %v203
  %v7428 = vpop.f32.mrf.mxu0
  %v7429 = vadd.f32 %v7416, %v7428
  %v7430 = vpop.f32.mrf.mxu0
  %7431 = vdwg.mxu0
  %7432 = vmatpush.bf16.msra.mxu0 %v5493
  %7433 = vmatpush.bf16.msra.mxu0 %v5492
  %7434 = vmatpush.bf16.msra.mxu0 %v5491
  %7435 = vmatpush.bf16.msra.mxu0 %v5490
  %7436 = vmatpush.bf16.msra.mxu0 %v5489
  %7437 = vmatpush.bf16.msra.mxu0 %v5488
  %7438 = vmatpush.bf16.msra.mxu0 %v5487
  %7439 = vmatpush.bf16.msra.mxu0 %v5486
  %7440 = vmatmul.bf16.gmra.mxu0 %v204
  %v7441 = vpop.f32.mrf.mxu0
  %v7442 = vadd.f32 %v7429, %v7441
  %v7443 = vpop.f32.mrf.mxu0
  %7444 = vdwg.mxu0
  %7445 = vmatpush.bf16.msra.mxu0 %v5501
  %7446 = vmatpush.bf16.msra.mxu0 %v5500
  %7447 = vmatpush.bf16.msra.mxu0 %v5499
  %7448 = vmatpush.bf16.msra.mxu0 %v5498
  %7449 = vmatpush.bf16.msra.mxu0 %v5497
  %7450 = vmatpush.bf16.msra.mxu0 %v5496
  %7451 = vmatpush.bf16.msra.mxu0 %v5495
  %7452 = vmatpush.bf16.msra.mxu0 %v5494
  %7453 = vmatmul.bf16.gmra.mxu0 %v205
  %v7454 = vpop.f32.mrf.mxu0
  %v7455 = vadd.f32 %v7442, %v7454
  %v7456 = vpop.f32.mrf.mxu0
  %7457 = vdwg.mxu0
  %7458 = vmatpush.bf16.msra.mxu0 %v5509
  %7459 = vmatpush.bf16.msra.mxu0 %v5508
  %7460 = vmatpush.bf16.msra.mxu0 %v5507
  %7461 = vmatpush.bf16.msra.mxu0 %v5506
  %7462 = vmatpush.bf16.msra.mxu0 %v5505
  %7463 = vmatpush.bf16.msra.mxu0 %v5504
  %7464 = vmatpush.bf16.msra.mxu0 %v5503
  %7465 = vmatpush.bf16.msra.mxu0 %v5502
  %7466 = vmatmul.bf16.gmra.mxu0 %v206
  %v7467 = vpop.f32.mrf.mxu0
  %v7468 = vadd.f32 %v7455, %v7467
  %v7469 = vpop.f32.mrf.mxu0
  %7470 = vdwg.mxu0
  %7471 = vmatpush.bf16.msra.mxu0 %v5517
  %7472 = vmatpush.bf16.msra.mxu0 %v5516
  %7473 = vmatpush.bf16.msra.mxu0 %v5515
  %7474 = vmatpush.bf16.msra.mxu0 %v5514
  %7475 = vmatpush.bf16.msra.mxu0 %v5513
  %7476 = vmatpush.bf16.msra.mxu0 %v5512
  %7477 = vmatpush.bf16.msra.mxu0 %v5511
  %7478 = vmatpush.bf16.msra.mxu0 %v5510
  %7479 = vmatmul.bf16.gmra.mxu0 %v207
  %v7480 = vpop.f32.mrf.mxu0
  %v7481 = vadd.f32 %v7468, %v7480
  %v7482 = vpop.f32.mrf.mxu0
  %7483 = vdwg.mxu0
  %7484 = vmatpush.bf16.msra.mxu0 %v5525
  %7485 = vmatpush.bf16.msra.mxu0 %v5524
  %7486 = vmatpush.bf16.msra.mxu0 %v5523
  %7487 = vmatpush.bf16.msra.mxu0 %v5522
  %7488 = vmatpush.bf16.msra.mxu0 %v5521
  %7489 = vmatpush.bf16.msra.mxu0 %v5520
  %7490 = vmatpush.bf16.msra.mxu0 %v5519
  %7491 = vmatpush.bf16.msra.mxu0 %v5518
  %7492 = vmatmul.bf16.gmra.mxu0 %v208
  %v7493 = vpop.f32.mrf.mxu0
  %v7494 = vadd.f32 %v7481, %v7493
  %v7495 = vpop.f32.mrf.mxu0
  %7496 = vdwg.mxu0
  %7497 = vmatpush.bf16.msra.mxu0 %v5533
  %7498 = vmatpush.bf16.msra.mxu0 %v5532
  %7499 = vmatpush.bf16.msra.mxu0 %v5531
  %7500 = vmatpush.bf16.msra.mxu0 %v5530
  %7501 = vmatpush.bf16.msra.mxu0 %v5529
  %7502 = vmatpush.bf16.msra.mxu0 %v5528
  %7503 = vmatpush.bf16.msra.mxu0 %v5527
  %7504 = vmatpush.bf16.msra.mxu0 %v5526
  %7505 = vmatmul.bf16.gmra.mxu0 %v209
  %v7506 = vpop.f32.mrf.mxu0
  %v7507 = vadd.f32 %v7494, %v7506
  %v7508 = vpop.f32.mrf.mxu0
  %7509 = vdwg.mxu0
  %7510 = vmatpush.bf16.msra.mxu0 %v5541
  %7511 = vmatpush.bf16.msra.mxu0 %v5540
  %7512 = vmatpush.bf16.msra.mxu0 %v5539
  %7513 = vmatpush.bf16.msra.mxu0 %v5538
  %7514 = vmatpush.bf16.msra.mxu0 %v5537
  %7515 = vmatpush.bf16.msra.mxu0 %v5536
  %7516 = vmatpush.bf16.msra.mxu0 %v5535
  %7517 = vmatpush.bf16.msra.mxu0 %v5534
  %7518 = vmatmul.bf16.gmra.mxu0 %v210
  %v7519 = vpop.f32.mrf.mxu0
  %v7520 = vadd.f32 %v7507, %v7519
  %v7521 = vpop.f32.mrf.mxu0
  %7522 = vdwg.mxu0
  %7523 = vmatpush.bf16.msra.mxu0 %v5549
  %7524 = vmatpush.bf16.msra.mxu0 %v5548
  %7525 = vmatpush.bf16.msra.mxu0 %v5547
  %7526 = vmatpush.bf16.msra.mxu0 %v5546
  %7527 = vmatpush.bf16.msra.mxu0 %v5545
  %7528 = vmatpush.bf16.msra.mxu0 %v5544
  %7529 = vmatpush.bf16.msra.mxu0 %v5543
  %7530 = vmatpush.bf16.msra.mxu0 %v5542
  %7531 = vmatmul.bf16.gmra.mxu0 %v211
  %v7532 = vpop.f32.mrf.mxu0
  %v7533 = vadd.f32 %v7520, %v7532
  %v7534 = vpop.f32.mrf.mxu0
  %7535 = vdwg.mxu0
  %7536 = vmatpush.bf16.msra.mxu0 %v5557
  %7537 = vmatpush.bf16.msra.mxu0 %v5556
  %7538 = vmatpush.bf16.msra.mxu0 %v5555
  %7539 = vmatpush.bf16.msra.mxu0 %v5554
  %7540 = vmatpush.bf16.msra.mxu0 %v5553
  %7541 = vmatpush.bf16.msra.mxu0 %v5552
  %7542 = vmatpush.bf16.msra.mxu0 %v5551
  %7543 = vmatpush.bf16.msra.mxu0 %v5550
  %7544 = vmatmul.bf16.gmra.mxu0 %v212
  %v7545 = vpop.f32.mrf.mxu0
  %v7546 = vadd.f32 %v7533, %v7545
  %v7547 = vpop.f32.mrf.mxu0
  %7548 = vdwg.mxu0
  %7549 = vmatpush.bf16.msra.mxu0 %v5565
  %7550 = vmatpush.bf16.msra.mxu0 %v5564
  %7551 = vmatpush.bf16.msra.mxu0 %v5563
  %7552 = vmatpush.bf16.msra.mxu0 %v5562
  %7553 = vmatpush.bf16.msra.mxu0 %v5561
  %7554 = vmatpush.bf16.msra.mxu0 %v5560
  %7555 = vmatpush.bf16.msra.mxu0 %v5559
  %7556 = vmatpush.bf16.msra.mxu0 %v5558
  %7557 = vmatmul.bf16.gmra.mxu0 %v213
  %v7558 = vpop.f32.mrf.mxu0
  %v7559 = vadd.f32 %v7546, %v7558
  %v7560 = vpop.f32.mrf.mxu0
  %7561 = vdwg.mxu0
  %7562 = vmatpush.bf16.msra.mxu0 %v5573
  %7563 = vmatpush.bf16.msra.mxu0 %v5572
  %7564 = vmatpush.bf16.msra.mxu0 %v5571
  %7565 = vmatpush.bf16.msra.mxu0 %v5570
  %7566 = vmatpush.bf16.msra.mxu0 %v5569
  %7567 = vmatpush.bf16.msra.mxu0 %v5568
  %7568 = vmatpush.bf16.msra.mxu0 %v5567
  %7569 = vmatpush.bf16.msra.mxu0 %v5566
  %7570 = vmatmul.bf16.gmra.mxu0 %v214
  %v7571 = vpop.f32.mrf.mxu0
  %v7572 = vadd.f32 %v7559, %v7571
  %v7573 = vpop.f32.mrf.mxu0
  %7574 = vdwg.mxu0
  %7575 = vmatpush.bf16.msra.mxu0 %v5581
  %7576 = vmatpush.bf16.msra.mxu0 %v5580
  %7577 = vmatpush.bf16.msra.mxu0 %v5579
  %7578 = vmatpush.bf16.msra.mxu0 %v5578
  %7579 = vmatpush.bf16.msra.mxu0 %v5577
  %7580 = vmatpush.bf16.msra.mxu0 %v5576
  %7581 = vmatpush.bf16.msra.mxu0 %v5575
  %7582 = vmatpush.bf16.msra.mxu0 %v5574
  %7583 = vmatmul.bf16.gmra.mxu0 %v215
  %v7584 = vpop.f32.mrf.mxu0
  %v7585 = vadd.f32 %v7572, %v7584
  %v7586 = vpop.f32.mrf.mxu0
  %7587 = vdwg.mxu0
  %7588 = vmatpush.bf16.msra.mxu0 %v5589
  %7589 = vmatpush.bf16.msra.mxu0 %v5588
  %7590 = vmatpush.bf16.msra.mxu0 %v5587
  %7591 = vmatpush.bf16.msra.mxu0 %v5586
  %7592 = vmatpush.bf16.msra.mxu0 %v5585
  %7593 = vmatpush.bf16.msra.mxu0 %v5584
  %7594 = vmatpush.bf16.msra.mxu0 %v5583
  %7595 = vmatpush.bf16.msra.mxu0 %v5582
  %7596 = vmatmul.bf16.gmra.mxu0 %v216
  %v7597 = vpop.f32.mrf.mxu0
  %v7598 = vadd.f32 %v7585, %v7597
  %v7599 = vpop.f32.mrf.mxu0
  %7600 = vdwg.mxu0
  %7601 = vmatpush.bf16.msra.mxu0 %v5597
  %7602 = vmatpush.bf16.msra.mxu0 %v5596
  %7603 = vmatpush.bf16.msra.mxu0 %v5595
  %7604 = vmatpush.bf16.msra.mxu0 %v5594
  %7605 = vmatpush.bf16.msra.mxu0 %v5593
  %7606 = vmatpush.bf16.msra.mxu0 %v5592
  %7607 = vmatpush.bf16.msra.mxu0 %v5591
  %7608 = vmatpush.bf16.msra.mxu0 %v5590
  %7609 = vmatmul.bf16.gmra.mxu0 %v217
  %v7610 = vpop.f32.mrf.mxu0
  %v7611 = vadd.f32 %v7598, %v7610
  %v7612 = vpop.f32.mrf.mxu0
  %7613 = vdwg.mxu0
  %v7614 = vmax.f32 %v7611, 0.0
  %v7615 = vld [vmem:[%s3] sm:$0xff]
  %v7616 = vld [vmem:[%s3 + $0x8] sm:$0xff]
  %v7617 = vld [vmem:[%s3 + $0x10] sm:$0xff]
  %v7618 = vld [vmem:[%s3 + $0x18] sm:$0xff]
  %v7619 = vld [vmem:[%s3 + $0x20] sm:$0xff]
  %v7620 = vld [vmem:[%s3 + $0x28] sm:$0xff]
  %v7621 = vld [vmem:[%s3 + $0x30] sm:$0xff]
  %v7622 = vld [vmem:[%s3 + $0x38] sm:$0xff]
  %v7623 = vld [vmem:[%s3 + $0x40] sm:$0xff]
  %v7624 = vld [vmem:[%s3 + $0x48] sm:$0xff]
  %v7625 = vld [vmem:[%s3 + $0x50] sm:$0xf]
  %v7626 = vld [vmem:[%s4] sm:$0x1]
  %v7628 = vperm.slane %v7626, 0
  %vm7630 = vcmask 687104
  %v7632 = vsel %vm7630, %v7614, 0
  %vm7634 = vcmask 1043456
  %v7636 = vsel %vm7634, %v7625, 0
  %7638 = vmatpush.msra.mxu0 0.0
  %7639 = vmatpush.msra.mxu0 0.0
  %7640 = vmatpush.msra.mxu0 0.0
  %7641 = vmatpush.msra.mxu0 0.0
  %7642 = vmatpush.msra.mxu0 0.0
  %7643 = vmatpush.msra.mxu0 %v7636
  %7644 = vmatpush.msra.mxu0 %v7624
  %7645 = vmatpush.msra.mxu0 %v7623
  %7646 = vmatpush.msra.mxu0 %v7622
  %7647 = vmatpush.msra.mxu0 %v7621
  %7648 = vmatpush.msra.mxu0 %v7620
  %7649 = vmatpush.msra.mxu0 %v7619
  %7650 = vmatpush.msra.mxu0 %v7618
  %7651 = vmatpush.msra.mxu0 %v7617
  %7652 = vmatpush.msra.mxu0 %v7616
  %7653 = vmatpush.msra.mxu0 %v7615
  %7654 = vmatmul.f32.gmra.mxu0 %v7632
  %v7655 = vpop.f32.mrf.mxu0
  %v7656 = vadd.f32 %v7628, %v7655
  %7657 = vdwg.mxu0
  %v7658 = vmax.f32 %v7656, 0.0
  %v7659 = vld [vmem:[%s5] sm:$0xff]
  %v7660 = vld [vmem:[%s5 + $0x8] sm:$0xff]
  %v7661 = vld [vmem:[%s5 + $0x10] sm:$0xff]
  %v7662 = vld [vmem:[%s5 + $0x18] sm:$0xff]
  %v7663 = vld [vmem:[%s5 + $0x20] sm:$0xff]
  %v7664 = vld [vmem:[%s5 + $0x28] sm:$0xff]
  %v7665 = vld [vmem:[%s5 + $0x30] sm:$0x3]
  %v7666 = vld [vmem:[%s6] sm:$0x1]
  %v7668 = vperm.slane %v7666, 0
  %vm7670 = vcmask 408576
  %v7672 = vsel %vm7670, %v7658, 0
  %vm7674 = vcmask 1041408
  %v7676 = vsel %vm7674, %v7665, 0
  %7678 = vmatpush.msra.mxu0 0.0
  %7679 = vmatpush.msra.mxu0 0.0
  %7680 = vmatpush.msra.mxu0 0.0
  %7681 = vmatpush.msra.mxu0 0.0
  %7682 = vmatpush.msra.mxu0 0.0
  %7683 = vmatpush.msra.mxu0 0.0
  %7684 = vmatpush.msra.mxu0 0.0
  %7685 = vmatpush.msra.mxu0 0.0
  %7686 = vmatpush.msra.mxu0 0.0
  %7687 = vmatpush.msra.mxu0 %v7676
  %7688 = vmatpush.msra.mxu0 %v7664
  %7689 = vmatpush.msra.mxu0 %v7663
  %7690 = vmatpush.msra.mxu0 %v7662
  %7691 = vmatpush.msra.mxu0 %v7661
  %7692 = vmatpush.msra.mxu0 %v7660
  %7693 = vmatpush.msra.mxu0 %v7659
  %7694 = vmatmul.f32.gmra.mxu0 %v7672
  %v7695 = vpop.f32.mrf.mxu0
  %v7696 = vadd.f32 %v7668, %v7695
  %7697 = vdwg.mxu0
  %vm7698 = vcmask 15360
  %7699 = vst.msk [vmem:[%s7] sm:$0xff] %vm7698, %v7696
  // Predicated region
  $region30: #{tpu_custom_call.1} parent=0 // pred_check
    _
  $region31: #{tpu_custom_call.1} parent=0 // pred_check_branch
    %7701 = sbr.rel (0) target = $region33
  $region32: #{tpu_custom_call.1} parent=0 // pred_region
    _
  $region33: #{tpu_custom_call.1} parent=0 // pred_fallthru
    _
  // Predicated region
  $region34: #{tpu_custom_call.1} parent=0 // pred_check
    _
  $region35: #{tpu_custom_call.1} parent=0 // pred_check_branch
    %7703 = sbr.rel (0) target = $region37
  $region36: #{tpu_custom_call.1} parent=0 // pred_region
    _
  $region37: #{tpu_custom_call.1} parent=0 // pred_fallthru
    _

</llo_original>
